<compile_context>
chip_gen: v7x
topology: tpu7x:2x2x1
jax: 0.10.0
libtpu: 0.0.40
codegen_flags: <defaults>
</compile_context>

<pallas_src>
import numpy as np
import jax
import jax.numpy as jnp
from jax import lax
from jax.experimental import pallas as pl
from jax.experimental.pallas import tpu as pltpu


def _round_up(x, m):
    return (x + m - 1) // m * m


def _lstm_classifier_kernel(x_ref, wih_ref, whh_ref, b_ref, wfc_ref, bfc_ref,
                            out_ref, xproj_sc):
    """Whole recurrence + fused classifier in one kernel invocation.

    x_ref    : (T*Bp, I)    bf16   time-major input, batch padded to Bp
    wih_ref  : (I,  4*Hp)   bf16   gate-block lane-aligned W_ih^T
    whh_ref  : (Hp, 4*Hp)   bf16   gate-block lane-aligned W_hh^T
    b_ref    : (1,  4*Hp)   f32    b_ih + b_hh (gate-block aligned)
    wfc_ref  : (Hp, Cp)     bf16   W_fc^T, lane-dense classes
    bfc_ref  : (1,  Cp)     f32
    out_ref  : (Bp, Cp)     f32
    xproj_sc : (T*Bp, 4*Hp) f32    scratch: hoisted input projection
    """
    TB = x_ref.shape[0]
    Hp = whh_ref.shape[0]
    Bp = out_ref.shape[0]
    T = TB // Bp

    # --- Prologue: input projection for ALL timesteps in one MXU pass, with
    # the folded bias added once (not re-broadcast every step).
    xproj_sc[...] = (
        jnp.dot(x_ref[...], wih_ref[...], preferred_element_type=jnp.float32)
        + b_ref[...])

    # Per-gate recurrent weight blocks; lane-aligned (Hp % 128 == 0) so these
    # slices are free. Hoisted so W_hh is read from VMEM once.
    whh = whh_ref[...]
    w_i = whh[:, 0 * Hp:1 * Hp]
    w_f = whh[:, 1 * Hp:2 * Hp]
    w_g = whh[:, 2 * Hp:3 * Hp]
    w_o = whh[:, 3 * Hp:4 * Hp]
    # TODO(synk): hold W_hh resident in the MXU across the recurrence
    # (pltpu.matmul_push_rhs once + matmul_acc_lhs/matmul_pop per step, one
    # gate block per mxu_index) to drop the per-step RHS push latency.

    def step(t, carry):
        h_bf, c = carry                          # h_bf: bf16 (Bp,Hp), c: f32
        row = pl.multiple_of(t * Bp, Bp)
        gx = xproj_sc[pl.ds(row, Bp), :]         # (Bp, 4*Hp) f32, bias folded
        # Per-gate dots: EUP (sigmoid/tanh) starts on gate k as soon as its
        # (Bp, Hp) block drains, instead of after the full 4*Hp result.
        # PyTorch gate order i, f, g, o.
        i_g = jax.nn.sigmoid(
            gx[:, 0 * Hp:1 * Hp]
            + jnp.dot(h_bf, w_i, preferred_element_type=jnp.float32))
        f_g = jax.nn.sigmoid(
            gx[:, 1 * Hp:2 * Hp]
            + jnp.dot(h_bf, w_f, preferred_element_type=jnp.float32))
        g_g = jnp.tanh(
            gx[:, 2 * Hp:3 * Hp]
            + jnp.dot(h_bf, w_g, preferred_element_type=jnp.float32))
        o_g = jax.nn.sigmoid(
            gx[:, 3 * Hp:4 * Hp]
            + jnp.dot(h_bf, w_o, preferred_element_type=jnp.float32))
        c = f_g * c + i_g * g_g                  # f32 elementwise (v5e-safe)
        h = o_g * jnp.tanh(c)
        # Cast h to bf16 once here (producing op of this step) instead of at
        # every dot of the next step.
        # TODO(synk): offer an f32-recurrence mode for very long T (bf16 h
        # error compounds relative to torch's f32 LSTM).
        return h.astype(jnp.bfloat16), c

    h0 = jnp.zeros((Bp, Hp), jnp.bfloat16)
    c0 = jnp.zeros((Bp, Hp), jnp.float32)
    # Bounded unroll: full unroll of a long recurrence keeps every step's
    # (Bp, 4*Hp) temporaries live and blows the 64-vreg file at large H.
    h_n, _ = lax.fori_loop(0, T, step, (h0, c0), unroll=min(T, 8))

    # --- Fused classifier on the final hidden state (lane-dense Cp output).
    logits = (jnp.dot(h_n, wfc_ref[...], preferred_element_type=jnp.float32)
              + bfc_ref[...])
    out_ref[...] = logits.astype(out_ref.dtype)


def pack_params(params):
    """One-time weight repacking: transpose / pad / gate-block align / cast."""
    w_ih, w_hh = params["w_ih"], params["w_hh"]
    b_ih, b_hh = params["b_ih"], params["b_hh"]
    w_fc, b_fc = params["w_fc"], params["b_fc"]
    H = w_hh.shape[1]
    C = w_fc.shape[0]
    Hp = _round_up(H, 128)      # lane-aligned gate blocks
    Cp = _round_up(C, 128)      # lane-dense (unmasked) output store

    def gate_cols(w):
        # (K, 4H) -> (K, 4Hp): gate k lives at columns [k*Hp, k*Hp + H).
        K = w.shape[0]
        out = jnp.zeros((K, 4 * Hp), w.dtype)
        for k in range(4):
            out = out.at[:, k * Hp:k * Hp + H].set(w[:, k * H:(k + 1) * H])
        return out

    packed = {
        "wih_t": gate_cols(w_ih.T).astype(jnp.bfloat16),                      # (I, 4Hp)
        "whh_t": jnp.pad(gate_cols(w_hh.T),
                         ((0, Hp - H), (0, 0))).astype(jnp.bfloat16),         # (Hp, 4Hp)
        "bias": gate_cols((b_ih + b_hh).reshape(1, 4 * H)).astype(jnp.float32),
        "wfc_t": jnp.pad(w_fc.T, ((0, Hp - H), (0, Cp - C))).astype(jnp.bfloat16),
        "bfc": jnp.pad(b_fc.reshape(1, C), ((0, 0), (0, Cp - C))).astype(jnp.float32),
    }
    dims = {"H": H, "C": C, "Hp": Hp, "Cp": Cp}
    return packed, dims


def make_lstm_classifier(params):
    """Packs weights once; returns a jitted forward: x (T, B, I) -> (B, C)."""
    packed, dims = pack_params(params)
    packed = jax.tree_util.tree_map(jnp.asarray, packed)
    C, Hp, Cp = dims["C"], dims["Hp"], dims["Cp"]

    vmem_spec = pl.BlockSpec(memory_space=pltpu.MemorySpace.VMEM)

    @jax.jit
    def forward(x):
        T, B, _ = x.shape
        # bf16 vreg is (16,128): pad batch to 16 so the per-step LHS is a full
        # packed tile rather than a masked half tile. Pad rows are sliced off.
        Bp = _round_up(max(B, 16), 16)
        x_pad = jnp.pad(x, ((0, 0), (0, Bp - B), (0, 0))).astype(jnp.bfloat16)
        x2d = x_pad.reshape(T * Bp, x.shape[2])

        out = pl.pallas_call(
            _lstm_classifier_kernel,
            out_shape=jax.ShapeDtypeStruct((Bp, Cp), jnp.float32),
            # No grid: single invocation, memory_space=VMEM placement avoids
            # the useless 2x double-buffering a grid=(1,) pipeline would
            # allocate for every operand.
            in_specs=[vmem_spec] * 6,
            out_specs=vmem_spec,
            scratch_shapes=[pltpu.VMEM((T * Bp, 4 * Hp), jnp.float32)],
            # TODO(synk): at production T/H, replace the full-T xproj scratch
            # with time-windowed, double-buffered chunks interleaved into the
            # recurrence (x streamed from HBM via memory_space=pl.ANY), and
            # derive vmem_limit_bytes from pltpu.get_tpu_info() (v7x: 64 MiB).
            compiler_params=pltpu.CompilerParams(
                vmem_limit_bytes=64 * 1024 * 1024),
        )(x2d, packed["wih_t"], packed["whh_t"], packed["bias"],
          packed["wfc_t"], packed["bfc"])

        # TODO(synk): when B >= 16 on v7x, add a leading 'parallel' batch-block
        # grid axis so both TensorCores each run half the batch.
        return out[:B, :C]

    return forward


def init_params(key, input_size, hidden_size, classes):
    """Deterministic init matching the PyTorch parameter shapes / init scale."""
    k = jax.random.split(key, 6)
    s = 1.0 / np.sqrt(hidden_size)
    u = lambda kk, shape: jax.random.uniform(kk, shape, jnp.float32, -s, s)
    return {
        "w_ih": u(k[0], (4 * hidden_size, input_size)),
        "w_hh": u(k[1], (4 * hidden_size, hidden_size)),
        "b_ih": u(k[2], (4 * hidden_size,)),
        "b_hh": u(k[3], (4 * hidden_size,)),
        "w_fc": u(k[4], (classes, hidden_size)),
        "b_fc": u(k[5], (classes,)),
    }


def reference_forward(x, params, matmul_dtype=jnp.float32):
    """Pure-JAX mirror of torch.nn.LSTM(1 layer) + nn.Linear.

    matmul_dtype=jnp.bfloat16 reproduces the kernel's numerics (bf16 MXU
    operands, f32 accumulation, f32 elementwise)."""
    H = params["w_hh"].shape[1]
    wih_t = params["w_ih"].T.astype(matmul_dtype)
    whh_t = params["w_hh"].T.astype(matmul_dtype)
    wfc_t = params["w_fc"].T.astype(matmul_dtype)
    bias = (params["b_ih"] + params["b_hh"]).astype(jnp.float32)

    def step(carry, x_t):
        h, c = carry
        gates = (jnp.dot(x_t.astype(matmul_dtype), wih_t,
                         preferred_element_type=jnp.float32)
                 + jnp.dot(h.astype(matmul_dtype), whh_t,
                           preferred_element_type=jnp.float32)
                 + bias)
        i_g = jax.nn.sigmoid(gates[:, 0 * H:1 * H])
        f_g = jax.nn.sigmoid(gates[:, 1 * H:2 * H])
        g_g = jnp.tanh(gates[:, 2 * H:3 * H])
        o_g = jax.nn.sigmoid(gates[:, 3 * H:4 * H])
        c = f_g * c + i_g * g_g
        h = o_g * jnp.tanh(c)
        return (h, c), None

    h0 = jnp.zeros((x.shape[1], H), jnp.float32)
    (h_n, _), _ = lax.scan(step, (h0, h0), x)
    return (jnp.dot(h_n.astype(matmul_dtype), wfc_t,
                    preferred_element_type=jnp.float32)
            + params["b_fc"].astype(jnp.float32))


if __name__ == "__main__":
    # Module defaults: input_size=28, hidden_size=128, classes=10.
    # Small sequence/batch: T=8, B=2; layout (T, B, I) = torch LSTM default.
    T, B, I, H, C = 8, 2, 28, 128, 10

    key = jax.random.PRNGKey(0)
    k_x, k_p = jax.random.split(key)
    x = jax.random.normal(k_x, (T, B, I), jnp.float32)
    params = init_params(k_p, input_size=I, hidden_size=H, classes=C)

    forward = make_lstm_classifier(params)          # weights packed once
    logits = jax.block_until_ready(forward(x))
    assert logits.shape == (B, C)

    # 1) Kernel correctness vs. a reference with identical bf16-matmul numerics.
    ref_bf16 = jax.block_until_ready(reference_forward(x, params, jnp.bfloat16))
    np.testing.assert_allclose(np.asarray(logits), np.asarray(ref_bf16),
                               rtol=2e-3, atol=2e-3)
    # 2) Semantic sanity vs. exact f32 torch-style math (bounded bf16 deviation).
    ref_f32 = jax.block_until_ready(reference_forward(x, params, jnp.float32))
    np.testing.assert_allclose(np.asarray(logits), np.asarray(ref_f32),
                               rtol=5e-2, atol=5e-2)
    print("KERNEL_OK")
</pallas_src>

<mosaic_0001>
module attributes {stable_mosaic.version = 11 : i64} {
  func.func @_lstm_classifier_kernel(%arg0: memref<128x28xbf16, #tpu.memory_space<vmem>>, %arg1: memref<28x512xbf16, #tpu.memory_space<vmem>>, %arg2: memref<128x512xbf16, #tpu.memory_space<vmem>>, %arg3: memref<1x512xf32, #tpu.memory_space<vmem>>, %arg4: memref<128x128xbf16, #tpu.memory_space<vmem>>, %arg5: memref<1x128xf32, #tpu.memory_space<vmem>>, %arg6: memref<16x128xf32, #tpu.memory_space<vmem>>, %arg7: memref<128x512xf32, #tpu.memory_space<vmem>>) attributes {dimension_semantics = [], scalar_prefetch = 0 : i64, scratch_operands = 1 : i64, tpu.core_type = #tpu.core_type<tc>} {
    %c0 = arith.constant 0 : index
    %c0_0 = arith.constant 0 : index
    %0 = vector.load %arg0[%c0, %c0_0] : memref<128x28xbf16, #tpu.memory_space<vmem>>, vector<128x28xbf16>
    %c0_1 = arith.constant 0 : index
    %c0_2 = arith.constant 0 : index
    %1 = vector.load %arg1[%c0_1, %c0_2] : memref<28x512xbf16, #tpu.memory_space<vmem>>, vector<28x512xbf16>
    %cst = arith.constant dense<0.000000e+00> : vector<128x512xf32>
    %2 = tpu.matmul %0, %1, %cst {dimension_numbers = #tpu.dot_dimension_numbers<[1], [0], [0], [1], [0, 0, 1, 1], [], []>} : vector<128x28xbf16>, vector<28x512xbf16>, vector<128x512xf32> -> vector<128x512xf32>
    %c0_3 = arith.constant 0 : index
    %c0_4 = arith.constant 0 : index
    %3 = vector.load %arg3[%c0_3, %c0_4] : memref<1x512xf32, #tpu.memory_space<vmem>>, vector<1x512xf32>
    %4 = vector.broadcast %3 : vector<1x512xf32> to vector<128x512xf32>
    %5 = arith.addf %2, %4 : vector<128x512xf32>
    %c0_5 = arith.constant 0 : index
    %c0_6 = arith.constant 0 : index
    %6 = vector.load %arg7[%c0_5, %c0_6] : memref<128x512xf32, #tpu.memory_space<vmem>>, vector<128x512xf32>
    tpu.vector_store %arg7[%c0_5, %c0_6], %5 {strides = array<i32>} : memref<128x512xf32, #tpu.memory_space<vmem>>, vector<128x512xf32>,
    %c0_7 = arith.constant 0 : index
    %c0_8 = arith.constant 0 : index
    %7 = vector.load %arg2[%c0_7, %c0_8] : memref<128x512xbf16, #tpu.memory_space<vmem>>, vector<128x512xbf16>
    %8 = vector.extract_strided_slice %7 {offsets = [0, 0], sizes = [128, 128], strides = [1, 1]} : vector<128x512xbf16> to vector<128x128xbf16>
    %9 = vector.extract_strided_slice %7 {offsets = [0, 128], sizes = [128, 128], strides = [1, 1]} : vector<128x512xbf16> to vector<128x128xbf16>
    %10 = vector.extract_strided_slice %7 {offsets = [0, 256], sizes = [128, 128], strides = [1, 1]} : vector<128x512xbf16> to vector<128x128xbf16>
    %11 = vector.extract_strided_slice %7 {offsets = [0, 384], sizes = [128, 128], strides = [1, 1]} : vector<128x512xbf16> to vector<128x128xbf16>
    %cst_9 = arith.constant 0.000000e+00 : bf16
    %12 = vector.broadcast %cst_9 : bf16 to vector<16x128xbf16>
    %cst_10 = arith.constant 0.000000e+00 : f32
    %13 = vector.broadcast %cst_10 : f32 to vector<16x128xf32>
    %c0_i32 = arith.constant 0 : i32
    %c16_i32 = arith.constant 16 : i32
    %14 = arith.muli %c0_i32, %c16_i32 : i32
    %15 = tpu.assume_multiple %14, 16 : i32
    %16 = arith.index_cast %15 : i32 to index
    %c0_11 = arith.constant 0 : index
    %17 = vector.load %arg7[%16, %c0_11] : memref<128x512xf32, #tpu.memory_space<vmem>>, vector<16x512xf32>
    %18 = vector.extract_strided_slice %17 {offsets = [0, 0], sizes = [16, 128], strides = [1, 1]} : vector<16x512xf32> to vector<16x128xf32>
    %cst_12 = arith.constant dense<0.000000e+00> : vector<16x128xf32>
    %19 = tpu.matmul %12, %8, %cst_12 {dimension_numbers = #tpu.dot_dimension_numbers<[1], [0], [0], [1], [0, 0, 1, 1], [], []>} : vector<16x128xbf16>, vector<128x128xbf16>, vector<16x128xf32> -> vector<16x128xf32>
    %20 = arith.addf %18, %19 : vector<16x128xf32>
    %21 = arith.negf %20 : vector<16x128xf32>
    %22 = math.exp %21 : vector<16x128xf32>
    %cst_13 = arith.constant 1.000000e+00 : f32
    %23 = vector.broadcast %cst_13 : f32 to vector<16x128xf32>
    %24 = arith.addf %23, %22 : vector<16x128xf32>
    %25 = arith.divf %23, %24 : vector<16x128xf32>
    %26 = vector.extract_strided_slice %17 {offsets = [0, 128], sizes = [16, 128], strides = [1, 1]} : vector<16x512xf32> to vector<16x128xf32>
    %cst_14 = arith.constant dense<0.000000e+00> : vector<16x128xf32>
    %27 = tpu.matmul %12, %9, %cst_14 {dimension_numbers = #tpu.dot_dimension_numbers<[1], [0], [0], [1], [0, 0, 1, 1], [], []>} : vector<16x128xbf16>, vector<128x128xbf16>, vector<16x128xf32> -> vector<16x128xf32>
    %28 = arith.addf %26, %27 : vector<16x128xf32>
    %29 = arith.negf %28 : vector<16x128xf32>
    %30 = math.exp %29 : vector<16x128xf32>
    %cst_15 = arith.constant 1.000000e+00 : f32
    %31 = vector.broadcast %cst_15 : f32 to vector<16x128xf32>
    %32 = arith.addf %31, %30 : vector<16x128xf32>
    %33 = arith.divf %31, %32 : vector<16x128xf32>
    %34 = vector.extract_strided_slice %17 {offsets = [0, 256], sizes = [16, 128], strides = [1, 1]} : vector<16x512xf32> to vector<16x128xf32>
    %cst_16 = arith.constant dense<0.000000e+00> : vector<16x128xf32>
    %35 = tpu.matmul %12, %10, %cst_16 {dimension_numbers = #tpu.dot_dimension_numbers<[1], [0], [0], [1], [0, 0, 1, 1], [], []>} : vector<16x128xbf16>, vector<128x128xbf16>, vector<16x128xf32> -> vector<16x128xf32>
    %36 = arith.addf %34, %35 : vector<16x128xf32>
    %37 = math.tanh %36 : vector<16x128xf32>
    %38 = vector.extract_strided_slice %17 {offsets = [0, 384], sizes = [16, 128], strides = [1, 1]} : vector<16x512xf32> to vector<16x128xf32>
    %cst_17 = arith.constant dense<0.000000e+00> : vector<16x128xf32>
    %39 = tpu.matmul %12, %11, %cst_17 {dimension_numbers = #tpu.dot_dimension_numbers<[1], [0], [0], [1], [0, 0, 1, 1], [], []>} : vector<16x128xbf16>, vector<128x128xbf16>, vector<16x128xf32> -> vector<16x128xf32>
    %40 = arith.addf %38, %39 : vector<16x128xf32>
    %41 = arith.negf %40 : vector<16x128xf32>
    %42 = math.exp %41 : vector<16x128xf32>
    %cst_18 = arith.constant 1.000000e+00 : f32
    %43 = vector.broadcast %cst_18 : f32 to vector<16x128xf32>
    %44 = arith.addf %43, %42 : vector<16x128xf32>
    %45 = arith.divf %43, %44 : vector<16x128xf32>
    %46 = arith.mulf %33, %13 : vector<16x128xf32>
    %47 = arith.mulf %25, %37 : vector<16x128xf32>
    %48 = arith.addf %46, %47 : vector<16x128xf32>
    %49 = math.tanh %48 : vector<16x128xf32>
    %50 = arith.mulf %45, %49 : vector<16x128xf32>
    %51 = arith.truncf %50 : vector<16x128xf32> to vector<16x128xbf16>
    %c1_i32 = arith.constant 1 : i32
    %c16_i32_19 = arith.constant 16 : i32
    %52 = arith.muli %c1_i32, %c16_i32_19 : i32
    %53 = tpu.assume_multiple %52, 16 : i32
    %54 = arith.index_cast %53 : i32 to index
    %c0_20 = arith.constant 0 : index
    %55 = vector.load %arg7[%54, %c0_20] : memref<128x512xf32, #tpu.memory_space<vmem>>, vector<16x512xf32>
    %56 = vector.extract_strided_slice %55 {offsets = [0, 0], sizes = [16, 128], strides = [1, 1]} : vector<16x512xf32> to vector<16x128xf32>
    %cst_21 = arith.constant dense<0.000000e+00> : vector<16x128xf32>
    %57 = tpu.matmul %51, %8, %cst_21 {dimension_numbers = #tpu.dot_dimension_numbers<[1], [0], [0], [1], [0, 0, 1, 1], [], []>} : vector<16x128xbf16>, vector<128x128xbf16>, vector<16x128xf32> -> vector<16x128xf32>
    %58 = arith.addf %56, %57 : vector<16x128xf32>
    %59 = arith.negf %58 : vector<16x128xf32>
    %60 = math.exp %59 : vector<16x128xf32>
    %cst_22 = arith.constant 1.000000e+00 : f32
    %61 = vector.broadcast %cst_22 : f32 to vector<16x128xf32>
    %62 = arith.addf %61, %60 : vector<16x128xf32>
    %63 = arith.divf %61, %62 : vector<16x128xf32>
    %64 = vector.extract_strided_slice %55 {offsets = [0, 128], sizes = [16, 128], strides = [1, 1]} : vector<16x512xf32> to vector<16x128xf32>
    %cst_23 = arith.constant dense<0.000000e+00> : vector<16x128xf32>
    %65 = tpu.matmul %51, %9, %cst_23 {dimension_numbers = #tpu.dot_dimension_numbers<[1], [0], [0], [1], [0, 0, 1, 1], [], []>} : vector<16x128xbf16>, vector<128x128xbf16>, vector<16x128xf32> -> vector<16x128xf32>
    %66 = arith.addf %64, %65 : vector<16x128xf32>
    %67 = arith.negf %66 : vector<16x128xf32>
    %68 = math.exp %67 : vector<16x128xf32>
    %cst_24 = arith.constant 1.000000e+00 : f32
    %69 = vector.broadcast %cst_24 : f32 to vector<16x128xf32>
    %70 = arith.addf %69, %68 : vector<16x128xf32>
    %71 = arith.divf %69, %70 : vector<16x128xf32>
    %72 = vector.extract_strided_slice %55 {offsets = [0, 256], sizes = [16, 128], strides = [1, 1]} : vector<16x512xf32> to vector<16x128xf32>
    %cst_25 = arith.constant dense<0.000000e+00> : vector<16x128xf32>
    %73 = tpu.matmul %51, %10, %cst_25 {dimension_numbers = #tpu.dot_dimension_numbers<[1], [0], [0], [1], [0, 0, 1, 1], [], []>} : vector<16x128xbf16>, vector<128x128xbf16>, vector<16x128xf32> -> vector<16x128xf32>
    %74 = arith.addf %72, %73 : vector<16x128xf32>
    %75 = math.tanh %74 : vector<16x128xf32>
    %76 = vector.extract_strided_slice %55 {offsets = [0, 384], sizes = [16, 128], strides = [1, 1]} : vector<16x512xf32> to vector<16x128xf32>
    %cst_26 = arith.constant dense<0.000000e+00> : vector<16x128xf32>
    %77 = tpu.matmul %51, %11, %cst_26 {dimension_numbers = #tpu.dot_dimension_numbers<[1], [0], [0], [1], [0, 0, 1, 1], [], []>} : vector<16x128xbf16>, vector<128x128xbf16>, vector<16x128xf32> -> vector<16x128xf32>
    %78 = arith.addf %76, %77 : vector<16x128xf32>
    %79 = arith.negf %78 : vector<16x128xf32>
    %80 = math.exp %79 : vector<16x128xf32>
    %cst_27 = arith.constant 1.000000e+00 : f32
    %81 = vector.broadcast %cst_27 : f32 to vector<16x128xf32>
    %82 = arith.addf %81, %80 : vector<16x128xf32>
    %83 = arith.divf %81, %82 : vector<16x128xf32>
    %84 = arith.mulf %71, %48 : vector<16x128xf32>
    %85 = arith.mulf %63, %75 : vector<16x128xf32>
    %86 = arith.addf %84, %85 : vector<16x128xf32>
    %87 = math.tanh %86 : vector<16x128xf32>
    %88 = arith.mulf %83, %87 : vector<16x128xf32>
    %89 = arith.truncf %88 : vector<16x128xf32> to vector<16x128xbf16>
    %c2_i32 = arith.constant 2 : i32
    %c16_i32_28 = arith.constant 16 : i32
    %90 = arith.muli %c2_i32, %c16_i32_28 : i32
    %91 = tpu.assume_multiple %90, 16 : i32
    %92 = arith.index_cast %91 : i32 to index
    %c0_29 = arith.constant 0 : index
    %93 = vector.load %arg7[%92, %c0_29] : memref<128x512xf32, #tpu.memory_space<vmem>>, vector<16x512xf32>
    %94 = vector.extract_strided_slice %93 {offsets = [0, 0], sizes = [16, 128], strides = [1, 1]} : vector<16x512xf32> to vector<16x128xf32>
    %cst_30 = arith.constant dense<0.000000e+00> : vector<16x128xf32>
    %95 = tpu.matmul %89, %8, %cst_30 {dimension_numbers = #tpu.dot_dimension_numbers<[1], [0], [0], [1], [0, 0, 1, 1], [], []>} : vector<16x128xbf16>, vector<128x128xbf16>, vector<16x128xf32> -> vector<16x128xf32>
    %96 = arith.addf %94, %95 : vector<16x128xf32>
    %97 = arith.negf %96 : vector<16x128xf32>
    %98 = math.exp %97 : vector<16x128xf32>
    %cst_31 = arith.constant 1.000000e+00 : f32
    %99 = vector.broadcast %cst_31 : f32 to vector<16x128xf32>
    %100 = arith.addf %99, %98 : vector<16x128xf32>
    %101 = arith.divf %99, %100 : vector<16x128xf32>
    %102 = vector.extract_strided_slice %93 {offsets = [0, 128], sizes = [16, 128], strides = [1, 1]} : vector<16x512xf32> to vector<16x128xf32>
    %cst_32 = arith.constant dense<0.000000e+00> : vector<16x128xf32>
    %103 = tpu.matmul %89, %9, %cst_32 {dimension_numbers = #tpu.dot_dimension_numbers<[1], [0], [0], [1], [0, 0, 1, 1], [], []>} : vector<16x128xbf16>, vector<128x128xbf16>, vector<16x128xf32> -> vector<16x128xf32>
    %104 = arith.addf %102, %103 : vector<16x128xf32>
    %105 = arith.negf %104 : vector<16x128xf32>
    %106 = math.exp %105 : vector<16x128xf32>
    %cst_33 = arith.constant 1.000000e+00 : f32
    %107 = vector.broadcast %cst_33 : f32 to vector<16x128xf32>
    %108 = arith.addf %107, %106 : vector<16x128xf32>
    %109 = arith.divf %107, %108 : vector<16x128xf32>
    %110 = vector.extract_strided_slice %93 {offsets = [0, 256], sizes = [16, 128], strides = [1, 1]} : vector<16x512xf32> to vector<16x128xf32>
    %cst_34 = arith.constant dense<0.000000e+00> : vector<16x128xf32>
    %111 = tpu.matmul %89, %10, %cst_34 {dimension_numbers = #tpu.dot_dimension_numbers<[1], [0], [0], [1], [0, 0, 1, 1], [], []>} : vector<16x128xbf16>, vector<128x128xbf16>, vector<16x128xf32> -> vector<16x128xf32>
    %112 = arith.addf %110, %111 : vector<16x128xf32>
    %113 = math.tanh %112 : vector<16x128xf32>
    %114 = vector.extract_strided_slice %93 {offsets = [0, 384], sizes = [16, 128], strides = [1, 1]} : vector<16x512xf32> to vector<16x128xf32>
    %cst_35 = arith.constant dense<0.000000e+00> : vector<16x128xf32>
    %115 = tpu.matmul %89, %11, %cst_35 {dimension_numbers = #tpu.dot_dimension_numbers<[1], [0], [0], [1], [0, 0, 1, 1], [], []>} : vector<16x128xbf16>, vector<128x128xbf16>, vector<16x128xf32> -> vector<16x128xf32>
    %116 = arith.addf %114, %115 : vector<16x128xf32>
    %117 = arith.negf %116 : vector<16x128xf32>
    %118 = math.exp %117 : vector<16x128xf32>
    %cst_36 = arith.constant 1.000000e+00 : f32
    %119 = vector.broadcast %cst_36 : f32 to vector<16x128xf32>
    %120 = arith.addf %119, %118 : vector<16x128xf32>
    %121 = arith.divf %119, %120 : vector<16x128xf32>
    %122 = arith.mulf %109, %86 : vector<16x128xf32>
    %123 = arith.mulf %101, %113 : vector<16x128xf32>
    %124 = arith.addf %122, %123 : vector<16x128xf32>
    %125 = math.tanh %124 : vector<16x128xf32>
    %126 = arith.mulf %121, %125 : vector<16x128xf32>
    %127 = arith.truncf %126 : vector<16x128xf32> to vector<16x128xbf16>
    %c3_i32 = arith.constant 3 : i32
    %c16_i32_37 = arith.constant 16 : i32
    %128 = arith.muli %c3_i32, %c16_i32_37 : i32
    %129 = tpu.assume_multiple %128, 16 : i32
    %130 = arith.index_cast %129 : i32 to index
    %c0_38 = arith.constant 0 : index
    %131 = vector.load %arg7[%130, %c0_38] : memref<128x512xf32, #tpu.memory_space<vmem>>, vector<16x512xf32>
    %132 = vector.extract_strided_slice %131 {offsets = [0, 0], sizes = [16, 128], strides = [1, 1]} : vector<16x512xf32> to vector<16x128xf32>
    %cst_39 = arith.constant dense<0.000000e+00> : vector<16x128xf32>
    %133 = tpu.matmul %127, %8, %cst_39 {dimension_numbers = #tpu.dot_dimension_numbers<[1], [0], [0], [1], [0, 0, 1, 1], [], []>} : vector<16x128xbf16>, vector<128x128xbf16>, vector<16x128xf32> -> vector<16x128xf32>
    %134 = arith.addf %132, %133 : vector<16x128xf32>
    %135 = arith.negf %134 : vector<16x128xf32>
    %136 = math.exp %135 : vector<16x128xf32>
    %cst_40 = arith.constant 1.000000e+00 : f32
    %137 = vector.broadcast %cst_40 : f32 to vector<16x128xf32>
    %138 = arith.addf %137, %136 : vector<16x128xf32>
    %139 = arith.divf %137, %138 : vector<16x128xf32>
    %140 = vector.extract_strided_slice %131 {offsets = [0, 128], sizes = [16, 128], strides = [1, 1]} : vector<16x512xf32> to vector<16x128xf32>
    %cst_41 = arith.constant dense<0.000000e+00> : vector<16x128xf32>
    %141 = tpu.matmul %127, %9, %cst_41 {dimension_numbers = #tpu.dot_dimension_numbers<[1], [0], [0], [1], [0, 0, 1, 1], [], []>} : vector<16x128xbf16>, vector<128x128xbf16>, vector<16x128xf32> -> vector<16x128xf32>
    %142 = arith.addf %140, %141 : vector<16x128xf32>
    %143 = arith.negf %142 : vector<16x128xf32>
    %144 = math.exp %143 : vector<16x128xf32>
    %cst_42 = arith.constant 1.000000e+00 : f32
    %145 = vector.broadcast %cst_42 : f32 to vector<16x128xf32>
    %146 = arith.addf %145, %144 : vector<16x128xf32>
    %147 = arith.divf %145, %146 : vector<16x128xf32>
    %148 = vector.extract_strided_slice %131 {offsets = [0, 256], sizes = [16, 128], strides = [1, 1]} : vector<16x512xf32> to vector<16x128xf32>
    %cst_43 = arith.constant dense<0.000000e+00> : vector<16x128xf32>
    %149 = tpu.matmul %127, %10, %cst_43 {dimension_numbers = #tpu.dot_dimension_numbers<[1], [0], [0], [1], [0, 0, 1, 1], [], []>} : vector<16x128xbf16>, vector<128x128xbf16>, vector<16x128xf32> -> vector<16x128xf32>
    %150 = arith.addf %148, %149 : vector<16x128xf32>
    %151 = math.tanh %150 : vector<16x128xf32>
    %152 = vector.extract_strided_slice %131 {offsets = [0, 384], sizes = [16, 128], strides = [1, 1]} : vector<16x512xf32> to vector<16x128xf32>
    %cst_44 = arith.constant dense<0.000000e+00> : vector<16x128xf32>
    %153 = tpu.matmul %127, %11, %cst_44 {dimension_numbers = #tpu.dot_dimension_numbers<[1], [0], [0], [1], [0, 0, 1, 1], [], []>} : vector<16x128xbf16>, vector<128x128xbf16>, vector<16x128xf32> -> vector<16x128xf32>
    %154 = arith.addf %152, %153 : vector<16x128xf32>
    %155 = arith.negf %154 : vector<16x128xf32>
    %156 = math.exp %155 : vector<16x128xf32>
    %cst_45 = arith.constant 1.000000e+00 : f32
    %157 = vector.broadcast %cst_45 : f32 to vector<16x128xf32>
    %158 = arith.addf %157, %156 : vector<16x128xf32>
    %159 = arith.divf %157, %158 : vector<16x128xf32>
    %160 = arith.mulf %147, %124 : vector<16x128xf32>
    %161 = arith.mulf %139, %151 : vector<16x128xf32>
    %162 = arith.addf %160, %161 : vector<16x128xf32>
    %163 = math.tanh %162 : vector<16x128xf32>
    %164 = arith.mulf %159, %163 : vector<16x128xf32>
    %165 = arith.truncf %164 : vector<16x128xf32> to vector<16x128xbf16>
    %c4_i32 = arith.constant 4 : i32
    %c16_i32_46 = arith.constant 16 : i32
    %166 = arith.muli %c4_i32, %c16_i32_46 : i32
    %167 = tpu.assume_multiple %166, 16 : i32
    %168 = arith.index_cast %167 : i32 to index
    %c0_47 = arith.constant 0 : index
    %169 = vector.load %arg7[%168, %c0_47] : memref<128x512xf32, #tpu.memory_space<vmem>>, vector<16x512xf32>
    %170 = vector.extract_strided_slice %169 {offsets = [0, 0], sizes = [16, 128], strides = [1, 1]} : vector<16x512xf32> to vector<16x128xf32>
    %cst_48 = arith.constant dense<0.000000e+00> : vector<16x128xf32>
    %171 = tpu.matmul %165, %8, %cst_48 {dimension_numbers = #tpu.dot_dimension_numbers<[1], [0], [0], [1], [0, 0, 1, 1], [], []>} : vector<16x128xbf16>, vector<128x128xbf16>, vector<16x128xf32> -> vector<16x128xf32>
    %172 = arith.addf %170, %171 : vector<16x128xf32>
    %173 = arith.negf %172 : vector<16x128xf32>
    %174 = math.exp %173 : vector<16x128xf32>
    %cst_49 = arith.constant 1.000000e+00 : f32
    %175 = vector.broadcast %cst_49 : f32 to vector<16x128xf32>
    %176 = arith.addf %175, %174 : vector<16x128xf32>
    %177 = arith.divf %175, %176 : vector<16x128xf32>
    %178 = vector.extract_strided_slice %169 {offsets = [0, 128], sizes = [16, 128], strides = [1, 1]} : vector<16x512xf32> to vector<16x128xf32>
    %cst_50 = arith.constant dense<0.000000e+00> : vector<16x128xf32>
    %179 = tpu.matmul %165, %9, %cst_50 {dimension_numbers = #tpu.dot_dimension_numbers<[1], [0], [0], [1], [0, 0, 1, 1], [], []>} : vector<16x128xbf16>, vector<128x128xbf16>, vector<16x128xf32> -> vector<16x128xf32>
    %180 = arith.addf %178, %179 : vector<16x128xf32>
    %181 = arith.negf %180 : vector<16x128xf32>
    %182 = math.exp %181 : vector<16x128xf32>
    %cst_51 = arith.constant 1.000000e+00 : f32
    %183 = vector.broadcast %cst_51 : f32 to vector<16x128xf32>
    %184 = arith.addf %183, %182 : vector<16x128xf32>
    %185 = arith.divf %183, %184 : vector<16x128xf32>
    %186 = vector.extract_strided_slice %169 {offsets = [0, 256], sizes = [16, 128], strides = [1, 1]} : vector<16x512xf32> to vector<16x128xf32>
    %cst_52 = arith.constant dense<0.000000e+00> : vector<16x128xf32>
    %187 = tpu.matmul %165, %10, %cst_52 {dimension_numbers = #tpu.dot_dimension_numbers<[1], [0], [0], [1], [0, 0, 1, 1], [], []>} : vector<16x128xbf16>, vector<128x128xbf16>, vector<16x128xf32> -> vector<16x128xf32>
    %188 = arith.addf %186, %187 : vector<16x128xf32>
    %189 = math.tanh %188 : vector<16x128xf32>
    %190 = vector.extract_strided_slice %169 {offsets = [0, 384], sizes = [16, 128], strides = [1, 1]} : vector<16x512xf32> to vector<16x128xf32>
    %cst_53 = arith.constant dense<0.000000e+00> : vector<16x128xf32>
    %191 = tpu.matmul %165, %11, %cst_53 {dimension_numbers = #tpu.dot_dimension_numbers<[1], [0], [0], [1], [0, 0, 1, 1], [], []>} : vector<16x128xbf16>, vector<128x128xbf16>, vector<16x128xf32> -> vector<16x128xf32>
    %192 = arith.addf %190, %191 : vector<16x128xf32>
    %193 = arith.negf %192 : vector<16x128xf32>
    %194 = math.exp %193 : vector<16x128xf32>
    %cst_54 = arith.constant 1.000000e+00 : f32
    %195 = vector.broadcast %cst_54 : f32 to vector<16x128xf32>
    %196 = arith.addf %195, %194 : vector<16x128xf32>
    %197 = arith.divf %195, %196 : vector<16x128xf32>
    %198 = arith.mulf %185, %162 : vector<16x128xf32>
    %199 = arith.mulf %177, %189 : vector<16x128xf32>
    %200 = arith.addf %198, %199 : vector<16x128xf32>
    %201 = math.tanh %200 : vector<16x128xf32>
    %202 = arith.mulf %197, %201 : vector<16x128xf32>
    %203 = arith.truncf %202 : vector<16x128xf32> to vector<16x128xbf16>
    %c5_i32 = arith.constant 5 : i32
    %c16_i32_55 = arith.constant 16 : i32
    %204 = arith.muli %c5_i32, %c16_i32_55 : i32
    %205 = tpu.assume_multiple %204, 16 : i32
    %206 = arith.index_cast %205 : i32 to index
    %c0_56 = arith.constant 0 : index
    %207 = vector.load %arg7[%206, %c0_56] : memref<128x512xf32, #tpu.memory_space<vmem>>, vector<16x512xf32>
    %208 = vector.extract_strided_slice %207 {offsets = [0, 0], sizes = [16, 128], strides = [1, 1]} : vector<16x512xf32> to vector<16x128xf32>
    %cst_57 = arith.constant dense<0.000000e+00> : vector<16x128xf32>
    %209 = tpu.matmul %203, %8, %cst_57 {dimension_numbers = #tpu.dot_dimension_numbers<[1], [0], [0], [1], [0, 0, 1, 1], [], []>} : vector<16x128xbf16>, vector<128x128xbf16>, vector<16x128xf32> -> vector<16x128xf32>
    %210 = arith.addf %208, %209 : vector<16x128xf32>
    %211 = arith.negf %210 : vector<16x128xf32>
    %212 = math.exp %211 : vector<16x128xf32>
    %cst_58 = arith.constant 1.000000e+00 : f32
    %213 = vector.broadcast %cst_58 : f32 to vector<16x128xf32>
    %214 = arith.addf %213, %212 : vector<16x128xf32>
    %215 = arith.divf %213, %214 : vector<16x128xf32>
    %216 = vector.extract_strided_slice %207 {offsets = [0, 128], sizes = [16, 128], strides = [1, 1]} : vector<16x512xf32> to vector<16x128xf32>
    %cst_59 = arith.constant dense<0.000000e+00> : vector<16x128xf32>
    %217 = tpu.matmul %203, %9, %cst_59 {dimension_numbers = #tpu.dot_dimension_numbers<[1], [0], [0], [1], [0, 0, 1, 1], [], []>} : vector<16x128xbf16>, vector<128x128xbf16>, vector<16x128xf32> -> vector<16x128xf32>
    %218 = arith.addf %216, %217 : vector<16x128xf32>
    %219 = arith.negf %218 : vector<16x128xf32>
    %220 = math.exp %219 : vector<16x128xf32>
    %cst_60 = arith.constant 1.000000e+00 : f32
    %221 = vector.broadcast %cst_60 : f32 to vector<16x128xf32>
    %222 = arith.addf %221, %220 : vector<16x128xf32>
    %223 = arith.divf %221, %222 : vector<16x128xf32>
    %224 = vector.extract_strided_slice %207 {offsets = [0, 256], sizes = [16, 128], strides = [1, 1]} : vector<16x512xf32> to vector<16x128xf32>
    %cst_61 = arith.constant dense<0.000000e+00> : vector<16x128xf32>
    %225 = tpu.matmul %203, %10, %cst_61 {dimension_numbers = #tpu.dot_dimension_numbers<[1], [0], [0], [1], [0, 0, 1, 1], [], []>} : vector<16x128xbf16>, vector<128x128xbf16>, vector<16x128xf32> -> vector<16x128xf32>
    %226 = arith.addf %224, %225 : vector<16x128xf32>
    %227 = math.tanh %226 : vector<16x128xf32>
    %228 = vector.extract_strided_slice %207 {offsets = [0, 384], sizes = [16, 128], strides = [1, 1]} : vector<16x512xf32> to vector<16x128xf32>
    %cst_62 = arith.constant dense<0.000000e+00> : vector<16x128xf32>
    %229 = tpu.matmul %203, %11, %cst_62 {dimension_numbers = #tpu.dot_dimension_numbers<[1], [0], [0], [1], [0, 0, 1, 1], [], []>} : vector<16x128xbf16>, vector<128x128xbf16>, vector<16x128xf32> -> vector<16x128xf32>
    %230 = arith.addf %228, %229 : vector<16x128xf32>
    %231 = arith.negf %230 : vector<16x128xf32>
    %232 = math.exp %231 : vector<16x128xf32>
    %cst_63 = arith.constant 1.000000e+00 : f32
    %233 = vector.broadcast %cst_63 : f32 to vector<16x128xf32>
    %234 = arith.addf %233, %232 : vector<16x128xf32>
    %235 = arith.divf %233, %234 : vector<16x128xf32>
    %236 = arith.mulf %223, %200 : vector<16x128xf32>
    %237 = arith.mulf %215, %227 : vector<16x128xf32>
    %238 = arith.addf %236, %237 : vector<16x128xf32>
    %239 = math.tanh %238 : vector<16x128xf32>
    %240 = arith.mulf %235, %239 : vector<16x128xf32>
    %241 = arith.truncf %240 : vector<16x128xf32> to vector<16x128xbf16>
    %c6_i32 = arith.constant 6 : i32
    %c16_i32_64 = arith.constant 16 : i32
    %242 = arith.muli %c6_i32, %c16_i32_64 : i32
    %243 = tpu.assume_multiple %242, 16 : i32
    %244 = arith.index_cast %243 : i32 to index
    %c0_65 = arith.constant 0 : index
    %245 = vector.load %arg7[%244, %c0_65] : memref<128x512xf32, #tpu.memory_space<vmem>>, vector<16x512xf32>
    %246 = vector.extract_strided_slice %245 {offsets = [0, 0], sizes = [16, 128], strides = [1, 1]} : vector<16x512xf32> to vector<16x128xf32>
    %cst_66 = arith.constant dense<0.000000e+00> : vector<16x128xf32>
    %247 = tpu.matmul %241, %8, %cst_66 {dimension_numbers = #tpu.dot_dimension_numbers<[1], [0], [0], [1], [0, 0, 1, 1], [], []>} : vector<16x128xbf16>, vector<128x128xbf16>, vector<16x128xf32> -> vector<16x128xf32>
    %248 = arith.addf %246, %247 : vector<16x128xf32>
    %249 = arith.negf %248 : vector<16x128xf32>
    %250 = math.exp %249 : vector<16x128xf32>
    %cst_67 = arith.constant 1.000000e+00 : f32
    %251 = vector.broadcast %cst_67 : f32 to vector<16x128xf32>
    %252 = arith.addf %251, %250 : vector<16x128xf32>
    %253 = arith.divf %251, %252 : vector<16x128xf32>
    %254 = vector.extract_strided_slice %245 {offsets = [0, 128], sizes = [16, 128], strides = [1, 1]} : vector<16x512xf32> to vector<16x128xf32>
    %cst_68 = arith.constant dense<0.000000e+00> : vector<16x128xf32>
    %255 = tpu.matmul %241, %9, %cst_68 {dimension_numbers = #tpu.dot_dimension_numbers<[1], [0], [0], [1], [0, 0, 1, 1], [], []>} : vector<16x128xbf16>, vector<128x128xbf16>, vector<16x128xf32> -> vector<16x128xf32>
    %256 = arith.addf %254, %255 : vector<16x128xf32>
    %257 = arith.negf %256 : vector<16x128xf32>
    %258 = math.exp %257 : vector<16x128xf32>
    %cst_69 = arith.constant 1.000000e+00 : f32
    %259 = vector.broadcast %cst_69 : f32 to vector<16x128xf32>
    %260 = arith.addf %259, %258 : vector<16x128xf32>
    %261 = arith.divf %259, %260 : vector<16x128xf32>
    %262 = vector.extract_strided_slice %245 {offsets = [0, 256], sizes = [16, 128], strides = [1, 1]} : vector<16x512xf32> to vector<16x128xf32>
    %cst_70 = arith.constant dense<0.000000e+00> : vector<16x128xf32>
    %263 = tpu.matmul %241, %10, %cst_70 {dimension_numbers = #tpu.dot_dimension_numbers<[1], [0], [0], [1], [0, 0, 1, 1], [], []>} : vector<16x128xbf16>, vector<128x128xbf16>, vector<16x128xf32> -> vector<16x128xf32>
    %264 = arith.addf %262, %263 : vector<16x128xf32>
    %265 = math.tanh %264 : vector<16x128xf32>
    %266 = vector.extract_strided_slice %245 {offsets = [0, 384], sizes = [16, 128], strides = [1, 1]} : vector<16x512xf32> to vector<16x128xf32>
    %cst_71 = arith.constant dense<0.000000e+00> : vector<16x128xf32>
    %267 = tpu.matmul %241, %11, %cst_71 {dimension_numbers = #tpu.dot_dimension_numbers<[1], [0], [0], [1], [0, 0, 1, 1], [], []>} : vector<16x128xbf16>, vector<128x128xbf16>, vector<16x128xf32> -> vector<16x128xf32>
    %268 = arith.addf %266, %267 : vector<16x128xf32>
    %269 = arith.negf %268 : vector<16x128xf32>
    %270 = math.exp %269 : vector<16x128xf32>
    %cst_72 = arith.constant 1.000000e+00 : f32
    %271 = vector.broadcast %cst_72 : f32 to vector<16x128xf32>
    %272 = arith.addf %271, %270 : vector<16x128xf32>
    %273 = arith.divf %271, %272 : vector<16x128xf32>
    %274 = arith.mulf %261, %238 : vector<16x128xf32>
    %275 = arith.mulf %253, %265 : vector<16x128xf32>
    %276 = arith.addf %274, %275 : vector<16x128xf32>
    %277 = math.tanh %276 : vector<16x128xf32>
    %278 = arith.mulf %273, %277 : vector<16x128xf32>
    %279 = arith.truncf %278 : vector<16x128xf32> to vector<16x128xbf16>
    %c7_i32 = arith.constant 7 : i32
    %c16_i32_73 = arith.constant 16 : i32
    %280 = arith.muli %c7_i32, %c16_i32_73 : i32
    %281 = tpu.assume_multiple %280, 16 : i32
    %282 = arith.index_cast %281 : i32 to index
    %c0_74 = arith.constant 0 : index
    %283 = vector.load %arg7[%282, %c0_74] : memref<128x512xf32, #tpu.memory_space<vmem>>, vector<16x512xf32>
    %284 = vector.extract_strided_slice %283 {offsets = [0, 0], sizes = [16, 128], strides = [1, 1]} : vector<16x512xf32> to vector<16x128xf32>
    %cst_75 = arith.constant dense<0.000000e+00> : vector<16x128xf32>
    %285 = tpu.matmul %279, %8, %cst_75 {dimension_numbers = #tpu.dot_dimension_numbers<[1], [0], [0], [1], [0, 0, 1, 1], [], []>} : vector<16x128xbf16>, vector<128x128xbf16>, vector<16x128xf32> -> vector<16x128xf32>
    %286 = arith.addf %284, %285 : vector<16x128xf32>
    %287 = arith.negf %286 : vector<16x128xf32>
    %288 = math.exp %287 : vector<16x128xf32>
    %cst_76 = arith.constant 1.000000e+00 : f32
    %289 = vector.broadcast %cst_76 : f32 to vector<16x128xf32>
    %290 = arith.addf %289, %288 : vector<16x128xf32>
    %291 = arith.divf %289, %290 : vector<16x128xf32>
    %292 = vector.extract_strided_slice %283 {offsets = [0, 128], sizes = [16, 128], strides = [1, 1]} : vector<16x512xf32> to vector<16x128xf32>
    %cst_77 = arith.constant dense<0.000000e+00> : vector<16x128xf32>
    %293 = tpu.matmul %279, %9, %cst_77 {dimension_numbers = #tpu.dot_dimension_numbers<[1], [0], [0], [1], [0, 0, 1, 1], [], []>} : vector<16x128xbf16>, vector<128x128xbf16>, vector<16x128xf32> -> vector<16x128xf32>
    %294 = arith.addf %292, %293 : vector<16x128xf32>
    %295 = arith.negf %294 : vector<16x128xf32>
    %296 = math.exp %295 : vector<16x128xf32>
    %cst_78 = arith.constant 1.000000e+00 : f32
    %297 = vector.broadcast %cst_78 : f32 to vector<16x128xf32>
    %298 = arith.addf %297, %296 : vector<16x128xf32>
    %299 = arith.divf %297, %298 : vector<16x128xf32>
    %300 = vector.extract_strided_slice %283 {offsets = [0, 256], sizes = [16, 128], strides = [1, 1]} : vector<16x512xf32> to vector<16x128xf32>
    %cst_79 = arith.constant dense<0.000000e+00> : vector<16x128xf32>
    %301 = tpu.matmul %279, %10, %cst_79 {dimension_numbers = #tpu.dot_dimension_numbers<[1], [0], [0], [1], [0, 0, 1, 1], [], []>} : vector<16x128xbf16>, vector<128x128xbf16>, vector<16x128xf32> -> vector<16x128xf32>
    %302 = arith.addf %300, %301 : vector<16x128xf32>
    %303 = math.tanh %302 : vector<16x128xf32>
    %304 = vector.extract_strided_slice %283 {offsets = [0, 384], sizes = [16, 128], strides = [1, 1]} : vector<16x512xf32> to vector<16x128xf32>
    %cst_80 = arith.constant dense<0.000000e+00> : vector<16x128xf32>
    %305 = tpu.matmul %279, %11, %cst_80 {dimension_numbers = #tpu.dot_dimension_numbers<[1], [0], [0], [1], [0, 0, 1, 1], [], []>} : vector<16x128xbf16>, vector<128x128xbf16>, vector<16x128xf32> -> vector<16x128xf32>
    %306 = arith.addf %304, %305 : vector<16x128xf32>
    %307 = arith.negf %306 : vector<16x128xf32>
    %308 = math.exp %307 : vector<16x128xf32>
    %cst_81 = arith.constant 1.000000e+00 : f32
    %309 = vector.broadcast %cst_81 : f32 to vector<16x128xf32>
    %310 = arith.addf %309, %308 : vector<16x128xf32>
    %311 = arith.divf %309, %310 : vector<16x128xf32>
    %312 = arith.mulf %299, %276 : vector<16x128xf32>
    %313 = arith.mulf %291, %303 : vector<16x128xf32>
    %314 = arith.addf %312, %313 : vector<16x128xf32>
    %315 = math.tanh %314 : vector<16x128xf32>
    %316 = arith.mulf %311, %315 : vector<16x128xf32>
    %317 = arith.truncf %316 : vector<16x128xf32> to vector<16x128xbf16>
    %c8_i32 = arith.constant 8 : i32
    %c0_82 = arith.constant 0 : index
    %c0_83 = arith.constant 0 : index
    %318 = vector.load %arg4[%c0_82, %c0_83] : memref<128x128xbf16, #tpu.memory_space<vmem>>, vector<128x128xbf16>
    %cst_84 = arith.constant dense<0.000000e+00> : vector<16x128xf32>
    %319 = tpu.matmul %317, %318, %cst_84 {dimension_numbers = #tpu.dot_dimension_numbers<[1], [0], [0], [1], [0, 0, 1, 1], [], []>} : vector<16x128xbf16>, vector<128x128xbf16>, vector<16x128xf32> -> vector<16x128xf32>
    %c0_85 = arith.constant 0 : index
    %c0_86 = arith.constant 0 : index
    %320 = vector.load %arg5[%c0_85, %c0_86] : memref<1x128xf32, #tpu.memory_space<vmem>>, vector<1x128xf32>
    %321 = vector.broadcast %320 : vector<1x128xf32> to vector<16x128xf32>
    %322 = arith.addf %319, %321 : vector<16x128xf32>
    %c0_87 = arith.constant 0 : index
    %c0_88 = arith.constant 0 : index
    %323 = vector.load %arg6[%c0_87, %c0_88] : memref<16x128xf32, #tpu.memory_space<vmem>>, vector<16x128xf32>
    tpu.vector_store %arg6[%c0_87, %c0_88], %322 {strides = array<i32>} : memref<16x128xf32, #tpu.memory_space<vmem>>, vector<16x128xf32>,
    return
  }
}

</mosaic_0001>

<llo_original>
// kernel: forward.1
$region0: #{forward.1}
  #allocation0 [shape = 'u32[]', space=smem, size = 0x4, offset = 0x4, fixed_abs, tag = 'smem constant byte address 0x4 - core index']
  #allocation1 [shape = 'u32[144,128]{1,0:T(1,128)}', space=vmem, size = 0x12000, scoped, tag = 'internal scratch']
  #allocation2 [shape = 'f32[128,512]{1,0:T(8,128)}', space=vmem, size = 0x40000, scoped, tag = 'scratch operand']
  %s0 = inlined_call_operand.hbm [shape: bf16[128,28], index: 0, kind: input, shape index: {}]
  %s1 = inlined_call_operand.hbm [shape: bf16[28,512], index: 1, kind: input, shape index: {}]
  %s2 = inlined_call_operand.hbm [shape: bf16[128,512], index: 2, kind: input, shape index: {}]
  %s3 = inlined_call_operand.hbm [shape: f32[1,512], index: 3, kind: input, shape index: {}]
  %s4 = inlined_call_operand.hbm [shape: bf16[128,128], index: 4, kind: input, shape index: {}]
  %s5 = inlined_call_operand.hbm [shape: f32[1,128], index: 5, kind: input, shape index: {}]
  %s6 = inlined_call_operand.hbm [shape: f32[16,128], index: 6, kind: output, shape index: {}]
  %s7 = sld [smem:[#allocation0]]
  $region58: #{forward.1} parent=0
    _
  %s9 = ssub.s32 1, %s7
  %s10 = scalar_select 0, %s9, %s7
  $region1: #{forward.1} parent=0
    #allocation3 [shape = 'u8[32768]{0}', space=vmem, size = 0x8000, scoped, tag = 'input window, operand 0, single buffered']
    #allocation4 [shape = 's32[1]{0}', space=sflag, size = 0x4, scoped, tag = 'scoped memory for forward.1']
    #allocation5 [shape = 's32[1]{0}', space=sflag, size = 0x4, scoped, tag = 'scoped memory for forward.1']
    #allocation6 [shape = 'u8[32768]{0}', space=vmem, size = 0x8000, scoped, tag = 'input window, operand 1, single buffered']
    #allocation7 [shape = 's32[1]{0}', space=sflag, size = 0x4, scoped, tag = 'scoped memory for forward.1']
    #allocation8 [shape = 'u8[131072]{0}', space=vmem, size = 0x20000, scoped, tag = 'input window, operand 2, single buffered']
    #allocation9 [shape = 'u8[2048]{0}', space=vmem, size = 0x800, scoped, tag = 'input window, operand 3, single buffered']
    #allocation10 [shape = 's32[1]{0}', space=sflag, size = 0x4, scoped, tag = 'scoped memory for forward.1']
    #allocation11 [shape = 'u8[32768]{0}', space=vmem, size = 0x8000, scoped, tag = 'input window, operand 4, single buffered']
    #allocation12 [shape = 'u8[512]{0}', space=vmem, size = 0x400, scoped, tag = 'input window, operand 5, single buffered']
    #allocation13 [shape = 's32[1]{0}', space=sflag, size = 0x4, scoped, tag = 'scoped memory for forward.1']
    #allocation14 [shape = 'u8[8192]{0}', space=vmem, size = 0x2000, scoped, tag = 'output window, operand 0, single buffered']
    %11 = vsyncpa [#allocation4], 0
    %12 = vsyncpa [#allocation7], 0
    %13 = vsyncpa [#allocation10], 0
    %14 = vsyncpa [#allocation13], 0
    %15 = vsyncpa [#allocation5], 0
    // Predicated region
    $region2: #{forward.1} parent=1 // pred_check
      _
    $region3: #{forward.1} parent=1 // pred_check_branch
      %17 = sbr.rel (0) target = $region5
    $region4: #{forward.1} parent=1 // pred_region
      %s19 = ssub.s32 1024, 1024
      %20 = vsyncadd [#allocation4], %s19
      %s21 = sshll.u32 [#allocation3], 4
      %s22 = int_to_ptr.vmem [resolvable:$true] %s21
      %27 = dma.hbm_to_vmem [thread:$0]  %s0, 1024, %s22, [#allocation4], 64, 64, 4
    $region5: #{forward.1} parent=1 // pred_fallthru
      _
    // Predicated region
    $region6: #{forward.1} parent=1 // pred_check
      _
    $region7: #{forward.1} parent=1 // pred_check_branch
      %29 = sbr.rel (0) target = $region9
    $region8: #{forward.1} parent=1 // pred_region
      %s31 = ssub.s32 1024, 1024
      %32 = vsyncadd [#allocation7], %s31
      %s33 = sshll.u32 [#allocation6], 4
      %s34 = int_to_ptr.vmem [resolvable:$true] %s33
      %39 = dma.hbm_to_vmem [thread:$0]  %s1, 1024, %s34, [#allocation7], 256, 256, 16
    $region9: #{forward.1} parent=1 // pred_fallthru
      _
    // Predicated region
    $region10: #{forward.1} parent=1 // pred_check
      _
    $region11: #{forward.1} parent=1 // pred_check_branch
      %41 = sbr.rel (0) target = $region13
    $region12: #{forward.1} parent=1 // pred_region
      %s43 = ssub.s32 4096, 4096
      %44 = vsyncadd [#allocation7], %s43
      %s45 = sshll.u32 [#allocation8], 4
      %s46 = int_to_ptr.vmem [resolvable:$true] %s45
      %51 = dma.hbm_to_vmem [thread:$0]  %s2, 4096, %s46, [#allocation7], 256, 256, 16
    $region13: #{forward.1} parent=1 // pred_fallthru
      _
    // Predicated region
    $region14: #{forward.1} parent=1 // pred_check
      _
    $region15: #{forward.1} parent=1 // pred_check_branch
      %53 = sbr.rel (0) target = $region17
    $region16: #{forward.1} parent=1 // pred_region
      %s55 = ssub.s32 64, 64
      %56 = vsyncadd [#allocation10], %s55
      %s58 = sshll.u32 [#allocation9], 4
      %s59 = int_to_ptr.vmem [resolvable:$true] %s58
      %61 = dma.hbm_to_vmem [thread:$0]  %s3, 64, %s59, [#allocation10]
    $region17: #{forward.1} parent=1 // pred_fallthru
      _
    // Predicated region
    $region18: #{forward.1} parent=1 // pred_check
      _
    $region19: #{forward.1} parent=1 // pred_check_branch
      %63 = sbr.rel (0) target = $region21
    $region20: #{forward.1} parent=1 // pred_region
      %s65 = ssub.s32 1024, 1024
      %66 = vsyncadd [#allocation10], %s65
      %s67 = sshll.u32 [#allocation11], 4
      %s68 = int_to_ptr.vmem [resolvable:$true] %s67
      %73 = dma.hbm_to_vmem [thread:$0]  %s4, 1024, %s68, [#allocation10], 64, 64, 4
    $region21: #{forward.1} parent=1 // pred_fallthru
      _
    // Predicated region
    $region22: #{forward.1} parent=1 // pred_check
      _
    $region23: #{forward.1} parent=1 // pred_check_branch
      %75 = sbr.rel (0) target = $region25
    $region24: #{forward.1} parent=1 // pred_region
      %s77 = ssub.s32 16, 16
      %78 = vsyncadd [#allocation13], %s77
      %s80 = sshll.u32 [#allocation12], 4
      %s81 = int_to_ptr.vmem [resolvable:$true] %s80
      %83 = dma.hbm_to_vmem [thread:$0]  %s5, 16, %s81, [#allocation13]
    $region25: #{forward.1} parent=1 // pred_fallthru
      _
    // Predicated region
    $region26: #{forward.1} parent=1 // pred_check
      _
    $region27: #{forward.1} parent=1 // pred_check_branch
      %85 = sbr.rel (0) target = $region29
    $region28: #{forward.1} parent=1 // pred_region
      %86 = dma.done [#allocation4], 1024
    $region29: #{forward.1} parent=1 // pred_fallthru
      _
    // Predicated region
    $region30: #{forward.1} parent=1 // pred_check
      _
    $region31: #{forward.1} parent=1 // pred_check_branch
      %88 = sbr.rel (0) target = $region33
    $region32: #{forward.1} parent=1 // pred_region
      %89 = dma.done [#allocation7], 1024
    $region33: #{forward.1} parent=1 // pred_fallthru
      _
    // Predicated region
    $region34: #{forward.1} parent=1 // pred_check
      _
    $region35: #{forward.1} parent=1 // pred_check_branch
      %91 = sbr.rel (0) target = $region37
    $region36: #{forward.1} parent=1 // pred_region
      %92 = dma.done [#allocation7], 4096
    $region37: #{forward.1} parent=1 // pred_fallthru
      _
    // Predicated region
    $region38: #{forward.1} parent=1 // pred_check
      _
    $region39: #{forward.1} parent=1 // pred_check_branch
      %94 = sbr.rel (0) target = $region41
    $region40: #{forward.1} parent=1 // pred_region
      %95 = dma.done [#allocation10], 64
    $region41: #{forward.1} parent=1 // pred_fallthru
      _
    // Predicated region
    $region42: #{forward.1} parent=1 // pred_check
      _
    $region43: #{forward.1} parent=1 // pred_check_branch
      %97 = sbr.rel (0) target = $region45
    $region44: #{forward.1} parent=1 // pred_region
      %98 = dma.done [#allocation10], 1024
    $region45: #{forward.1} parent=1 // pred_fallthru
      _
    // Predicated region
    $region46: #{forward.1} parent=1 // pred_check
      _
    $region47: #{forward.1} parent=1 // pred_check_branch
      %100 = sbr.rel (0) target = $region49
    $region48: #{forward.1} parent=1 // pred_region
      %101 = dma.done [#allocation13], 16
    $region49: #{forward.1} parent=1 // pred_fallthru
      _
    %v103 = vld [vmem:[#allocation3] sm:$0xf]
    %v104 = vld [vmem:[#allocation3 + $0x4] sm:$0xf]
    %v105 = vld [vmem:[#allocation3 + $0x8] sm:$0xf]
    %v106 = vld [vmem:[#allocation3 + $0xc] sm:$0xf]
    %v107 = vld [vmem:[#allocation3 + $0x10] sm:$0xf]
    %v108 = vld [vmem:[#allocation3 + $0x14] sm:$0xf]
    %v109 = vld [vmem:[#allocation3 + $0x18] sm:$0xf]
    %v110 = vld [vmem:[#allocation3 + $0x1c] sm:$0xf]
    %v111 = vld [vmem:[#allocation3 + $0x20] sm:$0xf]
    %v112 = vld [vmem:[#allocation3 + $0x24] sm:$0xf]
    %v113 = vld [vmem:[#allocation3 + $0x28] sm:$0xf]
    %v114 = vld [vmem:[#allocation3 + $0x2c] sm:$0xf]
    %v115 = vld [vmem:[#allocation3 + $0x30] sm:$0xf]
    %v116 = vld [vmem:[#allocation3 + $0x34] sm:$0xf]
    %v117 = vld [vmem:[#allocation3 + $0x38] sm:$0xf]
    %v118 = vld [vmem:[#allocation3 + $0x3c] sm:$0xf]
    %v119 = vld [vmem:[#allocation6] sm:$0xff]
    %v120 = vld [vmem:[#allocation6 + $0x8] sm:$0xff]
    %v121 = vld [vmem:[#allocation6 + $0x10] sm:$0xff]
    %v122 = vld [vmem:[#allocation6 + $0x18] sm:$0xff]
    %v123 = vld [vmem:[#allocation6 + $0x20] sm:$0xff]
    %v124 = vld [vmem:[#allocation6 + $0x28] sm:$0xff]
    %v125 = vld [vmem:[#allocation6 + $0x30] sm:$0x33]
    %v126 = vld [vmem:[#allocation6 + $0x38] sm:$0x33]
    %v127 = vld [vmem:[#allocation9] sm:$0xf]
    %v129 = vlaneseq
    %v130 = vshrl.u32 %v129, 7
    %v131 = vsub.s32 0, %v130
    %v132 = vrot.slane %v127, %v131
    %v133 = vlaneseq
    %v134 = vshrl.u32 %v133, 7
    %v135 = vsub.s32 1, %v134
    %v136 = vrot.slane %v127, %v135
    %v137 = vlaneseq
    %v138 = vshrl.u32 %v137, 7
    %v139 = vsub.s32 2, %v138
    %v140 = vrot.slane %v127, %v139
    %v141 = vlaneseq
    %v142 = vshrl.u32 %v141, 7
    %v143 = vsub.s32 3, %v142
    %v144 = vrot.slane %v127, %v143
    %v165 = vunpack.c.l.b16 %v103
    %v166 = vunpack.c.l.b16 %v104
    %v167 = vunpack.c.l.b16 %v105
    %v168 = vunpack.c.l.b16 %v106
    %v169 = vunpack.c.l.b16 %v107
    %v170 = vunpack.c.l.b16 %v108
    %v171 = vunpack.c.l.b16 %v109
    %v172 = vunpack.c.l.b16 %v110
    %v173 = vunpack.c.l.b16 %v111
    %v174 = vunpack.c.l.b16 %v112
    %v175 = vunpack.c.l.b16 %v113
    %v176 = vunpack.c.l.b16 %v114
    %v177 = vunpack.c.l.b16 %v115
    %v178 = vunpack.c.l.b16 %v116
    %v179 = vunpack.c.l.b16 %v117
    %v180 = vunpack.c.l.b16 %v118
    %v181 = vpack.c.b16 %v166, %v165
    %v182 = vpack.c.b16 %v168, %v167
    %v183 = vpack.c.b16 %v170, %v169
    %v184 = vpack.c.b16 %v172, %v171
    %v185 = vpack.c.b16 %v174, %v173
    %v186 = vpack.c.b16 %v176, %v175
    %v187 = vpack.c.b16 %v178, %v177
    %v188 = vpack.c.b16 %v180, %v179
    %v197 = vunpack.c.l.b16 %v119
    %v198 = vunpack.c.h.b16 %v119
    %v199 = vunpack.c.l.b16 %v120
    %v200 = vunpack.c.h.b16 %v120
    %v201 = vunpack.c.l.b16 %v121
    %v202 = vunpack.c.h.b16 %v121
    %v203 = vunpack.c.l.b16 %v122
    %v204 = vunpack.c.h.b16 %v122
    %v205 = vunpack.c.l.b16 %v123
    %v206 = vunpack.c.h.b16 %v123
    %v207 = vunpack.c.l.b16 %v124
    %v208 = vunpack.c.h.b16 %v124
    %v209 = vunpack.c.l.b16 %v125
    %v210 = vunpack.c.h.b16 %v125
    %v211 = vunpack.c.l.b16 %v126
    %v212 = vunpack.c.h.b16 %v126
    %v213 = vpack.c.b16 %v201, %v197
    %v214 = vpack.c.b16 %v202, %v198
    %v215 = vpack.c.b16 %v203, %v199
    %v216 = vpack.c.b16 %v204, %v200
    %v217 = vpack.c.b16 %v209, %v205
    %v218 = vpack.c.b16 %v210, %v206
    %v219 = vpack.c.b16 %v211, %v207
    %v220 = vpack.c.b16 %v212, %v208
    %vm225 = vcmask 228352
    %v227 = vsel %vm225, %v181, 0
    %v230 = vsel %vm225, %v182, 0
    %v233 = vsel %vm225, %v183, 0
    %v236 = vsel %vm225, %v184, 0
    %v239 = vsel %vm225, %v185, 0
    %v242 = vsel %vm225, %v186, 0
    %v245 = vsel %vm225, %v187, 0
    %v248 = vsel %vm225, %v188, 0
    %vm250 = vcmask 1045504
    %v252 = vsel %vm250, %v217, 0
    %v255 = vsel %vm250, %v218, 0
    %v258 = vsel %vm250, %v219, 0
    %v261 = vsel %vm250, %v220, 0
    %263 = vmatprep.subr.bf16.mxu0 %v214
    %264 = vmatpush1.bf16.msra.mxu0 %v213
    %265 = vmatprep.subr.bf16.mxu0 %v255
    %266 = vmatpush1.bf16.msra.mxu0 %v252
    %267 = vmatprep.subr.bf16.mxu0 0
    %268 = vmatpush1.bf16.msra.mxu0 0
    %269 = vmatprep.subr.bf16.mxu0 0
    %270 = vmatpush1.bf16.msra.mxu0 0
    %271 = vmatprep.subr.bf16.mxu0 0
    %272 = vmatpush1.bf16.msra.mxu0 0
    %273 = vmatprep.subr.bf16.mxu0 0
    %274 = vmatpush1.bf16.msra.mxu0 0
    %275 = vmatprep.subr.bf16.mxu0 0
    %276 = vmatpush1.bf16.msra.mxu0 0
    %277 = vmatprep.subr.bf16.mxu0 0
    %278 = vmatpush1.bf16.msra.mxu0 0
    %279 = vmatprep.subr.bf16.mxu0 0
    %280 = vmatpush1.bf16.msra.mxu0 0
    %281 = vmatprep.subr.bf16.mxu0 0
    %282 = vmatpush1.bf16.msra.mxu0 0
    %283 = vmatprep.subr.bf16.mxu0 0
    %284 = vmatpush1.bf16.msra.mxu0 0
    %285 = vmatprep.subr.bf16.mxu0 0
    %286 = vmatpush1.bf16.msra.mxu0 0
    %287 = vmatprep.subr.bf16.mxu0 0
    %288 = vmatpush1.bf16.msra.mxu0 0
    %289 = vmatprep.subr.bf16.mxu0 0
    %290 = vmatpush1.bf16.msra.mxu0 0
    %291 = vmatprep.subr.bf16.mxu0 0
    %292 = vmatpush1.bf16.msra.mxu0 0
    %293 = vmatprep.subr.bf16.mxu0 0
    %294 = vmatpush1.bf16.msra.mxu0 0
    %295 = vmatprep.mubr.bf16.mxu0 0
    %296 = vmatmul.mubr.bf16.gmra.mrb[0].mxu0 %v227
    %v297 = vpop.f32.mrb[0].mxu0
    %v298 = vadd.f32 %v132, %v297
    %v299 = vpop.f32.mrb[0].mxu0
    %v300 = vadd.f32 %v136, %v299
    %v301 = vpop.f32.mrb[0].mxu0
    %v302 = vadd.f32 %v132, %v301
    %v303 = vpop.f32.mrb[0].mxu0
    %v304 = vadd.f32 %v136, %v303
    %305 = vmatprep.mubr.bf16.mxu0 0
    %306 = vmatmul.mubr.bf16.gmra.mrb[0].mxu0 %v230
    %v307 = vpop.f32.mrb[0].mxu0
    %v308 = vadd.f32 %v132, %v307
    %v309 = vpop.f32.mrb[0].mxu0
    %v310 = vadd.f32 %v136, %v309
    %v311 = vpop.f32.mrb[0].mxu0
    %v312 = vadd.f32 %v132, %v311
    %v313 = vpop.f32.mrb[0].mxu0
    %v314 = vadd.f32 %v136, %v313
    %315 = vmatprep.mubr.bf16.mxu0 0
    %316 = vmatmul.mubr.bf16.gmra.mrb[0].mxu0 %v233
    %v317 = vpop.f32.mrb[0].mxu0
    %v318 = vadd.f32 %v132, %v317
    %v319 = vpop.f32.mrb[0].mxu0
    %v320 = vadd.f32 %v136, %v319
    %v321 = vpop.f32.mrb[0].mxu0
    %v322 = vadd.f32 %v132, %v321
    %v323 = vpop.f32.mrb[0].mxu0
    %v324 = vadd.f32 %v136, %v323
    %325 = vmatprep.mubr.bf16.mxu0 0
    %326 = vmatmul.mubr.bf16.gmra.mrb[0].mxu0 %v236
    %v327 = vpop.f32.mrb[0].mxu0
    %v328 = vadd.f32 %v132, %v327
    %v329 = vpop.f32.mrb[0].mxu0
    %v330 = vadd.f32 %v136, %v329
    %v331 = vpop.f32.mrb[0].mxu0
    %v332 = vadd.f32 %v132, %v331
    %v333 = vpop.f32.mrb[0].mxu0
    %v334 = vadd.f32 %v136, %v333
    %335 = vmatprep.mubr.bf16.mxu0 0
    %336 = vmatmul.mubr.bf16.gmra.mrb[0].mxu0 %v239
    %v337 = vpop.f32.mrb[0].mxu0
    %v338 = vadd.f32 %v132, %v337
    %v339 = vpop.f32.mrb[0].mxu0
    %v340 = vadd.f32 %v136, %v339
    %v341 = vpop.f32.mrb[0].mxu0
    %v342 = vadd.f32 %v132, %v341
    %v343 = vpop.f32.mrb[0].mxu0
    %v344 = vadd.f32 %v136, %v343
    %345 = vmatprep.mubr.bf16.mxu0 0
    %346 = vmatmul.mubr.bf16.gmra.mrb[0].mxu0 %v242
    %v347 = vpop.f32.mrb[0].mxu0
    %v348 = vadd.f32 %v132, %v347
    %v349 = vpop.f32.mrb[0].mxu0
    %v350 = vadd.f32 %v136, %v349
    %v351 = vpop.f32.mrb[0].mxu0
    %v352 = vadd.f32 %v132, %v351
    %v353 = vpop.f32.mrb[0].mxu0
    %v354 = vadd.f32 %v136, %v353
    %355 = vmatprep.mubr.bf16.mxu0 0
    %356 = vmatmul.mubr.bf16.gmra.mrb[0].mxu0 %v245
    %v357 = vpop.f32.mrb[0].mxu0
    %v358 = vadd.f32 %v132, %v357
    %v359 = vpop.f32.mrb[0].mxu0
    %v360 = vadd.f32 %v136, %v359
    %v361 = vpop.f32.mrb[0].mxu0
    %v362 = vadd.f32 %v132, %v361
    %v363 = vpop.f32.mrb[0].mxu0
    %v364 = vadd.f32 %v136, %v363
    %365 = vmatprep.mubr.bf16.mxu0 0
    %366 = vmatmul.mubr.bf16.gmra.mrb[0].mxu0 %v248
    %v367 = vpop.f32.mrb[0].mxu0
    %v368 = vadd.f32 %v132, %v367
    %v369 = vpop.f32.mrb[0].mxu0
    %v370 = vadd.f32 %v136, %v369
    %v371 = vpop.f32.mrb[0].mxu0
    %v372 = vadd.f32 %v132, %v371
    %v373 = vpop.f32.mrb[0].mxu0
    %v374 = vadd.f32 %v136, %v373
    %375 = vdwg.mxu0
    %376 = vmatprep.subr.bf16.mxu0 %v216
    %377 = vmatpush1.bf16.msra.mxu0 %v215
    %378 = vmatprep.subr.bf16.mxu0 %v261
    %379 = vmatpush1.bf16.msra.mxu0 %v258
    %380 = vmatprep.subr.bf16.mxu0 0
    %381 = vmatpush1.bf16.msra.mxu0 0
    %382 = vmatprep.subr.bf16.mxu0 0
    %383 = vmatpush1.bf16.msra.mxu0 0
    %384 = vmatprep.subr.bf16.mxu0 0
    %385 = vmatpush1.bf16.msra.mxu0 0
    %386 = vmatprep.subr.bf16.mxu0 0
    %387 = vmatpush1.bf16.msra.mxu0 0
    %388 = vmatprep.subr.bf16.mxu0 0
    %389 = vmatpush1.bf16.msra.mxu0 0
    %390 = vmatprep.subr.bf16.mxu0 0
    %391 = vmatpush1.bf16.msra.mxu0 0
    %392 = vmatprep.subr.bf16.mxu0 0
    %393 = vmatpush1.bf16.msra.mxu0 0
    %394 = vmatprep.subr.bf16.mxu0 0
    %395 = vmatpush1.bf16.msra.mxu0 0
    %396 = vmatprep.subr.bf16.mxu0 0
    %397 = vmatpush1.bf16.msra.mxu0 0
    %398 = vmatprep.subr.bf16.mxu0 0
    %399 = vmatpush1.bf16.msra.mxu0 0
    %400 = vmatprep.subr.bf16.mxu0 0
    %401 = vmatpush1.bf16.msra.mxu0 0
    %402 = vmatprep.subr.bf16.mxu0 0
    %403 = vmatpush1.bf16.msra.mxu0 0
    %404 = vmatprep.subr.bf16.mxu0 0
    %405 = vmatpush1.bf16.msra.mxu0 0
    %406 = vmatprep.subr.bf16.mxu0 0
    %407 = vmatpush1.bf16.msra.mxu0 0
    %408 = vmatprep.mubr.bf16.mxu0 0
    %409 = vmatmul.mubr.bf16.gmra.mrb[0].mxu0 %v227
    %v410 = vpop.f32.mrb[0].mxu0
    %v411 = vadd.f32 %v140, %v410
    %v412 = vpop.f32.mrb[0].mxu0
    %v413 = vadd.f32 %v144, %v412
    %v414 = vpop.f32.mrb[0].mxu0
    %v415 = vadd.f32 %v140, %v414
    %v416 = vpop.f32.mrb[0].mxu0
    %v417 = vadd.f32 %v144, %v416
    %418 = vmatprep.mubr.bf16.mxu0 0
    %419 = vmatmul.mubr.bf16.gmra.mrb[0].mxu0 %v230
    %v420 = vpop.f32.mrb[0].mxu0
    %v421 = vadd.f32 %v140, %v420
    %v422 = vpop.f32.mrb[0].mxu0
    %v423 = vadd.f32 %v144, %v422
    %v424 = vpop.f32.mrb[0].mxu0
    %v425 = vadd.f32 %v140, %v424
    %v426 = vpop.f32.mrb[0].mxu0
    %v427 = vadd.f32 %v144, %v426
    %428 = vmatprep.mubr.bf16.mxu0 0
    %429 = vmatmul.mubr.bf16.gmra.mrb[0].mxu0 %v233
    %v430 = vpop.f32.mrb[0].mxu0
    %v431 = vadd.f32 %v140, %v430
    %v432 = vpop.f32.mrb[0].mxu0
    %v433 = vadd.f32 %v144, %v432
    %v434 = vpop.f32.mrb[0].mxu0
    %v435 = vadd.f32 %v140, %v434
    %v436 = vpop.f32.mrb[0].mxu0
    %v437 = vadd.f32 %v144, %v436
    %438 = vmatprep.mubr.bf16.mxu0 0
    %439 = vmatmul.mubr.bf16.gmra.mrb[0].mxu0 %v236
    %v440 = vpop.f32.mrb[0].mxu0
    %v441 = vadd.f32 %v140, %v440
    %v442 = vpop.f32.mrb[0].mxu0
    %v443 = vadd.f32 %v144, %v442
    %v444 = vpop.f32.mrb[0].mxu0
    %v445 = vadd.f32 %v140, %v444
    %v446 = vpop.f32.mrb[0].mxu0
    %v447 = vadd.f32 %v144, %v446
    %448 = vmatprep.mubr.bf16.mxu0 0
    %449 = vmatmul.mubr.bf16.gmra.mrb[0].mxu0 %v239
    %v450 = vpop.f32.mrb[0].mxu0
    %v451 = vadd.f32 %v140, %v450
    %v452 = vpop.f32.mrb[0].mxu0
    %v453 = vadd.f32 %v144, %v452
    %v454 = vpop.f32.mrb[0].mxu0
    %v455 = vadd.f32 %v140, %v454
    %v456 = vpop.f32.mrb[0].mxu0
    %v457 = vadd.f32 %v144, %v456
    %458 = vmatprep.mubr.bf16.mxu0 0
    %459 = vmatmul.mubr.bf16.gmra.mrb[0].mxu0 %v242
    %v460 = vpop.f32.mrb[0].mxu0
    %v461 = vadd.f32 %v140, %v460
    %v462 = vpop.f32.mrb[0].mxu0
    %v463 = vadd.f32 %v144, %v462
    %v464 = vpop.f32.mrb[0].mxu0
    %v465 = vadd.f32 %v140, %v464
    %v466 = vpop.f32.mrb[0].mxu0
    %v467 = vadd.f32 %v144, %v466
    %468 = vmatprep.mubr.bf16.mxu0 0
    %469 = vmatmul.mubr.bf16.gmra.mrb[0].mxu0 %v245
    %v470 = vpop.f32.mrb[0].mxu0
    %v471 = vadd.f32 %v140, %v470
    %v472 = vpop.f32.mrb[0].mxu0
    %v473 = vadd.f32 %v144, %v472
    %v474 = vpop.f32.mrb[0].mxu0
    %v475 = vadd.f32 %v140, %v474
    %v476 = vpop.f32.mrb[0].mxu0
    %v477 = vadd.f32 %v144, %v476
    %478 = vmatprep.mubr.bf16.mxu0 0
    %479 = vmatmul.mubr.bf16.gmra.mrb[0].mxu0 %v248
    %v480 = vpop.f32.mrb[0].mxu0
    %v481 = vadd.f32 %v140, %v480
    %v482 = vpop.f32.mrb[0].mxu0
    %v483 = vadd.f32 %v144, %v482
    %v484 = vpop.f32.mrb[0].mxu0
    %v485 = vadd.f32 %v140, %v484
    %v486 = vpop.f32.mrb[0].mxu0
    %v487 = vadd.f32 %v144, %v486
    %488 = vdwg.mxu0
    %489 = vst [vmem:[#allocation2] sm:$0xff] %v298
    %490 = vst [vmem:[#allocation2 + $0x8] sm:$0xff] %v300
    %491 = vst [vmem:[#allocation2 + $0x10] sm:$0xff] %v411
    %492 = vst [vmem:[#allocation2 + $0x18] sm:$0xff] %v413
    %493 = vst [vmem:[#allocation2 + $0x20] sm:$0xff] %v302
    %494 = vst [vmem:[#allocation2 + $0x28] sm:$0xff] %v304
    %495 = vst [vmem:[#allocation2 + $0x30] sm:$0xff] %v415
    %496 = vst [vmem:[#allocation2 + $0x38] sm:$0xff] %v417
    %497 = vst [vmem:[#allocation2 + $0x40] sm:$0xff] %v308
    %498 = vst [vmem:[#allocation2 + $0x48] sm:$0xff] %v310
    %499 = vst [vmem:[#allocation2 + $0x50] sm:$0xff] %v421
    %500 = vst [vmem:[#allocation2 + $0x58] sm:$0xff] %v423
    %501 = vst [vmem:[#allocation2 + $0x60] sm:$0xff] %v312
    %502 = vst [vmem:[#allocation2 + $0x68] sm:$0xff] %v314
    %503 = vst [vmem:[#allocation2 + $0x70] sm:$0xff] %v425
    %504 = vst [vmem:[#allocation2 + $0x78] sm:$0xff] %v427
    %505 = vst [vmem:[#allocation2 + $0x80] sm:$0xff] %v318
    %506 = vst [vmem:[#allocation2 + $0x88] sm:$0xff] %v320
    %507 = vst [vmem:[#allocation2 + $0x90] sm:$0xff] %v431
    %508 = vst [vmem:[#allocation2 + $0x98] sm:$0xff] %v433
    %509 = vst [vmem:[#allocation2 + $0xa0] sm:$0xff] %v322
    %510 = vst [vmem:[#allocation2 + $0xa8] sm:$0xff] %v324
    %511 = vst [vmem:[#allocation2 + $0xb0] sm:$0xff] %v435
    %512 = vst [vmem:[#allocation2 + $0xb8] sm:$0xff] %v437
    %513 = vst [vmem:[#allocation2 + $0xc0] sm:$0xff] %v328
    %514 = vst [vmem:[#allocation2 + $0xc8] sm:$0xff] %v330
    %515 = vst [vmem:[#allocation2 + $0xd0] sm:$0xff] %v441
    %516 = vst [vmem:[#allocation2 + $0xd8] sm:$0xff] %v443
    %517 = vst [vmem:[#allocation2 + $0xe0] sm:$0xff] %v332
    %518 = vst [vmem:[#allocation2 + $0xe8] sm:$0xff] %v334
    %519 = vst [vmem:[#allocation2 + $0xf0] sm:$0xff] %v445
    %520 = vst [vmem:[#allocation2 + $0xf8] sm:$0xff] %v447
    %521 = vst [vmem:[#allocation2 + $0x100] sm:$0xff] %v338
    %522 = vst [vmem:[#allocation2 + $0x108] sm:$0xff] %v340
    %523 = vst [vmem:[#allocation2 + $0x110] sm:$0xff] %v451
    %524 = vst [vmem:[#allocation2 + $0x118] sm:$0xff] %v453
    %525 = vst [vmem:[#allocation2 + $0x120] sm:$0xff] %v342
    %526 = vst [vmem:[#allocation2 + $0x128] sm:$0xff] %v344
    %527 = vst [vmem:[#allocation2 + $0x130] sm:$0xff] %v455
    %528 = vst [vmem:[#allocation2 + $0x138] sm:$0xff] %v457
    %529 = vst [vmem:[#allocation2 + $0x140] sm:$0xff] %v348
    %530 = vst [vmem:[#allocation2 + $0x148] sm:$0xff] %v350
    %531 = vst [vmem:[#allocation2 + $0x150] sm:$0xff] %v461
    %532 = vst [vmem:[#allocation2 + $0x158] sm:$0xff] %v463
    %533 = vst [vmem:[#allocation2 + $0x160] sm:$0xff] %v352
    %534 = vst [vmem:[#allocation2 + $0x168] sm:$0xff] %v354
    %535 = vst [vmem:[#allocation2 + $0x170] sm:$0xff] %v465
    %536 = vst [vmem:[#allocation2 + $0x178] sm:$0xff] %v467
    %537 = vst [vmem:[#allocation2 + $0x180] sm:$0xff] %v358
    %538 = vst [vmem:[#allocation2 + $0x188] sm:$0xff] %v360
    %539 = vst [vmem:[#allocation2 + $0x190] sm:$0xff] %v471
    %540 = vst [vmem:[#allocation2 + $0x198] sm:$0xff] %v473
    %541 = vst [vmem:[#allocation2 + $0x1a0] sm:$0xff] %v362
    %542 = vst [vmem:[#allocation2 + $0x1a8] sm:$0xff] %v364
    %543 = vst [vmem:[#allocation2 + $0x1b0] sm:$0xff] %v475
    %544 = vst [vmem:[#allocation2 + $0x1b8] sm:$0xff] %v477
    %545 = vst [vmem:[#allocation2 + $0x1c0] sm:$0xff] %v368
    %546 = vst [vmem:[#allocation2 + $0x1c8] sm:$0xff] %v370
    %547 = vst [vmem:[#allocation2 + $0x1d0] sm:$0xff] %v481
    %548 = vst [vmem:[#allocation2 + $0x1d8] sm:$0xff] %v483
    %549 = vst [vmem:[#allocation2 + $0x1e0] sm:$0xff] %v372
    %550 = vst [vmem:[#allocation2 + $0x1e8] sm:$0xff] %v374
    %551 = vst [vmem:[#allocation2 + $0x1f0] sm:$0xff] %v485
    %552 = vst [vmem:[#allocation2 + $0x1f8] sm:$0xff] %v487
    %v553 = vld [vmem:[#allocation8] sm:$0xff]
    %v554 = vld [vmem:[#allocation8 + $0x8] sm:$0xff]
    %v555 = vld [vmem:[#allocation8 + $0x10] sm:$0xff]
    %v556 = vld [vmem:[#allocation8 + $0x18] sm:$0xff]
    %v557 = vld [vmem:[#allocation8 + $0x20] sm:$0xff]
    %v558 = vld [vmem:[#allocation8 + $0x28] sm:$0xff]
    %v559 = vld [vmem:[#allocation8 + $0x30] sm:$0xff]
    %v560 = vld [vmem:[#allocation8 + $0x38] sm:$0xff]
    %v561 = vld [vmem:[#allocation8 + $0x40] sm:$0xff]
    %v562 = vld [vmem:[#allocation8 + $0x48] sm:$0xff]
    %v563 = vld [vmem:[#allocation8 + $0x50] sm:$0xff]
    %v564 = vld [vmem:[#allocation8 + $0x58] sm:$0xff]
    %v565 = vld [vmem:[#allocation8 + $0x60] sm:$0xff]
    %v566 = vld [vmem:[#allocation8 + $0x68] sm:$0xff]
    %v567 = vld [vmem:[#allocation8 + $0x70] sm:$0xff]
    %v568 = vld [vmem:[#allocation8 + $0x78] sm:$0xff]
    %v569 = vld [vmem:[#allocation8 + $0x80] sm:$0xff]
    %v570 = vld [vmem:[#allocation8 + $0x88] sm:$0xff]
    %v571 = vld [vmem:[#allocation8 + $0x90] sm:$0xff]
    %v572 = vld [vmem:[#allocation8 + $0x98] sm:$0xff]
    %v573 = vld [vmem:[#allocation8 + $0xa0] sm:$0xff]
    %v574 = vld [vmem:[#allocation8 + $0xa8] sm:$0xff]
    %v575 = vld [vmem:[#allocation8 + $0xb0] sm:$0xff]
    %v576 = vld [vmem:[#allocation8 + $0xb8] sm:$0xff]
    %v577 = vld [vmem:[#allocation8 + $0xc0] sm:$0xff]
    %v578 = vld [vmem:[#allocation8 + $0xc8] sm:$0xff]
    %v579 = vld [vmem:[#allocation8 + $0xd0] sm:$0xff]
    %v580 = vld [vmem:[#allocation8 + $0xd8] sm:$0xff]
    %v581 = vld [vmem:[#allocation8 + $0xe0] sm:$0xff]
    %v582 = vld [vmem:[#allocation8 + $0xe8] sm:$0xff]
    %v583 = vld [vmem:[#allocation8 + $0xf0] sm:$0xff]
    %v584 = vld [vmem:[#allocation8 + $0xf8] sm:$0xff]
    %s585 = smul.u32 0, 4
    %s586 = smul.addr %s585, 8
    %s587 = scalar_lea.vmem [#allocation2], %s586
    %v588 = vld [vmem:[%s587] sm:$0xff]
    %v589 = vld [vmem:[%s587 + $0x8] sm:$0xff]
    %v590 = vld [vmem:[%s587 + $0x10] sm:$0xff]
    %v591 = vld [vmem:[%s587 + $0x18] sm:$0xff]
    %v592 = vld [vmem:[%s587 + $0x20] sm:$0xff]
    %v593 = vld [vmem:[%s587 + $0x28] sm:$0xff]
    %v594 = vld [vmem:[%s587 + $0x30] sm:$0xff]
    %v595 = vld [vmem:[%s587 + $0x38] sm:$0xff]
    %v612 = vunpack.c.l.b16 %v553
    %v613 = vunpack.c.l.b16 %v555
    %v614 = vunpack.c.l.b16 %v557
    %v615 = vunpack.c.l.b16 %v559
    %v616 = vunpack.c.l.b16 %v561
    %v617 = vunpack.c.l.b16 %v563
    %v618 = vunpack.c.l.b16 %v565
    %v619 = vunpack.c.l.b16 %v567
    %v620 = vunpack.c.l.b16 %v569
    %v621 = vunpack.c.l.b16 %v571
    %v622 = vunpack.c.l.b16 %v573
    %v623 = vunpack.c.l.b16 %v575
    %v624 = vunpack.c.l.b16 %v577
    %v625 = vunpack.c.l.b16 %v579
    %v626 = vunpack.c.l.b16 %v581
    %v627 = vunpack.c.l.b16 %v583
    %v628 = vpack.c.b16 %v613, %v612
    %v629 = vpack.c.b16 %v615, %v614
    %v630 = vpack.c.b16 %v617, %v616
    %v631 = vpack.c.b16 %v619, %v618
    %v632 = vpack.c.b16 %v621, %v620
    %v633 = vpack.c.b16 %v623, %v622
    %v634 = vpack.c.b16 %v625, %v624
    %v635 = vpack.c.b16 %v627, %v626
    %644 = vmatprep.subr.bf16.mxu0 0
    %645 = vmatpush1.bf16.msra.mxu0 %v628
    %646 = vmatprep.subr.bf16.mxu0 0
    %647 = vmatpush1.bf16.msra.mxu0 %v629
    %648 = vmatprep.subr.bf16.mxu0 0
    %649 = vmatpush1.bf16.msra.mxu0 %v630
    %650 = vmatprep.subr.bf16.mxu0 0
    %651 = vmatpush1.bf16.msra.mxu0 %v631
    %652 = vmatprep.subr.bf16.mxu0 0
    %653 = vmatpush1.bf16.msra.mxu0 %v632
    %654 = vmatprep.subr.bf16.mxu0 0
    %655 = vmatpush1.bf16.msra.mxu0 %v633
    %656 = vmatprep.subr.bf16.mxu0 0
    %657 = vmatpush1.bf16.msra.mxu0 %v634
    %658 = vmatprep.subr.bf16.mxu0 0
    %659 = vmatpush1.bf16.msra.mxu0 %v635
    %660 = vmatprep.subr.bf16.mxu0 0
    %661 = vmatpush1.bf16.msra.mxu0 0
    %662 = vmatprep.subr.bf16.mxu0 0
    %663 = vmatpush1.bf16.msra.mxu0 0
    %664 = vmatprep.subr.bf16.mxu0 0
    %665 = vmatpush1.bf16.msra.mxu0 0
    %666 = vmatprep.subr.bf16.mxu0 0
    %667 = vmatpush1.bf16.msra.mxu0 0
    %668 = vmatprep.subr.bf16.mxu0 0
    %669 = vmatpush1.bf16.msra.mxu0 0
    %670 = vmatprep.subr.bf16.mxu0 0
    %671 = vmatpush1.bf16.msra.mxu0 0
    %672 = vmatprep.subr.bf16.mxu0 0
    %673 = vmatpush1.bf16.msra.mxu0 0
    %674 = vmatprep.subr.bf16.mxu0 0
    %675 = vmatpush1.bf16.msra.mxu0 0
    %676 = vmatprep.mubr.bf16.mxu0 0
    %677 = vmatmul.mubr.bf16.gmra.mrb[0].mxu0 0
    %v678 = vpop.f32.mrb[0].mxu0
    %v679 = vadd.f32 0.0, %v678
    %v680 = vpop.f32.mrb[0].mxu0
    %v681 = vpop.f32.mrb[0].mxu0
    %v682 = vadd.f32 0.0, %v681
    %v683 = vpop.f32.mrb[0].mxu0
    %684 = vdwg.mxu0
    %v685 = vadd.f32 %v588, %v679
    %v686 = vadd.f32 %v592, %v682
    %v687 = vxor.u32 %v685, 2147483648
    %v688 = vxor.u32 %v686, 2147483648
    %v689 = vmul.f32 %v687, 1.442695
    %v690 = vpow.pop %v689
    %v691 = vmul.f32 %v688, 1.442695
    %v692 = vpow.pop %v691
    %v693 = vadd.f32 %v690, 1.0
    %v694 = vadd.f32 %v692, 1.0
    %v695 = vrcp.pop %v693
    %v696 = vmul.f32 1.0, %v695
    %v697 = vrcp.pop %v694
    %v698 = vmul.f32 1.0, %v697
    %v699 = vunpack.c.h.b16 %v553
    %v700 = vunpack.c.h.b16 %v555
    %v701 = vunpack.c.h.b16 %v557
    %v702 = vunpack.c.h.b16 %v559
    %v703 = vunpack.c.h.b16 %v561
    %v704 = vunpack.c.h.b16 %v563
    %v705 = vunpack.c.h.b16 %v565
    %v706 = vunpack.c.h.b16 %v567
    %v707 = vunpack.c.h.b16 %v569
    %v708 = vunpack.c.h.b16 %v571
    %v709 = vunpack.c.h.b16 %v573
    %v710 = vunpack.c.h.b16 %v575
    %v711 = vunpack.c.h.b16 %v577
    %v712 = vunpack.c.h.b16 %v579
    %v713 = vunpack.c.h.b16 %v581
    %v714 = vunpack.c.h.b16 %v583
    %v715 = vpack.c.b16 %v700, %v699
    %v716 = vpack.c.b16 %v702, %v701
    %v717 = vpack.c.b16 %v704, %v703
    %v718 = vpack.c.b16 %v706, %v705
    %v719 = vpack.c.b16 %v708, %v707
    %v720 = vpack.c.b16 %v710, %v709
    %v721 = vpack.c.b16 %v712, %v711
    %v722 = vpack.c.b16 %v714, %v713
    %731 = vmatprep.subr.bf16.mxu0 0
    %732 = vmatpush1.bf16.msra.mxu0 %v715
    %733 = vmatprep.subr.bf16.mxu0 0
    %734 = vmatpush1.bf16.msra.mxu0 %v716
    %735 = vmatprep.subr.bf16.mxu0 0
    %736 = vmatpush1.bf16.msra.mxu0 %v717
    %737 = vmatprep.subr.bf16.mxu0 0
    %738 = vmatpush1.bf16.msra.mxu0 %v718
    %739 = vmatprep.subr.bf16.mxu0 0
    %740 = vmatpush1.bf16.msra.mxu0 %v719
    %741 = vmatprep.subr.bf16.mxu0 0
    %742 = vmatpush1.bf16.msra.mxu0 %v720
    %743 = vmatprep.subr.bf16.mxu0 0
    %744 = vmatpush1.bf16.msra.mxu0 %v721
    %745 = vmatprep.subr.bf16.mxu0 0
    %746 = vmatpush1.bf16.msra.mxu0 %v722
    %747 = vmatprep.subr.bf16.mxu0 0
    %748 = vmatpush1.bf16.msra.mxu0 0
    %749 = vmatprep.subr.bf16.mxu0 0
    %750 = vmatpush1.bf16.msra.mxu0 0
    %751 = vmatprep.subr.bf16.mxu0 0
    %752 = vmatpush1.bf16.msra.mxu0 0
    %753 = vmatprep.subr.bf16.mxu0 0
    %754 = vmatpush1.bf16.msra.mxu0 0
    %755 = vmatprep.subr.bf16.mxu0 0
    %756 = vmatpush1.bf16.msra.mxu0 0
    %757 = vmatprep.subr.bf16.mxu0 0
    %758 = vmatpush1.bf16.msra.mxu0 0
    %759 = vmatprep.subr.bf16.mxu0 0
    %760 = vmatpush1.bf16.msra.mxu0 0
    %761 = vmatprep.subr.bf16.mxu0 0
    %762 = vmatpush1.bf16.msra.mxu0 0
    %763 = vmatprep.mubr.bf16.mxu0 0
    %764 = vmatmul.mubr.bf16.gmra.mrb[0].mxu0 0
    %v765 = vpop.f32.mrb[0].mxu0
    %v766 = vadd.f32 0.0, %v765
    %v767 = vpop.f32.mrb[0].mxu0
    %v768 = vpop.f32.mrb[0].mxu0
    %v769 = vadd.f32 0.0, %v768
    %v770 = vpop.f32.mrb[0].mxu0
    %771 = vdwg.mxu0
    %v772 = vadd.f32 %v589, %v766
    %v773 = vadd.f32 %v593, %v769
    %v774 = vxor.u32 %v772, 2147483648
    %v775 = vxor.u32 %v773, 2147483648
    %v776 = vmul.f32 %v774, 1.442695
    %v777 = vpow.pop %v776
    %v778 = vmul.f32 %v775, 1.442695
    %v779 = vpow.pop %v778
    %v780 = vadd.f32 %v777, 1.0
    %v781 = vadd.f32 %v779, 1.0
    %v782 = vrcp.pop %v780
    %v783 = vmul.f32 1.0, %v782
    %v784 = vrcp.pop %v781
    %v785 = vmul.f32 1.0, %v784
    %v802 = vunpack.c.l.b16 %v554
    %v803 = vunpack.c.l.b16 %v556
    %v804 = vunpack.c.l.b16 %v558
    %v805 = vunpack.c.l.b16 %v560
    %v806 = vunpack.c.l.b16 %v562
    %v807 = vunpack.c.l.b16 %v564
    %v808 = vunpack.c.l.b16 %v566
    %v809 = vunpack.c.l.b16 %v568
    %v810 = vunpack.c.l.b16 %v570
    %v811 = vunpack.c.l.b16 %v572
    %v812 = vunpack.c.l.b16 %v574
    %v813 = vunpack.c.l.b16 %v576
    %v814 = vunpack.c.l.b16 %v578
    %v815 = vunpack.c.l.b16 %v580
    %v816 = vunpack.c.l.b16 %v582
    %v817 = vunpack.c.l.b16 %v584
    %v818 = vpack.c.b16 %v803, %v802
    %v819 = vpack.c.b16 %v805, %v804
    %v820 = vpack.c.b16 %v807, %v806
    %v821 = vpack.c.b16 %v809, %v808
    %v822 = vpack.c.b16 %v811, %v810
    %v823 = vpack.c.b16 %v813, %v812
    %v824 = vpack.c.b16 %v815, %v814
    %v825 = vpack.c.b16 %v817, %v816
    %834 = vmatprep.subr.bf16.mxu0 0
    %835 = vmatpush1.bf16.msra.mxu0 %v818
    %836 = vmatprep.subr.bf16.mxu0 0
    %837 = vmatpush1.bf16.msra.mxu0 %v819
    %838 = vmatprep.subr.bf16.mxu0 0
    %839 = vmatpush1.bf16.msra.mxu0 %v820
    %840 = vmatprep.subr.bf16.mxu0 0
    %841 = vmatpush1.bf16.msra.mxu0 %v821
    %842 = vmatprep.subr.bf16.mxu0 0
    %843 = vmatpush1.bf16.msra.mxu0 %v822
    %844 = vmatprep.subr.bf16.mxu0 0
    %845 = vmatpush1.bf16.msra.mxu0 %v823
    %846 = vmatprep.subr.bf16.mxu0 0
    %847 = vmatpush1.bf16.msra.mxu0 %v824
    %848 = vmatprep.subr.bf16.mxu0 0
    %849 = vmatpush1.bf16.msra.mxu0 %v825
    %850 = vmatprep.subr.bf16.mxu0 0
    %851 = vmatpush1.bf16.msra.mxu0 0
    %852 = vmatprep.subr.bf16.mxu0 0
    %853 = vmatpush1.bf16.msra.mxu0 0
    %854 = vmatprep.subr.bf16.mxu0 0
    %855 = vmatpush1.bf16.msra.mxu0 0
    %856 = vmatprep.subr.bf16.mxu0 0
    %857 = vmatpush1.bf16.msra.mxu0 0
    %858 = vmatprep.subr.bf16.mxu0 0
    %859 = vmatpush1.bf16.msra.mxu0 0
    %860 = vmatprep.subr.bf16.mxu0 0
    %861 = vmatpush1.bf16.msra.mxu0 0
    %862 = vmatprep.subr.bf16.mxu0 0
    %863 = vmatpush1.bf16.msra.mxu0 0
    %864 = vmatprep.subr.bf16.mxu0 0
    %865 = vmatpush1.bf16.msra.mxu0 0
    %866 = vmatprep.mubr.bf16.mxu0 0
    %867 = vmatmul.mubr.bf16.gmra.mrb[0].mxu0 0
    %v868 = vpop.f32.mrb[0].mxu0
    %v869 = vadd.f32 0.0, %v868
    %v870 = vpop.f32.mrb[0].mxu0
    %v871 = vpop.f32.mrb[0].mxu0
    %v872 = vadd.f32 0.0, %v871
    %v873 = vpop.f32.mrb[0].mxu0
    %874 = vdwg.mxu0
    %v875 = vadd.f32 %v590, %v869
    %v876 = vadd.f32 %v594, %v872
    %v877 = vtanh.pop %v875
    %v878 = vtanh.pop %v876
    %v879 = vunpack.c.h.b16 %v554
    %v880 = vunpack.c.h.b16 %v556
    %v881 = vunpack.c.h.b16 %v558
    %v882 = vunpack.c.h.b16 %v560
    %v883 = vunpack.c.h.b16 %v562
    %v884 = vunpack.c.h.b16 %v564
    %v885 = vunpack.c.h.b16 %v566
    %v886 = vunpack.c.h.b16 %v568
    %v887 = vunpack.c.h.b16 %v570
    %v888 = vunpack.c.h.b16 %v572
    %v889 = vunpack.c.h.b16 %v574
    %v890 = vunpack.c.h.b16 %v576
    %v891 = vunpack.c.h.b16 %v578
    %v892 = vunpack.c.h.b16 %v580
    %v893 = vunpack.c.h.b16 %v582
    %v894 = vunpack.c.h.b16 %v584
    %v895 = vpack.c.b16 %v880, %v879
    %v896 = vpack.c.b16 %v882, %v881
    %v897 = vpack.c.b16 %v884, %v883
    %v898 = vpack.c.b16 %v886, %v885
    %v899 = vpack.c.b16 %v888, %v887
    %v900 = vpack.c.b16 %v890, %v889
    %v901 = vpack.c.b16 %v892, %v891
    %v902 = vpack.c.b16 %v894, %v893
    %911 = vmatprep.subr.bf16.mxu0 0
    %912 = vmatpush1.bf16.msra.mxu0 %v895
    %913 = vmatprep.subr.bf16.mxu0 0
    %914 = vmatpush1.bf16.msra.mxu0 %v896
    %915 = vmatprep.subr.bf16.mxu0 0
    %916 = vmatpush1.bf16.msra.mxu0 %v897
    %917 = vmatprep.subr.bf16.mxu0 0
    %918 = vmatpush1.bf16.msra.mxu0 %v898
    %919 = vmatprep.subr.bf16.mxu0 0
    %920 = vmatpush1.bf16.msra.mxu0 %v899
    %921 = vmatprep.subr.bf16.mxu0 0
    %922 = vmatpush1.bf16.msra.mxu0 %v900
    %923 = vmatprep.subr.bf16.mxu0 0
    %924 = vmatpush1.bf16.msra.mxu0 %v901
    %925 = vmatprep.subr.bf16.mxu0 0
    %926 = vmatpush1.bf16.msra.mxu0 %v902
    %927 = vmatprep.subr.bf16.mxu0 0
    %928 = vmatpush1.bf16.msra.mxu0 0
    %929 = vmatprep.subr.bf16.mxu0 0
    %930 = vmatpush1.bf16.msra.mxu0 0
    %931 = vmatprep.subr.bf16.mxu0 0
    %932 = vmatpush1.bf16.msra.mxu0 0
    %933 = vmatprep.subr.bf16.mxu0 0
    %934 = vmatpush1.bf16.msra.mxu0 0
    %935 = vmatprep.subr.bf16.mxu0 0
    %936 = vmatpush1.bf16.msra.mxu0 0
    %937 = vmatprep.subr.bf16.mxu0 0
    %938 = vmatpush1.bf16.msra.mxu0 0
    %939 = vmatprep.subr.bf16.mxu0 0
    %940 = vmatpush1.bf16.msra.mxu0 0
    %941 = vmatprep.subr.bf16.mxu0 0
    %942 = vmatpush1.bf16.msra.mxu0 0
    %943 = vmatprep.mubr.bf16.mxu0 0
    %944 = vmatmul.mubr.bf16.gmra.mrb[0].mxu0 0
    %v945 = vpop.f32.mrb[0].mxu0
    %v946 = vadd.f32 0.0, %v945
    %v947 = vpop.f32.mrb[0].mxu0
    %v948 = vpop.f32.mrb[0].mxu0
    %v949 = vadd.f32 0.0, %v948
    %v950 = vpop.f32.mrb[0].mxu0
    %951 = vdwg.mxu0
    %v952 = vadd.f32 %v591, %v946
    %v953 = vadd.f32 %v595, %v949
    %v954 = vxor.u32 %v952, 2147483648
    %v955 = vxor.u32 %v953, 2147483648
    %v956 = vmul.f32 %v954, 1.442695
    %v957 = vpow.pop %v956
    %v958 = vmul.f32 %v955, 1.442695
    %v959 = vpow.pop %v958
    %v960 = vadd.f32 %v957, 1.0
    %v961 = vadd.f32 %v959, 1.0
    %v962 = vrcp.pop %v960
    %v963 = vmul.f32 1.0, %v962
    %v964 = vrcp.pop %v961
    %v965 = vmul.f32 1.0, %v964
    %v966 = vmul.f32 %v783, 0.0
    %v967 = vmul.f32 %v785, 0.0
    %v968 = vmul.f32 %v696, %v877
    %v969 = vmul.f32 %v698, %v878
    %v970 = vadd.f32 %v966, %v968
    %v971 = vadd.f32 %v967, %v969
    %v972 = vtanh.pop %v970
    %v973 = vtanh.pop %v971
    %v974 = vmul.f32 %v963, %v972
    %v975 = vmul.f32 %v965, %v973
    %v976 = vpack.c.bf16 %v975, %v974
    %s977 = smul.u32 2, 4
    %s978 = smul.addr %s977, 8
    %s979 = scalar_lea.vmem [#allocation2], %s978
    %v980 = vld [vmem:[%s979] sm:$0xff]
    %v981 = vld [vmem:[%s979 + $0x8] sm:$0xff]
    %v982 = vld [vmem:[%s979 + $0x10] sm:$0xff]
    %v983 = vld [vmem:[%s979 + $0x18] sm:$0xff]
    %v984 = vld [vmem:[%s979 + $0x20] sm:$0xff]
    %v985 = vld [vmem:[%s979 + $0x28] sm:$0xff]
    %v986 = vld [vmem:[%s979 + $0x30] sm:$0xff]
    %v987 = vld [vmem:[%s979 + $0x38] sm:$0xff]
    %988 = vmatprep.subr.bf16.mxu0 0
    %989 = vmatpush1.bf16.msra.mxu0 %v628
    %990 = vmatprep.subr.bf16.mxu0 0
    %991 = vmatpush1.bf16.msra.mxu0 %v629
    %992 = vmatprep.subr.bf16.mxu0 0
    %993 = vmatpush1.bf16.msra.mxu0 %v630
    %994 = vmatprep.subr.bf16.mxu0 0
    %995 = vmatpush1.bf16.msra.mxu0 %v631
    %996 = vmatprep.subr.bf16.mxu0 0
    %997 = vmatpush1.bf16.msra.mxu0 %v632
    %998 = vmatprep.subr.bf16.mxu0 0
    %999 = vmatpush1.bf16.msra.mxu0 %v633
    %1000 = vmatprep.subr.bf16.mxu0 0
    %1001 = vmatpush1.bf16.msra.mxu0 %v634
    %1002 = vmatprep.subr.bf16.mxu0 0
    %1003 = vmatpush1.bf16.msra.mxu0 %v635
    %1004 = vmatprep.subr.bf16.mxu0 0
    %1005 = vmatpush1.bf16.msra.mxu0 0
    %1006 = vmatprep.subr.bf16.mxu0 0
    %1007 = vmatpush1.bf16.msra.mxu0 0
    %1008 = vmatprep.subr.bf16.mxu0 0
    %1009 = vmatpush1.bf16.msra.mxu0 0
    %1010 = vmatprep.subr.bf16.mxu0 0
    %1011 = vmatpush1.bf16.msra.mxu0 0
    %1012 = vmatprep.subr.bf16.mxu0 0
    %1013 = vmatpush1.bf16.msra.mxu0 0
    %1014 = vmatprep.subr.bf16.mxu0 0
    %1015 = vmatpush1.bf16.msra.mxu0 0
    %1016 = vmatprep.subr.bf16.mxu0 0
    %1017 = vmatpush1.bf16.msra.mxu0 0
    %1018 = vmatprep.subr.bf16.mxu0 0
    %1019 = vmatpush1.bf16.msra.mxu0 0
    %1020 = vmatprep.mubr.bf16.mxu0 0
    %1021 = vmatmul.mubr.bf16.gmra.mrb[0].mxu0 %v976
    %v1022 = vpop.f32.mrb[0].mxu0
    %v1023 = vadd.f32 0.0, %v1022
    %v1024 = vpop.f32.mrb[0].mxu0
    %v1025 = vpop.f32.mrb[0].mxu0
    %v1026 = vadd.f32 0.0, %v1025
    %v1027 = vpop.f32.mrb[0].mxu0
    %1028 = vdwg.mxu0
    %v1029 = vadd.f32 %v980, %v1023
    %v1030 = vadd.f32 %v984, %v1026
    %v1031 = vxor.u32 %v1029, 2147483648
    %v1032 = vxor.u32 %v1030, 2147483648
    %v1033 = vmul.f32 %v1031, 1.442695
    %v1034 = vpow.pop %v1033
    %v1035 = vmul.f32 %v1032, 1.442695
    %v1036 = vpow.pop %v1035
    %v1037 = vadd.f32 %v1034, 1.0
    %v1038 = vadd.f32 %v1036, 1.0
    %v1039 = vrcp.pop %v1037
    %v1040 = vmul.f32 1.0, %v1039
    %v1041 = vrcp.pop %v1038
    %v1042 = vmul.f32 1.0, %v1041
    %1043 = vmatprep.subr.bf16.mxu0 0
    %1044 = vmatpush1.bf16.msra.mxu0 %v715
    %1045 = vmatprep.subr.bf16.mxu0 0
    %1046 = vmatpush1.bf16.msra.mxu0 %v716
    %1047 = vmatprep.subr.bf16.mxu0 0
    %1048 = vmatpush1.bf16.msra.mxu0 %v717
    %1049 = vmatprep.subr.bf16.mxu0 0
    %1050 = vmatpush1.bf16.msra.mxu0 %v718
    %1051 = vmatprep.subr.bf16.mxu0 0
    %1052 = vmatpush1.bf16.msra.mxu0 %v719
    %1053 = vmatprep.subr.bf16.mxu0 0
    %1054 = vmatpush1.bf16.msra.mxu0 %v720
    %1055 = vmatprep.subr.bf16.mxu0 0
    %1056 = vmatpush1.bf16.msra.mxu0 %v721
    %1057 = vmatprep.subr.bf16.mxu0 0
    %1058 = vmatpush1.bf16.msra.mxu0 %v722
    %1059 = vmatprep.subr.bf16.mxu0 0
    %1060 = vmatpush1.bf16.msra.mxu0 0
    %1061 = vmatprep.subr.bf16.mxu0 0
    %1062 = vmatpush1.bf16.msra.mxu0 0
    %1063 = vmatprep.subr.bf16.mxu0 0
    %1064 = vmatpush1.bf16.msra.mxu0 0
    %1065 = vmatprep.subr.bf16.mxu0 0
    %1066 = vmatpush1.bf16.msra.mxu0 0
    %1067 = vmatprep.subr.bf16.mxu0 0
    %1068 = vmatpush1.bf16.msra.mxu0 0
    %1069 = vmatprep.subr.bf16.mxu0 0
    %1070 = vmatpush1.bf16.msra.mxu0 0
    %1071 = vmatprep.subr.bf16.mxu0 0
    %1072 = vmatpush1.bf16.msra.mxu0 0
    %1073 = vmatprep.subr.bf16.mxu0 0
    %1074 = vmatpush1.bf16.msra.mxu0 0
    %1075 = vmatprep.mubr.bf16.mxu0 0
    %1076 = vmatmul.mubr.bf16.gmra.mrb[0].mxu0 %v976
    %v1077 = vpop.f32.mrb[0].mxu0
    %v1078 = vadd.f32 0.0, %v1077
    %v1079 = vpop.f32.mrb[0].mxu0
    %v1080 = vpop.f32.mrb[0].mxu0
    %v1081 = vadd.f32 0.0, %v1080
    %v1082 = vpop.f32.mrb[0].mxu0
    %1083 = vdwg.mxu0
    %v1084 = vadd.f32 %v981, %v1078
    %v1085 = vadd.f32 %v985, %v1081
    %v1086 = vxor.u32 %v1084, 2147483648
    %v1087 = vxor.u32 %v1085, 2147483648
    %v1088 = vmul.f32 %v1086, 1.442695
    %v1089 = vpow.pop %v1088
    %v1090 = vmul.f32 %v1087, 1.442695
    %v1091 = vpow.pop %v1090
    %v1092 = vadd.f32 %v1089, 1.0
    %v1093 = vadd.f32 %v1091, 1.0
    %v1094 = vrcp.pop %v1092
    %v1095 = vmul.f32 1.0, %v1094
    %v1096 = vrcp.pop %v1093
    %v1097 = vmul.f32 1.0, %v1096
    %1098 = vmatprep.subr.bf16.mxu0 0
    %1099 = vmatpush1.bf16.msra.mxu0 %v818
    %1100 = vmatprep.subr.bf16.mxu0 0
    %1101 = vmatpush1.bf16.msra.mxu0 %v819
    %1102 = vmatprep.subr.bf16.mxu0 0
    %1103 = vmatpush1.bf16.msra.mxu0 %v820
    %1104 = vmatprep.subr.bf16.mxu0 0
    %1105 = vmatpush1.bf16.msra.mxu0 %v821
    %1106 = vmatprep.subr.bf16.mxu0 0
    %1107 = vmatpush1.bf16.msra.mxu0 %v822
    %1108 = vmatprep.subr.bf16.mxu0 0
    %1109 = vmatpush1.bf16.msra.mxu0 %v823
    %1110 = vmatprep.subr.bf16.mxu0 0
    %1111 = vmatpush1.bf16.msra.mxu0 %v824
    %1112 = vmatprep.subr.bf16.mxu0 0
    %1113 = vmatpush1.bf16.msra.mxu0 %v825
    %1114 = vmatprep.subr.bf16.mxu0 0
    %1115 = vmatpush1.bf16.msra.mxu0 0
    %1116 = vmatprep.subr.bf16.mxu0 0
    %1117 = vmatpush1.bf16.msra.mxu0 0
    %1118 = vmatprep.subr.bf16.mxu0 0
    %1119 = vmatpush1.bf16.msra.mxu0 0
    %1120 = vmatprep.subr.bf16.mxu0 0
    %1121 = vmatpush1.bf16.msra.mxu0 0
    %1122 = vmatprep.subr.bf16.mxu0 0
    %1123 = vmatpush1.bf16.msra.mxu0 0
    %1124 = vmatprep.subr.bf16.mxu0 0
    %1125 = vmatpush1.bf16.msra.mxu0 0
    %1126 = vmatprep.subr.bf16.mxu0 0
    %1127 = vmatpush1.bf16.msra.mxu0 0
    %1128 = vmatprep.subr.bf16.mxu0 0
    %1129 = vmatpush1.bf16.msra.mxu0 0
    %1130 = vmatprep.mubr.bf16.mxu0 0
    %1131 = vmatmul.mubr.bf16.gmra.mrb[0].mxu0 %v976
    %v1132 = vpop.f32.mrb[0].mxu0
    %v1133 = vadd.f32 0.0, %v1132
    %v1134 = vpop.f32.mrb[0].mxu0
    %v1135 = vpop.f32.mrb[0].mxu0
    %v1136 = vadd.f32 0.0, %v1135
    %v1137 = vpop.f32.mrb[0].mxu0
    %1138 = vdwg.mxu0
    %v1139 = vadd.f32 %v982, %v1133
    %v1140 = vadd.f32 %v986, %v1136
    %v1141 = vtanh.pop %v1139
    %v1142 = vtanh.pop %v1140
    %1143 = vmatprep.subr.bf16.mxu0 0
    %1144 = vmatpush1.bf16.msra.mxu0 %v895
    %1145 = vmatprep.subr.bf16.mxu0 0
    %1146 = vmatpush1.bf16.msra.mxu0 %v896
    %1147 = vmatprep.subr.bf16.mxu0 0
    %1148 = vmatpush1.bf16.msra.mxu0 %v897
    %1149 = vmatprep.subr.bf16.mxu0 0
    %1150 = vmatpush1.bf16.msra.mxu0 %v898
    %1151 = vmatprep.subr.bf16.mxu0 0
    %1152 = vmatpush1.bf16.msra.mxu0 %v899
    %1153 = vmatprep.subr.bf16.mxu0 0
    %1154 = vmatpush1.bf16.msra.mxu0 %v900
    %1155 = vmatprep.subr.bf16.mxu0 0
    %1156 = vmatpush1.bf16.msra.mxu0 %v901
    %1157 = vmatprep.subr.bf16.mxu0 0
    %1158 = vmatpush1.bf16.msra.mxu0 %v902
    %1159 = vmatprep.subr.bf16.mxu0 0
    %1160 = vmatpush1.bf16.msra.mxu0 0
    %1161 = vmatprep.subr.bf16.mxu0 0
    %1162 = vmatpush1.bf16.msra.mxu0 0
    %1163 = vmatprep.subr.bf16.mxu0 0
    %1164 = vmatpush1.bf16.msra.mxu0 0
    %1165 = vmatprep.subr.bf16.mxu0 0
    %1166 = vmatpush1.bf16.msra.mxu0 0
    %1167 = vmatprep.subr.bf16.mxu0 0
    %1168 = vmatpush1.bf16.msra.mxu0 0
    %1169 = vmatprep.subr.bf16.mxu0 0
    %1170 = vmatpush1.bf16.msra.mxu0 0
    %1171 = vmatprep.subr.bf16.mxu0 0
    %1172 = vmatpush1.bf16.msra.mxu0 0
    %1173 = vmatprep.subr.bf16.mxu0 0
    %1174 = vmatpush1.bf16.msra.mxu0 0
    %1175 = vmatprep.mubr.bf16.mxu0 0
    %1176 = vmatmul.mubr.bf16.gmra.mrb[0].mxu0 %v976
    %v1177 = vpop.f32.mrb[0].mxu0
    %v1178 = vadd.f32 0.0, %v1177
    %v1179 = vpop.f32.mrb[0].mxu0
    %v1180 = vpop.f32.mrb[0].mxu0
    %v1181 = vadd.f32 0.0, %v1180
    %v1182 = vpop.f32.mrb[0].mxu0
    %1183 = vdwg.mxu0
    %v1184 = vadd.f32 %v983, %v1178
    %v1185 = vadd.f32 %v987, %v1181
    %v1186 = vxor.u32 %v1184, 2147483648
    %v1187 = vxor.u32 %v1185, 2147483648
    %v1188 = vmul.f32 %v1186, 1.442695
    %v1189 = vpow.pop %v1188
    %v1190 = vmul.f32 %v1187, 1.442695
    %v1191 = vpow.pop %v1190
    %v1192 = vadd.f32 %v1189, 1.0
    %v1193 = vadd.f32 %v1191, 1.0
    %v1194 = vrcp.pop %v1192
    %v1195 = vmul.f32 1.0, %v1194
    %v1196 = vrcp.pop %v1193
    %v1197 = vmul.f32 1.0, %v1196
    %v1198 = vmul.f32 %v1095, %v970
    %v1199 = vmul.f32 %v1097, %v971
    %v1200 = vmul.f32 %v1040, %v1141
    %v1201 = vmul.f32 %v1042, %v1142
    %v1202 = vadd.f32 %v1198, %v1200
    %v1203 = vadd.f32 %v1199, %v1201
    %v1204 = vtanh.pop %v1202
    %v1205 = vtanh.pop %v1203
    %v1206 = vmul.f32 %v1195, %v1204
    %v1207 = vmul.f32 %v1197, %v1205
    %v1208 = vpack.c.bf16 %v1207, %v1206
    %s1209 = smul.u32 4, 4
    %s1210 = smul.addr %s1209, 8
    %s1211 = scalar_lea.vmem [#allocation2], %s1210
    %v1212 = vld [vmem:[%s1211] sm:$0xff]
    %v1213 = vld [vmem:[%s1211 + $0x8] sm:$0xff]
    %v1214 = vld [vmem:[%s1211 + $0x10] sm:$0xff]
    %v1215 = vld [vmem:[%s1211 + $0x18] sm:$0xff]
    %v1216 = vld [vmem:[%s1211 + $0x20] sm:$0xff]
    %v1217 = vld [vmem:[%s1211 + $0x28] sm:$0xff]
    %v1218 = vld [vmem:[%s1211 + $0x30] sm:$0xff]
    %v1219 = vld [vmem:[%s1211 + $0x38] sm:$0xff]
    %1220 = vmatprep.subr.bf16.mxu0 0
    %1221 = vmatpush1.bf16.msra.mxu0 %v628
    %1222 = vmatprep.subr.bf16.mxu0 0
    %1223 = vmatpush1.bf16.msra.mxu0 %v629
    %1224 = vmatprep.subr.bf16.mxu0 0
    %1225 = vmatpush1.bf16.msra.mxu0 %v630
    %1226 = vmatprep.subr.bf16.mxu0 0
    %1227 = vmatpush1.bf16.msra.mxu0 %v631
    %1228 = vmatprep.subr.bf16.mxu0 0
    %1229 = vmatpush1.bf16.msra.mxu0 %v632
    %1230 = vmatprep.subr.bf16.mxu0 0
    %1231 = vmatpush1.bf16.msra.mxu0 %v633
    %1232 = vmatprep.subr.bf16.mxu0 0
    %1233 = vmatpush1.bf16.msra.mxu0 %v634
    %1234 = vmatprep.subr.bf16.mxu0 0
    %1235 = vmatpush1.bf16.msra.mxu0 %v635
    %1236 = vmatprep.subr.bf16.mxu0 0
    %1237 = vmatpush1.bf16.msra.mxu0 0
    %1238 = vmatprep.subr.bf16.mxu0 0
    %1239 = vmatpush1.bf16.msra.mxu0 0
    %1240 = vmatprep.subr.bf16.mxu0 0
    %1241 = vmatpush1.bf16.msra.mxu0 0
    %1242 = vmatprep.subr.bf16.mxu0 0
    %1243 = vmatpush1.bf16.msra.mxu0 0
    %1244 = vmatprep.subr.bf16.mxu0 0
    %1245 = vmatpush1.bf16.msra.mxu0 0
    %1246 = vmatprep.subr.bf16.mxu0 0
    %1247 = vmatpush1.bf16.msra.mxu0 0
    %1248 = vmatprep.subr.bf16.mxu0 0
    %1249 = vmatpush1.bf16.msra.mxu0 0
    %1250 = vmatprep.subr.bf16.mxu0 0
    %1251 = vmatpush1.bf16.msra.mxu0 0
    %1252 = vmatprep.mubr.bf16.mxu0 0
    %1253 = vmatmul.mubr.bf16.gmra.mrb[0].mxu0 %v1208
    %v1254 = vpop.f32.mrb[0].mxu0
    %v1255 = vadd.f32 0.0, %v1254
    %v1256 = vpop.f32.mrb[0].mxu0
    %v1257 = vpop.f32.mrb[0].mxu0
    %v1258 = vadd.f32 0.0, %v1257
    %v1259 = vpop.f32.mrb[0].mxu0
    %1260 = vdwg.mxu0
    %v1261 = vadd.f32 %v1212, %v1255
    %v1262 = vadd.f32 %v1216, %v1258
    %v1263 = vxor.u32 %v1261, 2147483648
    %v1264 = vxor.u32 %v1262, 2147483648
    %v1265 = vmul.f32 %v1263, 1.442695
    %v1266 = vpow.pop %v1265
    %v1267 = vmul.f32 %v1264, 1.442695
    %v1268 = vpow.pop %v1267
    %v1269 = vadd.f32 %v1266, 1.0
    %v1270 = vadd.f32 %v1268, 1.0
    %v1271 = vrcp.pop %v1269
    %v1272 = vmul.f32 1.0, %v1271
    %v1273 = vrcp.pop %v1270
    %v1274 = vmul.f32 1.0, %v1273
    %1275 = vmatprep.subr.bf16.mxu0 0
    %1276 = vmatpush1.bf16.msra.mxu0 %v715
    %1277 = vmatprep.subr.bf16.mxu0 0
    %1278 = vmatpush1.bf16.msra.mxu0 %v716
    %1279 = vmatprep.subr.bf16.mxu0 0
    %1280 = vmatpush1.bf16.msra.mxu0 %v717
    %1281 = vmatprep.subr.bf16.mxu0 0
    %1282 = vmatpush1.bf16.msra.mxu0 %v718
    %1283 = vmatprep.subr.bf16.mxu0 0
    %1284 = vmatpush1.bf16.msra.mxu0 %v719
    %1285 = vmatprep.subr.bf16.mxu0 0
    %1286 = vmatpush1.bf16.msra.mxu0 %v720
    %1287 = vmatprep.subr.bf16.mxu0 0
    %1288 = vmatpush1.bf16.msra.mxu0 %v721
    %1289 = vmatprep.subr.bf16.mxu0 0
    %1290 = vmatpush1.bf16.msra.mxu0 %v722
    %1291 = vmatprep.subr.bf16.mxu0 0
    %1292 = vmatpush1.bf16.msra.mxu0 0
    %1293 = vmatprep.subr.bf16.mxu0 0
    %1294 = vmatpush1.bf16.msra.mxu0 0
    %1295 = vmatprep.subr.bf16.mxu0 0
    %1296 = vmatpush1.bf16.msra.mxu0 0
    %1297 = vmatprep.subr.bf16.mxu0 0
    %1298 = vmatpush1.bf16.msra.mxu0 0
    %1299 = vmatprep.subr.bf16.mxu0 0
    %1300 = vmatpush1.bf16.msra.mxu0 0
    %1301 = vmatprep.subr.bf16.mxu0 0
    %1302 = vmatpush1.bf16.msra.mxu0 0
    %1303 = vmatprep.subr.bf16.mxu0 0
    %1304 = vmatpush1.bf16.msra.mxu0 0
    %1305 = vmatprep.subr.bf16.mxu0 0
    %1306 = vmatpush1.bf16.msra.mxu0 0
    %1307 = vmatprep.mubr.bf16.mxu0 0
    %1308 = vmatmul.mubr.bf16.gmra.mrb[0].mxu0 %v1208
    %v1309 = vpop.f32.mrb[0].mxu0
    %v1310 = vadd.f32 0.0, %v1309
    %v1311 = vpop.f32.mrb[0].mxu0
    %v1312 = vpop.f32.mrb[0].mxu0
    %v1313 = vadd.f32 0.0, %v1312
    %v1314 = vpop.f32.mrb[0].mxu0
    %1315 = vdwg.mxu0
    %v1316 = vadd.f32 %v1213, %v1310
    %v1317 = vadd.f32 %v1217, %v1313
    %v1318 = vxor.u32 %v1316, 2147483648
    %v1319 = vxor.u32 %v1317, 2147483648
    %v1320 = vmul.f32 %v1318, 1.442695
    %v1321 = vpow.pop %v1320
    %v1322 = vmul.f32 %v1319, 1.442695
    %v1323 = vpow.pop %v1322
    %v1324 = vadd.f32 %v1321, 1.0
    %v1325 = vadd.f32 %v1323, 1.0
    %v1326 = vrcp.pop %v1324
    %v1327 = vmul.f32 1.0, %v1326
    %v1328 = vrcp.pop %v1325
    %v1329 = vmul.f32 1.0, %v1328
    %1330 = vmatprep.subr.bf16.mxu0 0
    %1331 = vmatpush1.bf16.msra.mxu0 %v818
    %1332 = vmatprep.subr.bf16.mxu0 0
    %1333 = vmatpush1.bf16.msra.mxu0 %v819
    %1334 = vmatprep.subr.bf16.mxu0 0
    %1335 = vmatpush1.bf16.msra.mxu0 %v820
    %1336 = vmatprep.subr.bf16.mxu0 0
    %1337 = vmatpush1.bf16.msra.mxu0 %v821
    %1338 = vmatprep.subr.bf16.mxu0 0
    %1339 = vmatpush1.bf16.msra.mxu0 %v822
    %1340 = vmatprep.subr.bf16.mxu0 0
    %1341 = vmatpush1.bf16.msra.mxu0 %v823
    %1342 = vmatprep.subr.bf16.mxu0 0
    %1343 = vmatpush1.bf16.msra.mxu0 %v824
    %1344 = vmatprep.subr.bf16.mxu0 0
    %1345 = vmatpush1.bf16.msra.mxu0 %v825
    %1346 = vmatprep.subr.bf16.mxu0 0
    %1347 = vmatpush1.bf16.msra.mxu0 0
    %1348 = vmatprep.subr.bf16.mxu0 0
    %1349 = vmatpush1.bf16.msra.mxu0 0
    %1350 = vmatprep.subr.bf16.mxu0 0
    %1351 = vmatpush1.bf16.msra.mxu0 0
    %1352 = vmatprep.subr.bf16.mxu0 0
    %1353 = vmatpush1.bf16.msra.mxu0 0
    %1354 = vmatprep.subr.bf16.mxu0 0
    %1355 = vmatpush1.bf16.msra.mxu0 0
    %1356 = vmatprep.subr.bf16.mxu0 0
    %1357 = vmatpush1.bf16.msra.mxu0 0
    %1358 = vmatprep.subr.bf16.mxu0 0
    %1359 = vmatpush1.bf16.msra.mxu0 0
    %1360 = vmatprep.subr.bf16.mxu0 0
    %1361 = vmatpush1.bf16.msra.mxu0 0
    %1362 = vmatprep.mubr.bf16.mxu0 0
    %1363 = vmatmul.mubr.bf16.gmra.mrb[0].mxu0 %v1208
    %v1364 = vpop.f32.mrb[0].mxu0
    %v1365 = vadd.f32 0.0, %v1364
    %v1366 = vpop.f32.mrb[0].mxu0
    %v1367 = vpop.f32.mrb[0].mxu0
    %v1368 = vadd.f32 0.0, %v1367
    %v1369 = vpop.f32.mrb[0].mxu0
    %1370 = vdwg.mxu0
    %v1371 = vadd.f32 %v1214, %v1365
    %v1372 = vadd.f32 %v1218, %v1368
    %v1373 = vtanh.pop %v1371
    %v1374 = vtanh.pop %v1372
    %1375 = vmatprep.subr.bf16.mxu0 0
    %1376 = vmatpush1.bf16.msra.mxu0 %v895
    %1377 = vmatprep.subr.bf16.mxu0 0
    %1378 = vmatpush1.bf16.msra.mxu0 %v896
    %1379 = vmatprep.subr.bf16.mxu0 0
    %1380 = vmatpush1.bf16.msra.mxu0 %v897
    %1381 = vmatprep.subr.bf16.mxu0 0
    %1382 = vmatpush1.bf16.msra.mxu0 %v898
    %1383 = vmatprep.subr.bf16.mxu0 0
    %1384 = vmatpush1.bf16.msra.mxu0 %v899
    %1385 = vmatprep.subr.bf16.mxu0 0
    %1386 = vmatpush1.bf16.msra.mxu0 %v900
    %1387 = vmatprep.subr.bf16.mxu0 0
    %1388 = vmatpush1.bf16.msra.mxu0 %v901
    %1389 = vmatprep.subr.bf16.mxu0 0
    %1390 = vmatpush1.bf16.msra.mxu0 %v902
    %1391 = vmatprep.subr.bf16.mxu0 0
    %1392 = vmatpush1.bf16.msra.mxu0 0
    %1393 = vmatprep.subr.bf16.mxu0 0
    %1394 = vmatpush1.bf16.msra.mxu0 0
    %1395 = vmatprep.subr.bf16.mxu0 0
    %1396 = vmatpush1.bf16.msra.mxu0 0
    %1397 = vmatprep.subr.bf16.mxu0 0
    %1398 = vmatpush1.bf16.msra.mxu0 0
    %1399 = vmatprep.subr.bf16.mxu0 0
    %1400 = vmatpush1.bf16.msra.mxu0 0
    %1401 = vmatprep.subr.bf16.mxu0 0
    %1402 = vmatpush1.bf16.msra.mxu0 0
    %1403 = vmatprep.subr.bf16.mxu0 0
    %1404 = vmatpush1.bf16.msra.mxu0 0
    %1405 = vmatprep.subr.bf16.mxu0 0
    %1406 = vmatpush1.bf16.msra.mxu0 0
    %1407 = vmatprep.mubr.bf16.mxu0 0
    %1408 = vmatmul.mubr.bf16.gmra.mrb[0].mxu0 %v1208
    %v1409 = vpop.f32.mrb[0].mxu0
    %v1410 = vadd.f32 0.0, %v1409
    %v1411 = vpop.f32.mrb[0].mxu0
    %v1412 = vpop.f32.mrb[0].mxu0
    %v1413 = vadd.f32 0.0, %v1412
    %v1414 = vpop.f32.mrb[0].mxu0
    %1415 = vdwg.mxu0
    %v1416 = vadd.f32 %v1215, %v1410
    %v1417 = vadd.f32 %v1219, %v1413
    %v1418 = vxor.u32 %v1416, 2147483648
    %v1419 = vxor.u32 %v1417, 2147483648
    %v1420 = vmul.f32 %v1418, 1.442695
    %v1421 = vpow.pop %v1420
    %v1422 = vmul.f32 %v1419, 1.442695
    %v1423 = vpow.pop %v1422
    %v1424 = vadd.f32 %v1421, 1.0
    %v1425 = vadd.f32 %v1423, 1.0
    %v1426 = vrcp.pop %v1424
    %v1427 = vmul.f32 1.0, %v1426
    %v1428 = vrcp.pop %v1425
    %v1429 = vmul.f32 1.0, %v1428
    %v1430 = vmul.f32 %v1327, %v1202
    %v1431 = vmul.f32 %v1329, %v1203
    %v1432 = vmul.f32 %v1272, %v1373
    %v1433 = vmul.f32 %v1274, %v1374
    %v1434 = vadd.f32 %v1430, %v1432
    %v1435 = vadd.f32 %v1431, %v1433
    %v1436 = vtanh.pop %v1434
    %v1437 = vtanh.pop %v1435
    %v1438 = vmul.f32 %v1427, %v1436
    %v1439 = vmul.f32 %v1429, %v1437
    %v1440 = vpack.c.bf16 %v1439, %v1438
    %s1441 = smul.u32 6, 4
    %s1442 = smul.addr %s1441, 8
    %s1443 = scalar_lea.vmem [#allocation2], %s1442
    %v1444 = vld [vmem:[%s1443] sm:$0xff]
    %v1445 = vld [vmem:[%s1443 + $0x8] sm:$0xff]
    %v1446 = vld [vmem:[%s1443 + $0x10] sm:$0xff]
    %v1447 = vld [vmem:[%s1443 + $0x18] sm:$0xff]
    %v1448 = vld [vmem:[%s1443 + $0x20] sm:$0xff]
    %v1449 = vld [vmem:[%s1443 + $0x28] sm:$0xff]
    %v1450 = vld [vmem:[%s1443 + $0x30] sm:$0xff]
    %v1451 = vld [vmem:[%s1443 + $0x38] sm:$0xff]
    %1452 = vmatprep.subr.bf16.mxu0 0
    %1453 = vmatpush1.bf16.msra.mxu0 %v628
    %1454 = vmatprep.subr.bf16.mxu0 0
    %1455 = vmatpush1.bf16.msra.mxu0 %v629
    %1456 = vmatprep.subr.bf16.mxu0 0
    %1457 = vmatpush1.bf16.msra.mxu0 %v630
    %1458 = vmatprep.subr.bf16.mxu0 0
    %1459 = vmatpush1.bf16.msra.mxu0 %v631
    %1460 = vmatprep.subr.bf16.mxu0 0
    %1461 = vmatpush1.bf16.msra.mxu0 %v632
    %1462 = vmatprep.subr.bf16.mxu0 0
    %1463 = vmatpush1.bf16.msra.mxu0 %v633
    %1464 = vmatprep.subr.bf16.mxu0 0
    %1465 = vmatpush1.bf16.msra.mxu0 %v634
    %1466 = vmatprep.subr.bf16.mxu0 0
    %1467 = vmatpush1.bf16.msra.mxu0 %v635
    %1468 = vmatprep.subr.bf16.mxu0 0
    %1469 = vmatpush1.bf16.msra.mxu0 0
    %1470 = vmatprep.subr.bf16.mxu0 0
    %1471 = vmatpush1.bf16.msra.mxu0 0
    %1472 = vmatprep.subr.bf16.mxu0 0
    %1473 = vmatpush1.bf16.msra.mxu0 0
    %1474 = vmatprep.subr.bf16.mxu0 0
    %1475 = vmatpush1.bf16.msra.mxu0 0
    %1476 = vmatprep.subr.bf16.mxu0 0
    %1477 = vmatpush1.bf16.msra.mxu0 0
    %1478 = vmatprep.subr.bf16.mxu0 0
    %1479 = vmatpush1.bf16.msra.mxu0 0
    %1480 = vmatprep.subr.bf16.mxu0 0
    %1481 = vmatpush1.bf16.msra.mxu0 0
    %1482 = vmatprep.subr.bf16.mxu0 0
    %1483 = vmatpush1.bf16.msra.mxu0 0
    %1484 = vmatprep.mubr.bf16.mxu0 0
    %1485 = vmatmul.mubr.bf16.gmra.mrb[0].mxu0 %v1440
    %v1486 = vpop.f32.mrb[0].mxu0
    %v1487 = vadd.f32 0.0, %v1486
    %v1488 = vpop.f32.mrb[0].mxu0
    %v1489 = vpop.f32.mrb[0].mxu0
    %v1490 = vadd.f32 0.0, %v1489
    %v1491 = vpop.f32.mrb[0].mxu0
    %1492 = vdwg.mxu0
    %v1493 = vadd.f32 %v1444, %v1487
    %v1494 = vadd.f32 %v1448, %v1490
    %v1495 = vxor.u32 %v1493, 2147483648
    %v1496 = vxor.u32 %v1494, 2147483648
    %v1497 = vmul.f32 %v1495, 1.442695
    %v1498 = vpow.pop %v1497
    %v1499 = vmul.f32 %v1496, 1.442695
    %v1500 = vpow.pop %v1499
    %v1501 = vadd.f32 %v1498, 1.0
    %v1502 = vadd.f32 %v1500, 1.0
    %v1503 = vrcp.pop %v1501
    %v1504 = vmul.f32 1.0, %v1503
    %v1505 = vrcp.pop %v1502
    %v1506 = vmul.f32 1.0, %v1505
    %1507 = vmatprep.subr.bf16.mxu0 0
    %1508 = vmatpush1.bf16.msra.mxu0 %v715
    %1509 = vmatprep.subr.bf16.mxu0 0
    %1510 = vmatpush1.bf16.msra.mxu0 %v716
    %1511 = vmatprep.subr.bf16.mxu0 0
    %1512 = vmatpush1.bf16.msra.mxu0 %v717
    %1513 = vmatprep.subr.bf16.mxu0 0
    %1514 = vmatpush1.bf16.msra.mxu0 %v718
    %1515 = vmatprep.subr.bf16.mxu0 0
    %1516 = vmatpush1.bf16.msra.mxu0 %v719
    %1517 = vmatprep.subr.bf16.mxu0 0
    %1518 = vmatpush1.bf16.msra.mxu0 %v720
    %1519 = vmatprep.subr.bf16.mxu0 0
    %1520 = vmatpush1.bf16.msra.mxu0 %v721
    %1521 = vmatprep.subr.bf16.mxu0 0
    %1522 = vmatpush1.bf16.msra.mxu0 %v722
    %1523 = vmatprep.subr.bf16.mxu0 0
    %1524 = vmatpush1.bf16.msra.mxu0 0
    %1525 = vmatprep.subr.bf16.mxu0 0
    %1526 = vmatpush1.bf16.msra.mxu0 0
    %1527 = vmatprep.subr.bf16.mxu0 0
    %1528 = vmatpush1.bf16.msra.mxu0 0
    %1529 = vmatprep.subr.bf16.mxu0 0
    %1530 = vmatpush1.bf16.msra.mxu0 0
    %1531 = vmatprep.subr.bf16.mxu0 0
    %1532 = vmatpush1.bf16.msra.mxu0 0
    %1533 = vmatprep.subr.bf16.mxu0 0
    %1534 = vmatpush1.bf16.msra.mxu0 0
    %1535 = vmatprep.subr.bf16.mxu0 0
    %1536 = vmatpush1.bf16.msra.mxu0 0
    %1537 = vmatprep.subr.bf16.mxu0 0
    %1538 = vmatpush1.bf16.msra.mxu0 0
    %1539 = vmatprep.mubr.bf16.mxu0 0
    %1540 = vmatmul.mubr.bf16.gmra.mrb[0].mxu0 %v1440
    %v1541 = vpop.f32.mrb[0].mxu0
    %v1542 = vadd.f32 0.0, %v1541
    %v1543 = vpop.f32.mrb[0].mxu0
    %v1544 = vpop.f32.mrb[0].mxu0
    %v1545 = vadd.f32 0.0, %v1544
    %v1546 = vpop.f32.mrb[0].mxu0
    %1547 = vdwg.mxu0
    %v1548 = vadd.f32 %v1445, %v1542
    %v1549 = vadd.f32 %v1449, %v1545
    %v1550 = vxor.u32 %v1548, 2147483648
    %v1551 = vxor.u32 %v1549, 2147483648
    %v1552 = vmul.f32 %v1550, 1.442695
    %v1553 = vpow.pop %v1552
    %v1554 = vmul.f32 %v1551, 1.442695
    %v1555 = vpow.pop %v1554
    %v1556 = vadd.f32 %v1553, 1.0
    %v1557 = vadd.f32 %v1555, 1.0
    %v1558 = vrcp.pop %v1556
    %v1559 = vmul.f32 1.0, %v1558
    %v1560 = vrcp.pop %v1557
    %v1561 = vmul.f32 1.0, %v1560
    %1562 = vmatprep.subr.bf16.mxu0 0
    %1563 = vmatpush1.bf16.msra.mxu0 %v818
    %1564 = vmatprep.subr.bf16.mxu0 0
    %1565 = vmatpush1.bf16.msra.mxu0 %v819
    %1566 = vmatprep.subr.bf16.mxu0 0
    %1567 = vmatpush1.bf16.msra.mxu0 %v820
    %1568 = vmatprep.subr.bf16.mxu0 0
    %1569 = vmatpush1.bf16.msra.mxu0 %v821
    %1570 = vmatprep.subr.bf16.mxu0 0
    %1571 = vmatpush1.bf16.msra.mxu0 %v822
    %1572 = vmatprep.subr.bf16.mxu0 0
    %1573 = vmatpush1.bf16.msra.mxu0 %v823
    %1574 = vmatprep.subr.bf16.mxu0 0
    %1575 = vmatpush1.bf16.msra.mxu0 %v824
    %1576 = vmatprep.subr.bf16.mxu0 0
    %1577 = vmatpush1.bf16.msra.mxu0 %v825
    %1578 = vmatprep.subr.bf16.mxu0 0
    %1579 = vmatpush1.bf16.msra.mxu0 0
    %1580 = vmatprep.subr.bf16.mxu0 0
    %1581 = vmatpush1.bf16.msra.mxu0 0
    %1582 = vmatprep.subr.bf16.mxu0 0
    %1583 = vmatpush1.bf16.msra.mxu0 0
    %1584 = vmatprep.subr.bf16.mxu0 0
    %1585 = vmatpush1.bf16.msra.mxu0 0
    %1586 = vmatprep.subr.bf16.mxu0 0
    %1587 = vmatpush1.bf16.msra.mxu0 0
    %1588 = vmatprep.subr.bf16.mxu0 0
    %1589 = vmatpush1.bf16.msra.mxu0 0
    %1590 = vmatprep.subr.bf16.mxu0 0
    %1591 = vmatpush1.bf16.msra.mxu0 0
    %1592 = vmatprep.subr.bf16.mxu0 0
    %1593 = vmatpush1.bf16.msra.mxu0 0
    %1594 = vmatprep.mubr.bf16.mxu0 0
    %1595 = vmatmul.mubr.bf16.gmra.mrb[0].mxu0 %v1440
    %v1596 = vpop.f32.mrb[0].mxu0
    %v1597 = vadd.f32 0.0, %v1596
    %v1598 = vpop.f32.mrb[0].mxu0
    %v1599 = vpop.f32.mrb[0].mxu0
    %v1600 = vadd.f32 0.0, %v1599
    %v1601 = vpop.f32.mrb[0].mxu0
    %1602 = vdwg.mxu0
    %v1603 = vadd.f32 %v1446, %v1597
    %v1604 = vadd.f32 %v1450, %v1600
    %v1605 = vtanh.pop %v1603
    %v1606 = vtanh.pop %v1604
    %1607 = vmatprep.subr.bf16.mxu0 0
    %1608 = vmatpush1.bf16.msra.mxu0 %v895
    %1609 = vmatprep.subr.bf16.mxu0 0
    %1610 = vmatpush1.bf16.msra.mxu0 %v896
    %1611 = vmatprep.subr.bf16.mxu0 0
    %1612 = vmatpush1.bf16.msra.mxu0 %v897
    %1613 = vmatprep.subr.bf16.mxu0 0
    %1614 = vmatpush1.bf16.msra.mxu0 %v898
    %1615 = vmatprep.subr.bf16.mxu0 0
    %1616 = vmatpush1.bf16.msra.mxu0 %v899
    %1617 = vmatprep.subr.bf16.mxu0 0
    %1618 = vmatpush1.bf16.msra.mxu0 %v900
    %1619 = vmatprep.subr.bf16.mxu0 0
    %1620 = vmatpush1.bf16.msra.mxu0 %v901
    %1621 = vmatprep.subr.bf16.mxu0 0
    %1622 = vmatpush1.bf16.msra.mxu0 %v902
    %1623 = vmatprep.subr.bf16.mxu0 0
    %1624 = vmatpush1.bf16.msra.mxu0 0
    %1625 = vmatprep.subr.bf16.mxu0 0
    %1626 = vmatpush1.bf16.msra.mxu0 0
    %1627 = vmatprep.subr.bf16.mxu0 0
    %1628 = vmatpush1.bf16.msra.mxu0 0
    %1629 = vmatprep.subr.bf16.mxu0 0
    %1630 = vmatpush1.bf16.msra.mxu0 0
    %1631 = vmatprep.subr.bf16.mxu0 0
    %1632 = vmatpush1.bf16.msra.mxu0 0
    %1633 = vmatprep.subr.bf16.mxu0 0
    %1634 = vmatpush1.bf16.msra.mxu0 0
    %1635 = vmatprep.subr.bf16.mxu0 0
    %1636 = vmatpush1.bf16.msra.mxu0 0
    %1637 = vmatprep.subr.bf16.mxu0 0
    %1638 = vmatpush1.bf16.msra.mxu0 0
    %1639 = vmatprep.mubr.bf16.mxu0 0
    %1640 = vmatmul.mubr.bf16.gmra.mrb[0].mxu0 %v1440
    %v1641 = vpop.f32.mrb[0].mxu0
    %v1642 = vadd.f32 0.0, %v1641
    %v1643 = vpop.f32.mrb[0].mxu0
    %v1644 = vpop.f32.mrb[0].mxu0
    %v1645 = vadd.f32 0.0, %v1644
    %v1646 = vpop.f32.mrb[0].mxu0
    %1647 = vdwg.mxu0
    %v1648 = vadd.f32 %v1447, %v1642
    %v1649 = vadd.f32 %v1451, %v1645
    %v1650 = vxor.u32 %v1648, 2147483648
    %v1651 = vxor.u32 %v1649, 2147483648
    %v1652 = vmul.f32 %v1650, 1.442695
    %v1653 = vpow.pop %v1652
    %v1654 = vmul.f32 %v1651, 1.442695
    %v1655 = vpow.pop %v1654
    %v1656 = vadd.f32 %v1653, 1.0
    %v1657 = vadd.f32 %v1655, 1.0
    %v1658 = vrcp.pop %v1656
    %v1659 = vmul.f32 1.0, %v1658
    %v1660 = vrcp.pop %v1657
    %v1661 = vmul.f32 1.0, %v1660
    %v1662 = vmul.f32 %v1559, %v1434
    %v1663 = vmul.f32 %v1561, %v1435
    %v1664 = vmul.f32 %v1504, %v1605
    %v1665 = vmul.f32 %v1506, %v1606
    %v1666 = vadd.f32 %v1662, %v1664
    %v1667 = vadd.f32 %v1663, %v1665
    %v1668 = vtanh.pop %v1666
    %v1669 = vtanh.pop %v1667
    %v1670 = vmul.f32 %v1659, %v1668
    %v1671 = vmul.f32 %v1661, %v1669
    %v1672 = vpack.c.bf16 %v1671, %v1670
    %s1673 = smul.u32 8, 4
    %s1674 = smul.addr %s1673, 8
    %s1675 = scalar_lea.vmem [#allocation2], %s1674
    %v1676 = vld [vmem:[%s1675] sm:$0xff]
    %v1677 = vld [vmem:[%s1675 + $0x8] sm:$0xff]
    %v1678 = vld [vmem:[%s1675 + $0x10] sm:$0xff]
    %v1679 = vld [vmem:[%s1675 + $0x18] sm:$0xff]
    %v1680 = vld [vmem:[%s1675 + $0x20] sm:$0xff]
    %v1681 = vld [vmem:[%s1675 + $0x28] sm:$0xff]
    %v1682 = vld [vmem:[%s1675 + $0x30] sm:$0xff]
    %v1683 = vld [vmem:[%s1675 + $0x38] sm:$0xff]
    %1684 = vmatprep.subr.bf16.mxu0 0
    %1685 = vmatpush1.bf16.msra.mxu0 %v628
    %1686 = vmatprep.subr.bf16.mxu0 0
    %1687 = vmatpush1.bf16.msra.mxu0 %v629
    %1688 = vmatprep.subr.bf16.mxu0 0
    %1689 = vmatpush1.bf16.msra.mxu0 %v630
    %1690 = vmatprep.subr.bf16.mxu0 0
    %1691 = vmatpush1.bf16.msra.mxu0 %v631
    %1692 = vmatprep.subr.bf16.mxu0 0
    %1693 = vmatpush1.bf16.msra.mxu0 %v632
    %1694 = vmatprep.subr.bf16.mxu0 0
    %1695 = vmatpush1.bf16.msra.mxu0 %v633
    %1696 = vmatprep.subr.bf16.mxu0 0
    %1697 = vmatpush1.bf16.msra.mxu0 %v634
    %1698 = vmatprep.subr.bf16.mxu0 0
    %1699 = vmatpush1.bf16.msra.mxu0 %v635
    %1700 = vmatprep.subr.bf16.mxu0 0
    %1701 = vmatpush1.bf16.msra.mxu0 0
    %1702 = vmatprep.subr.bf16.mxu0 0
    %1703 = vmatpush1.bf16.msra.mxu0 0
    %1704 = vmatprep.subr.bf16.mxu0 0
    %1705 = vmatpush1.bf16.msra.mxu0 0
    %1706 = vmatprep.subr.bf16.mxu0 0
    %1707 = vmatpush1.bf16.msra.mxu0 0
    %1708 = vmatprep.subr.bf16.mxu0 0
    %1709 = vmatpush1.bf16.msra.mxu0 0
    %1710 = vmatprep.subr.bf16.mxu0 0
    %1711 = vmatpush1.bf16.msra.mxu0 0
    %1712 = vmatprep.subr.bf16.mxu0 0
    %1713 = vmatpush1.bf16.msra.mxu0 0
    %1714 = vmatprep.subr.bf16.mxu0 0
    %1715 = vmatpush1.bf16.msra.mxu0 0
    %1716 = vmatprep.mubr.bf16.mxu0 0
    %1717 = vmatmul.mubr.bf16.gmra.mrb[0].mxu0 %v1672
    %v1718 = vpop.f32.mrb[0].mxu0
    %v1719 = vadd.f32 0.0, %v1718
    %v1720 = vpop.f32.mrb[0].mxu0
    %v1721 = vpop.f32.mrb[0].mxu0
    %v1722 = vadd.f32 0.0, %v1721
    %v1723 = vpop.f32.mrb[0].mxu0
    %1724 = vdwg.mxu0
    %v1725 = vadd.f32 %v1676, %v1719
    %v1726 = vadd.f32 %v1680, %v1722
    %v1727 = vxor.u32 %v1725, 2147483648
    %v1728 = vxor.u32 %v1726, 2147483648
    %v1729 = vmul.f32 %v1727, 1.442695
    %v1730 = vpow.pop %v1729
    %v1731 = vmul.f32 %v1728, 1.442695
    %v1732 = vpow.pop %v1731
    %v1733 = vadd.f32 %v1730, 1.0
    %v1734 = vadd.f32 %v1732, 1.0
    %v1735 = vrcp.pop %v1733
    %v1736 = vmul.f32 1.0, %v1735
    %v1737 = vrcp.pop %v1734
    %v1738 = vmul.f32 1.0, %v1737
    %1739 = vmatprep.subr.bf16.mxu0 0
    %1740 = vmatpush1.bf16.msra.mxu0 %v715
    %1741 = vmatprep.subr.bf16.mxu0 0
    %1742 = vmatpush1.bf16.msra.mxu0 %v716
    %1743 = vmatprep.subr.bf16.mxu0 0
    %1744 = vmatpush1.bf16.msra.mxu0 %v717
    %1745 = vmatprep.subr.bf16.mxu0 0
    %1746 = vmatpush1.bf16.msra.mxu0 %v718
    %1747 = vmatprep.subr.bf16.mxu0 0
    %1748 = vmatpush1.bf16.msra.mxu0 %v719
    %1749 = vmatprep.subr.bf16.mxu0 0
    %1750 = vmatpush1.bf16.msra.mxu0 %v720
    %1751 = vmatprep.subr.bf16.mxu0 0
    %1752 = vmatpush1.bf16.msra.mxu0 %v721
    %1753 = vmatprep.subr.bf16.mxu0 0
    %1754 = vmatpush1.bf16.msra.mxu0 %v722
    %1755 = vmatprep.subr.bf16.mxu0 0
    %1756 = vmatpush1.bf16.msra.mxu0 0
    %1757 = vmatprep.subr.bf16.mxu0 0
    %1758 = vmatpush1.bf16.msra.mxu0 0
    %1759 = vmatprep.subr.bf16.mxu0 0
    %1760 = vmatpush1.bf16.msra.mxu0 0
    %1761 = vmatprep.subr.bf16.mxu0 0
    %1762 = vmatpush1.bf16.msra.mxu0 0
    %1763 = vmatprep.subr.bf16.mxu0 0
    %1764 = vmatpush1.bf16.msra.mxu0 0
    %1765 = vmatprep.subr.bf16.mxu0 0
    %1766 = vmatpush1.bf16.msra.mxu0 0
    %1767 = vmatprep.subr.bf16.mxu0 0
    %1768 = vmatpush1.bf16.msra.mxu0 0
    %1769 = vmatprep.subr.bf16.mxu0 0
    %1770 = vmatpush1.bf16.msra.mxu0 0
    %1771 = vmatprep.mubr.bf16.mxu0 0
    %1772 = vmatmul.mubr.bf16.gmra.mrb[0].mxu0 %v1672
    %v1773 = vpop.f32.mrb[0].mxu0
    %v1774 = vadd.f32 0.0, %v1773
    %v1775 = vpop.f32.mrb[0].mxu0
    %v1776 = vpop.f32.mrb[0].mxu0
    %v1777 = vadd.f32 0.0, %v1776
    %v1778 = vpop.f32.mrb[0].mxu0
    %1779 = vdwg.mxu0
    %v1780 = vadd.f32 %v1677, %v1774
    %v1781 = vadd.f32 %v1681, %v1777
    %v1782 = vxor.u32 %v1780, 2147483648
    %v1783 = vxor.u32 %v1781, 2147483648
    %v1784 = vmul.f32 %v1782, 1.442695
    %v1785 = vpow.pop %v1784
    %v1786 = vmul.f32 %v1783, 1.442695
    %v1787 = vpow.pop %v1786
    %v1788 = vadd.f32 %v1785, 1.0
    %v1789 = vadd.f32 %v1787, 1.0
    %v1790 = vrcp.pop %v1788
    %v1791 = vmul.f32 1.0, %v1790
    %v1792 = vrcp.pop %v1789
    %v1793 = vmul.f32 1.0, %v1792
    %1794 = vmatprep.subr.bf16.mxu0 0
    %1795 = vmatpush1.bf16.msra.mxu0 %v818
    %1796 = vmatprep.subr.bf16.mxu0 0
    %1797 = vmatpush1.bf16.msra.mxu0 %v819
    %1798 = vmatprep.subr.bf16.mxu0 0
    %1799 = vmatpush1.bf16.msra.mxu0 %v820
    %1800 = vmatprep.subr.bf16.mxu0 0
    %1801 = vmatpush1.bf16.msra.mxu0 %v821
    %1802 = vmatprep.subr.bf16.mxu0 0
    %1803 = vmatpush1.bf16.msra.mxu0 %v822
    %1804 = vmatprep.subr.bf16.mxu0 0
    %1805 = vmatpush1.bf16.msra.mxu0 %v823
    %1806 = vmatprep.subr.bf16.mxu0 0
    %1807 = vmatpush1.bf16.msra.mxu0 %v824
    %1808 = vmatprep.subr.bf16.mxu0 0
    %1809 = vmatpush1.bf16.msra.mxu0 %v825
    %1810 = vmatprep.subr.bf16.mxu0 0
    %1811 = vmatpush1.bf16.msra.mxu0 0
    %1812 = vmatprep.subr.bf16.mxu0 0
    %1813 = vmatpush1.bf16.msra.mxu0 0
    %1814 = vmatprep.subr.bf16.mxu0 0
    %1815 = vmatpush1.bf16.msra.mxu0 0
    %1816 = vmatprep.subr.bf16.mxu0 0
    %1817 = vmatpush1.bf16.msra.mxu0 0
    %1818 = vmatprep.subr.bf16.mxu0 0
    %1819 = vmatpush1.bf16.msra.mxu0 0
    %1820 = vmatprep.subr.bf16.mxu0 0
    %1821 = vmatpush1.bf16.msra.mxu0 0
    %1822 = vmatprep.subr.bf16.mxu0 0
    %1823 = vmatpush1.bf16.msra.mxu0 0
    %1824 = vmatprep.subr.bf16.mxu0 0
    %1825 = vmatpush1.bf16.msra.mxu0 0
    %1826 = vmatprep.mubr.bf16.mxu0 0
    %1827 = vmatmul.mubr.bf16.gmra.mrb[0].mxu0 %v1672
    %v1828 = vpop.f32.mrb[0].mxu0
    %v1829 = vadd.f32 0.0, %v1828
    %v1830 = vpop.f32.mrb[0].mxu0
    %v1831 = vpop.f32.mrb[0].mxu0
    %v1832 = vadd.f32 0.0, %v1831
    %v1833 = vpop.f32.mrb[0].mxu0
    %1834 = vdwg.mxu0
    %v1835 = vadd.f32 %v1678, %v1829
    %v1836 = vadd.f32 %v1682, %v1832
    %v1837 = vtanh.pop %v1835
    %v1838 = vtanh.pop %v1836
    %1839 = vmatprep.subr.bf16.mxu0 0
    %1840 = vmatpush1.bf16.msra.mxu0 %v895
    %1841 = vmatprep.subr.bf16.mxu0 0
    %1842 = vmatpush1.bf16.msra.mxu0 %v896
    %1843 = vmatprep.subr.bf16.mxu0 0
    %1844 = vmatpush1.bf16.msra.mxu0 %v897
    %1845 = vmatprep.subr.bf16.mxu0 0
    %1846 = vmatpush1.bf16.msra.mxu0 %v898
    %1847 = vmatprep.subr.bf16.mxu0 0
    %1848 = vmatpush1.bf16.msra.mxu0 %v899
    %1849 = vmatprep.subr.bf16.mxu0 0
    %1850 = vmatpush1.bf16.msra.mxu0 %v900
    %1851 = vmatprep.subr.bf16.mxu0 0
    %1852 = vmatpush1.bf16.msra.mxu0 %v901
    %1853 = vmatprep.subr.bf16.mxu0 0
    %1854 = vmatpush1.bf16.msra.mxu0 %v902
    %1855 = vmatprep.subr.bf16.mxu0 0
    %1856 = vmatpush1.bf16.msra.mxu0 0
    %1857 = vmatprep.subr.bf16.mxu0 0
    %1858 = vmatpush1.bf16.msra.mxu0 0
    %1859 = vmatprep.subr.bf16.mxu0 0
    %1860 = vmatpush1.bf16.msra.mxu0 0
    %1861 = vmatprep.subr.bf16.mxu0 0
    %1862 = vmatpush1.bf16.msra.mxu0 0
    %1863 = vmatprep.subr.bf16.mxu0 0
    %1864 = vmatpush1.bf16.msra.mxu0 0
    %1865 = vmatprep.subr.bf16.mxu0 0
    %1866 = vmatpush1.bf16.msra.mxu0 0
    %1867 = vmatprep.subr.bf16.mxu0 0
    %1868 = vmatpush1.bf16.msra.mxu0 0
    %1869 = vmatprep.subr.bf16.mxu0 0
    %1870 = vmatpush1.bf16.msra.mxu0 0
    %1871 = vmatprep.mubr.bf16.mxu0 0
    %1872 = vmatmul.mubr.bf16.gmra.mrb[0].mxu0 %v1672
    %v1873 = vpop.f32.mrb[0].mxu0
    %v1874 = vadd.f32 0.0, %v1873
    %v1875 = vpop.f32.mrb[0].mxu0
    %v1876 = vpop.f32.mrb[0].mxu0
    %v1877 = vadd.f32 0.0, %v1876
    %v1878 = vpop.f32.mrb[0].mxu0
    %1879 = vdwg.mxu0
    %v1880 = vadd.f32 %v1679, %v1874
    %v1881 = vadd.f32 %v1683, %v1877
    %v1882 = vxor.u32 %v1880, 2147483648
    %v1883 = vxor.u32 %v1881, 2147483648
    %v1884 = vmul.f32 %v1882, 1.442695
    %v1885 = vpow.pop %v1884
    %v1886 = vmul.f32 %v1883, 1.442695
    %v1887 = vpow.pop %v1886
    %v1888 = vadd.f32 %v1885, 1.0
    %v1889 = vadd.f32 %v1887, 1.0
    %v1890 = vrcp.pop %v1888
    %v1891 = vmul.f32 1.0, %v1890
    %v1892 = vrcp.pop %v1889
    %v1893 = vmul.f32 1.0, %v1892
    %v1894 = vmul.f32 %v1791, %v1666
    %v1895 = vmul.f32 %v1793, %v1667
    %v1896 = vmul.f32 %v1736, %v1837
    %v1897 = vmul.f32 %v1738, %v1838
    %v1898 = vadd.f32 %v1894, %v1896
    %v1899 = vadd.f32 %v1895, %v1897
    %v1900 = vtanh.pop %v1898
    %v1901 = vtanh.pop %v1899
    %v1902 = vmul.f32 %v1891, %v1900
    %v1903 = vmul.f32 %v1893, %v1901
    %v1904 = vpack.c.bf16 %v1903, %v1902
    %s1905 = smul.u32 10, 4
    %s1906 = smul.addr %s1905, 8
    %s1907 = scalar_lea.vmem [#allocation2], %s1906
    %v1908 = vld [vmem:[%s1907] sm:$0xff]
    %v1909 = vld [vmem:[%s1907 + $0x8] sm:$0xff]
    %v1910 = vld [vmem:[%s1907 + $0x10] sm:$0xff]
    %v1911 = vld [vmem:[%s1907 + $0x18] sm:$0xff]
    %v1912 = vld [vmem:[%s1907 + $0x20] sm:$0xff]
    %v1913 = vld [vmem:[%s1907 + $0x28] sm:$0xff]
    %v1914 = vld [vmem:[%s1907 + $0x30] sm:$0xff]
    %v1915 = vld [vmem:[%s1907 + $0x38] sm:$0xff]
    %1916 = vmatprep.subr.bf16.mxu0 0
    %1917 = vmatpush1.bf16.msra.mxu0 %v628
    %1918 = vmatprep.subr.bf16.mxu0 0
    %1919 = vmatpush1.bf16.msra.mxu0 %v629
    %1920 = vmatprep.subr.bf16.mxu0 0
    %1921 = vmatpush1.bf16.msra.mxu0 %v630
    %1922 = vmatprep.subr.bf16.mxu0 0
    %1923 = vmatpush1.bf16.msra.mxu0 %v631
    %1924 = vmatprep.subr.bf16.mxu0 0
    %1925 = vmatpush1.bf16.msra.mxu0 %v632
    %1926 = vmatprep.subr.bf16.mxu0 0
    %1927 = vmatpush1.bf16.msra.mxu0 %v633
    %1928 = vmatprep.subr.bf16.mxu0 0
    %1929 = vmatpush1.bf16.msra.mxu0 %v634
    %1930 = vmatprep.subr.bf16.mxu0 0
    %1931 = vmatpush1.bf16.msra.mxu0 %v635
    %1932 = vmatprep.subr.bf16.mxu0 0
    %1933 = vmatpush1.bf16.msra.mxu0 0
    %1934 = vmatprep.subr.bf16.mxu0 0
    %1935 = vmatpush1.bf16.msra.mxu0 0
    %1936 = vmatprep.subr.bf16.mxu0 0
    %1937 = vmatpush1.bf16.msra.mxu0 0
    %1938 = vmatprep.subr.bf16.mxu0 0
    %1939 = vmatpush1.bf16.msra.mxu0 0
    %1940 = vmatprep.subr.bf16.mxu0 0
    %1941 = vmatpush1.bf16.msra.mxu0 0
    %1942 = vmatprep.subr.bf16.mxu0 0
    %1943 = vmatpush1.bf16.msra.mxu0 0
    %1944 = vmatprep.subr.bf16.mxu0 0
    %1945 = vmatpush1.bf16.msra.mxu0 0
    %1946 = vmatprep.subr.bf16.mxu0 0
    %1947 = vmatpush1.bf16.msra.mxu0 0
    %1948 = vmatprep.mubr.bf16.mxu0 0
    %1949 = vmatmul.mubr.bf16.gmra.mrb[0].mxu0 %v1904
    %v1950 = vpop.f32.mrb[0].mxu0
    %v1951 = vadd.f32 0.0, %v1950
    %v1952 = vpop.f32.mrb[0].mxu0
    %v1953 = vpop.f32.mrb[0].mxu0
    %v1954 = vadd.f32 0.0, %v1953
    %v1955 = vpop.f32.mrb[0].mxu0
    %1956 = vdwg.mxu0
    %v1957 = vadd.f32 %v1908, %v1951
    %v1958 = vadd.f32 %v1912, %v1954
    %v1959 = vxor.u32 %v1957, 2147483648
    %v1960 = vxor.u32 %v1958, 2147483648
    %v1961 = vmul.f32 %v1959, 1.442695
    %v1962 = vpow.pop %v1961
    %v1963 = vmul.f32 %v1960, 1.442695
    %v1964 = vpow.pop %v1963
    %v1965 = vadd.f32 %v1962, 1.0
    %v1966 = vadd.f32 %v1964, 1.0
    %v1967 = vrcp.pop %v1965
    %v1968 = vmul.f32 1.0, %v1967
    %v1969 = vrcp.pop %v1966
    %v1970 = vmul.f32 1.0, %v1969
    %1971 = vmatprep.subr.bf16.mxu0 0
    %1972 = vmatpush1.bf16.msra.mxu0 %v715
    %1973 = vmatprep.subr.bf16.mxu0 0
    %1974 = vmatpush1.bf16.msra.mxu0 %v716
    %1975 = vmatprep.subr.bf16.mxu0 0
    %1976 = vmatpush1.bf16.msra.mxu0 %v717
    %1977 = vmatprep.subr.bf16.mxu0 0
    %1978 = vmatpush1.bf16.msra.mxu0 %v718
    %1979 = vmatprep.subr.bf16.mxu0 0
    %1980 = vmatpush1.bf16.msra.mxu0 %v719
    %1981 = vmatprep.subr.bf16.mxu0 0
    %1982 = vmatpush1.bf16.msra.mxu0 %v720
    %1983 = vmatprep.subr.bf16.mxu0 0
    %1984 = vmatpush1.bf16.msra.mxu0 %v721
    %1985 = vmatprep.subr.bf16.mxu0 0
    %1986 = vmatpush1.bf16.msra.mxu0 %v722
    %1987 = vmatprep.subr.bf16.mxu0 0
    %1988 = vmatpush1.bf16.msra.mxu0 0
    %1989 = vmatprep.subr.bf16.mxu0 0
    %1990 = vmatpush1.bf16.msra.mxu0 0
    %1991 = vmatprep.subr.bf16.mxu0 0
    %1992 = vmatpush1.bf16.msra.mxu0 0
    %1993 = vmatprep.subr.bf16.mxu0 0
    %1994 = vmatpush1.bf16.msra.mxu0 0
    %1995 = vmatprep.subr.bf16.mxu0 0
    %1996 = vmatpush1.bf16.msra.mxu0 0
    %1997 = vmatprep.subr.bf16.mxu0 0
    %1998 = vmatpush1.bf16.msra.mxu0 0
    %1999 = vmatprep.subr.bf16.mxu0 0
    %2000 = vmatpush1.bf16.msra.mxu0 0
    %2001 = vmatprep.subr.bf16.mxu0 0
    %2002 = vmatpush1.bf16.msra.mxu0 0
    %2003 = vmatprep.mubr.bf16.mxu0 0
    %2004 = vmatmul.mubr.bf16.gmra.mrb[0].mxu0 %v1904
    %v2005 = vpop.f32.mrb[0].mxu0
    %v2006 = vadd.f32 0.0, %v2005
    %v2007 = vpop.f32.mrb[0].mxu0
    %v2008 = vpop.f32.mrb[0].mxu0
    %v2009 = vadd.f32 0.0, %v2008
    %v2010 = vpop.f32.mrb[0].mxu0
    %2011 = vdwg.mxu0
    %v2012 = vadd.f32 %v1909, %v2006
    %v2013 = vadd.f32 %v1913, %v2009
    %v2014 = vxor.u32 %v2012, 2147483648
    %v2015 = vxor.u32 %v2013, 2147483648
    %v2016 = vmul.f32 %v2014, 1.442695
    %v2017 = vpow.pop %v2016
    %v2018 = vmul.f32 %v2015, 1.442695
    %v2019 = vpow.pop %v2018
    %v2020 = vadd.f32 %v2017, 1.0
    %v2021 = vadd.f32 %v2019, 1.0
    %v2022 = vrcp.pop %v2020
    %v2023 = vmul.f32 1.0, %v2022
    %v2024 = vrcp.pop %v2021
    %v2025 = vmul.f32 1.0, %v2024
    %2026 = vmatprep.subr.bf16.mxu0 0
    %2027 = vmatpush1.bf16.msra.mxu0 %v818
    %2028 = vmatprep.subr.bf16.mxu0 0
    %2029 = vmatpush1.bf16.msra.mxu0 %v819
    %2030 = vmatprep.subr.bf16.mxu0 0
    %2031 = vmatpush1.bf16.msra.mxu0 %v820
    %2032 = vmatprep.subr.bf16.mxu0 0
    %2033 = vmatpush1.bf16.msra.mxu0 %v821
    %2034 = vmatprep.subr.bf16.mxu0 0
    %2035 = vmatpush1.bf16.msra.mxu0 %v822
    %2036 = vmatprep.subr.bf16.mxu0 0
    %2037 = vmatpush1.bf16.msra.mxu0 %v823
    %2038 = vmatprep.subr.bf16.mxu0 0
    %2039 = vmatpush1.bf16.msra.mxu0 %v824
    %2040 = vmatprep.subr.bf16.mxu0 0
    %2041 = vmatpush1.bf16.msra.mxu0 %v825
    %2042 = vmatprep.subr.bf16.mxu0 0
    %2043 = vmatpush1.bf16.msra.mxu0 0
    %2044 = vmatprep.subr.bf16.mxu0 0
    %2045 = vmatpush1.bf16.msra.mxu0 0
    %2046 = vmatprep.subr.bf16.mxu0 0
    %2047 = vmatpush1.bf16.msra.mxu0 0
    %2048 = vmatprep.subr.bf16.mxu0 0
    %2049 = vmatpush1.bf16.msra.mxu0 0
    %2050 = vmatprep.subr.bf16.mxu0 0
    %2051 = vmatpush1.bf16.msra.mxu0 0
    %2052 = vmatprep.subr.bf16.mxu0 0
    %2053 = vmatpush1.bf16.msra.mxu0 0
    %2054 = vmatprep.subr.bf16.mxu0 0
    %2055 = vmatpush1.bf16.msra.mxu0 0
    %2056 = vmatprep.subr.bf16.mxu0 0
    %2057 = vmatpush1.bf16.msra.mxu0 0
    %2058 = vmatprep.mubr.bf16.mxu0 0
    %2059 = vmatmul.mubr.bf16.gmra.mrb[0].mxu0 %v1904
    %v2060 = vpop.f32.mrb[0].mxu0
    %v2061 = vadd.f32 0.0, %v2060
    %v2062 = vpop.f32.mrb[0].mxu0
    %v2063 = vpop.f32.mrb[0].mxu0
    %v2064 = vadd.f32 0.0, %v2063
    %v2065 = vpop.f32.mrb[0].mxu0
    %2066 = vdwg.mxu0
    %v2067 = vadd.f32 %v1910, %v2061
    %v2068 = vadd.f32 %v1914, %v2064
    %v2069 = vtanh.pop %v2067
    %v2070 = vtanh.pop %v2068
    %2071 = vmatprep.subr.bf16.mxu0 0
    %2072 = vmatpush1.bf16.msra.mxu0 %v895
    %2073 = vmatprep.subr.bf16.mxu0 0
    %2074 = vmatpush1.bf16.msra.mxu0 %v896
    %2075 = vmatprep.subr.bf16.mxu0 0
    %2076 = vmatpush1.bf16.msra.mxu0 %v897
    %2077 = vmatprep.subr.bf16.mxu0 0
    %2078 = vmatpush1.bf16.msra.mxu0 %v898
    %2079 = vmatprep.subr.bf16.mxu0 0
    %2080 = vmatpush1.bf16.msra.mxu0 %v899
    %2081 = vmatprep.subr.bf16.mxu0 0
    %2082 = vmatpush1.bf16.msra.mxu0 %v900
    %2083 = vmatprep.subr.bf16.mxu0 0
    %2084 = vmatpush1.bf16.msra.mxu0 %v901
    %2085 = vmatprep.subr.bf16.mxu0 0
    %2086 = vmatpush1.bf16.msra.mxu0 %v902
    %2087 = vmatprep.subr.bf16.mxu0 0
    %2088 = vmatpush1.bf16.msra.mxu0 0
    %2089 = vmatprep.subr.bf16.mxu0 0
    %2090 = vmatpush1.bf16.msra.mxu0 0
    %2091 = vmatprep.subr.bf16.mxu0 0
    %2092 = vmatpush1.bf16.msra.mxu0 0
    %2093 = vmatprep.subr.bf16.mxu0 0
    %2094 = vmatpush1.bf16.msra.mxu0 0
    %2095 = vmatprep.subr.bf16.mxu0 0
    %2096 = vmatpush1.bf16.msra.mxu0 0
    %2097 = vmatprep.subr.bf16.mxu0 0
    %2098 = vmatpush1.bf16.msra.mxu0 0
    %2099 = vmatprep.subr.bf16.mxu0 0
    %2100 = vmatpush1.bf16.msra.mxu0 0
    %2101 = vmatprep.subr.bf16.mxu0 0
    %2102 = vmatpush1.bf16.msra.mxu0 0
    %2103 = vmatprep.mubr.bf16.mxu0 0
    %2104 = vmatmul.mubr.bf16.gmra.mrb[0].mxu0 %v1904
    %v2105 = vpop.f32.mrb[0].mxu0
    %v2106 = vadd.f32 0.0, %v2105
    %v2107 = vpop.f32.mrb[0].mxu0
    %v2108 = vpop.f32.mrb[0].mxu0
    %v2109 = vadd.f32 0.0, %v2108
    %v2110 = vpop.f32.mrb[0].mxu0
    %2111 = vdwg.mxu0
    %v2112 = vadd.f32 %v1911, %v2106
    %v2113 = vadd.f32 %v1915, %v2109
    %v2114 = vxor.u32 %v2112, 2147483648
    %v2115 = vxor.u32 %v2113, 2147483648
    %v2116 = vmul.f32 %v2114, 1.442695
    %v2117 = vpow.pop %v2116
    %v2118 = vmul.f32 %v2115, 1.442695
    %v2119 = vpow.pop %v2118
    %v2120 = vadd.f32 %v2117, 1.0
    %v2121 = vadd.f32 %v2119, 1.0
    %v2122 = vrcp.pop %v2120
    %v2123 = vmul.f32 1.0, %v2122
    %v2124 = vrcp.pop %v2121
    %v2125 = vmul.f32 1.0, %v2124
    %v2126 = vmul.f32 %v2023, %v1898
    %v2127 = vmul.f32 %v2025, %v1899
    %v2128 = vmul.f32 %v1968, %v2069
    %v2129 = vmul.f32 %v1970, %v2070
    %v2130 = vadd.f32 %v2126, %v2128
    %v2131 = vadd.f32 %v2127, %v2129
    %v2132 = vtanh.pop %v2130
    %v2133 = vtanh.pop %v2131
    %v2134 = vmul.f32 %v2123, %v2132
    %v2135 = vmul.f32 %v2125, %v2133
    %v2136 = vpack.c.bf16 %v2135, %v2134
    %s2137 = smul.u32 12, 4
    %s2138 = smul.addr %s2137, 8
    %s2139 = scalar_lea.vmem [#allocation2], %s2138
    %v2140 = vld [vmem:[%s2139] sm:$0xff]
    %v2141 = vld [vmem:[%s2139 + $0x8] sm:$0xff]
    %v2142 = vld [vmem:[%s2139 + $0x10] sm:$0xff]
    %v2143 = vld [vmem:[%s2139 + $0x18] sm:$0xff]
    %v2144 = vld [vmem:[%s2139 + $0x20] sm:$0xff]
    %v2145 = vld [vmem:[%s2139 + $0x28] sm:$0xff]
    %v2146 = vld [vmem:[%s2139 + $0x30] sm:$0xff]
    %v2147 = vld [vmem:[%s2139 + $0x38] sm:$0xff]
    %2148 = vmatprep.subr.bf16.mxu0 0
    %2149 = vmatpush1.bf16.msra.mxu0 %v628
    %2150 = vmatprep.subr.bf16.mxu0 0
    %2151 = vmatpush1.bf16.msra.mxu0 %v629
    %2152 = vmatprep.subr.bf16.mxu0 0
    %2153 = vmatpush1.bf16.msra.mxu0 %v630
    %2154 = vmatprep.subr.bf16.mxu0 0
    %2155 = vmatpush1.bf16.msra.mxu0 %v631
    %2156 = vmatprep.subr.bf16.mxu0 0
    %2157 = vmatpush1.bf16.msra.mxu0 %v632
    %2158 = vmatprep.subr.bf16.mxu0 0
    %2159 = vmatpush1.bf16.msra.mxu0 %v633
    %2160 = vmatprep.subr.bf16.mxu0 0
    %2161 = vmatpush1.bf16.msra.mxu0 %v634
    %2162 = vmatprep.subr.bf16.mxu0 0
    %2163 = vmatpush1.bf16.msra.mxu0 %v635
    %2164 = vmatprep.subr.bf16.mxu0 0
    %2165 = vmatpush1.bf16.msra.mxu0 0
    %2166 = vmatprep.subr.bf16.mxu0 0
    %2167 = vmatpush1.bf16.msra.mxu0 0
    %2168 = vmatprep.subr.bf16.mxu0 0
    %2169 = vmatpush1.bf16.msra.mxu0 0
    %2170 = vmatprep.subr.bf16.mxu0 0
    %2171 = vmatpush1.bf16.msra.mxu0 0
    %2172 = vmatprep.subr.bf16.mxu0 0
    %2173 = vmatpush1.bf16.msra.mxu0 0
    %2174 = vmatprep.subr.bf16.mxu0 0
    %2175 = vmatpush1.bf16.msra.mxu0 0
    %2176 = vmatprep.subr.bf16.mxu0 0
    %2177 = vmatpush1.bf16.msra.mxu0 0
    %2178 = vmatprep.subr.bf16.mxu0 0
    %2179 = vmatpush1.bf16.msra.mxu0 0
    %2180 = vmatprep.mubr.bf16.mxu0 0
    %2181 = vmatmul.mubr.bf16.gmra.mrb[0].mxu0 %v2136
    %v2182 = vpop.f32.mrb[0].mxu0
    %v2183 = vadd.f32 0.0, %v2182
    %v2184 = vpop.f32.mrb[0].mxu0
    %v2185 = vpop.f32.mrb[0].mxu0
    %v2186 = vadd.f32 0.0, %v2185
    %v2187 = vpop.f32.mrb[0].mxu0
    %2188 = vdwg.mxu0
    %v2189 = vadd.f32 %v2140, %v2183
    %v2190 = vadd.f32 %v2144, %v2186
    %v2191 = vxor.u32 %v2189, 2147483648
    %v2192 = vxor.u32 %v2190, 2147483648
    %v2193 = vmul.f32 %v2191, 1.442695
    %v2194 = vpow.pop %v2193
    %v2195 = vmul.f32 %v2192, 1.442695
    %v2196 = vpow.pop %v2195
    %v2197 = vadd.f32 %v2194, 1.0
    %v2198 = vadd.f32 %v2196, 1.0
    %v2199 = vrcp.pop %v2197
    %v2200 = vmul.f32 1.0, %v2199
    %v2201 = vrcp.pop %v2198
    %v2202 = vmul.f32 1.0, %v2201
    %2203 = vmatprep.subr.bf16.mxu0 0
    %2204 = vmatpush1.bf16.msra.mxu0 %v715
    %2205 = vmatprep.subr.bf16.mxu0 0
    %2206 = vmatpush1.bf16.msra.mxu0 %v716
    %2207 = vmatprep.subr.bf16.mxu0 0
    %2208 = vmatpush1.bf16.msra.mxu0 %v717
    %2209 = vmatprep.subr.bf16.mxu0 0
    %2210 = vmatpush1.bf16.msra.mxu0 %v718
    %2211 = vmatprep.subr.bf16.mxu0 0
    %2212 = vmatpush1.bf16.msra.mxu0 %v719
    %2213 = vmatprep.subr.bf16.mxu0 0
    %2214 = vmatpush1.bf16.msra.mxu0 %v720
    %2215 = vmatprep.subr.bf16.mxu0 0
    %2216 = vmatpush1.bf16.msra.mxu0 %v721
    %2217 = vmatprep.subr.bf16.mxu0 0
    %2218 = vmatpush1.bf16.msra.mxu0 %v722
    %2219 = vmatprep.subr.bf16.mxu0 0
    %2220 = vmatpush1.bf16.msra.mxu0 0
    %2221 = vmatprep.subr.bf16.mxu0 0
    %2222 = vmatpush1.bf16.msra.mxu0 0
    %2223 = vmatprep.subr.bf16.mxu0 0
    %2224 = vmatpush1.bf16.msra.mxu0 0
    %2225 = vmatprep.subr.bf16.mxu0 0
    %2226 = vmatpush1.bf16.msra.mxu0 0
    %2227 = vmatprep.subr.bf16.mxu0 0
    %2228 = vmatpush1.bf16.msra.mxu0 0
    %2229 = vmatprep.subr.bf16.mxu0 0
    %2230 = vmatpush1.bf16.msra.mxu0 0
    %2231 = vmatprep.subr.bf16.mxu0 0
    %2232 = vmatpush1.bf16.msra.mxu0 0
    %2233 = vmatprep.subr.bf16.mxu0 0
    %2234 = vmatpush1.bf16.msra.mxu0 0
    %2235 = vmatprep.mubr.bf16.mxu0 0
    %2236 = vmatmul.mubr.bf16.gmra.mrb[0].mxu0 %v2136
    %v2237 = vpop.f32.mrb[0].mxu0
    %v2238 = vadd.f32 0.0, %v2237
    %v2239 = vpop.f32.mrb[0].mxu0
    %v2240 = vpop.f32.mrb[0].mxu0
    %v2241 = vadd.f32 0.0, %v2240
    %v2242 = vpop.f32.mrb[0].mxu0
    %2243 = vdwg.mxu0
    %v2244 = vadd.f32 %v2141, %v2238
    %v2245 = vadd.f32 %v2145, %v2241
    %v2246 = vxor.u32 %v2244, 2147483648
    %v2247 = vxor.u32 %v2245, 2147483648
    %v2248 = vmul.f32 %v2246, 1.442695
    %v2249 = vpow.pop %v2248
    %v2250 = vmul.f32 %v2247, 1.442695
    %v2251 = vpow.pop %v2250
    %v2252 = vadd.f32 %v2249, 1.0
    %v2253 = vadd.f32 %v2251, 1.0
    %v2254 = vrcp.pop %v2252
    %v2255 = vmul.f32 1.0, %v2254
    %v2256 = vrcp.pop %v2253
    %v2257 = vmul.f32 1.0, %v2256
    %2258 = vmatprep.subr.bf16.mxu0 0
    %2259 = vmatpush1.bf16.msra.mxu0 %v818
    %2260 = vmatprep.subr.bf16.mxu0 0
    %2261 = vmatpush1.bf16.msra.mxu0 %v819
    %2262 = vmatprep.subr.bf16.mxu0 0
    %2263 = vmatpush1.bf16.msra.mxu0 %v820
    %2264 = vmatprep.subr.bf16.mxu0 0
    %2265 = vmatpush1.bf16.msra.mxu0 %v821
    %2266 = vmatprep.subr.bf16.mxu0 0
    %2267 = vmatpush1.bf16.msra.mxu0 %v822
    %2268 = vmatprep.subr.bf16.mxu0 0
    %2269 = vmatpush1.bf16.msra.mxu0 %v823
    %2270 = vmatprep.subr.bf16.mxu0 0
    %2271 = vmatpush1.bf16.msra.mxu0 %v824
    %2272 = vmatprep.subr.bf16.mxu0 0
    %2273 = vmatpush1.bf16.msra.mxu0 %v825
    %2274 = vmatprep.subr.bf16.mxu0 0
    %2275 = vmatpush1.bf16.msra.mxu0 0
    %2276 = vmatprep.subr.bf16.mxu0 0
    %2277 = vmatpush1.bf16.msra.mxu0 0
    %2278 = vmatprep.subr.bf16.mxu0 0
    %2279 = vmatpush1.bf16.msra.mxu0 0
    %2280 = vmatprep.subr.bf16.mxu0 0
    %2281 = vmatpush1.bf16.msra.mxu0 0
    %2282 = vmatprep.subr.bf16.mxu0 0
    %2283 = vmatpush1.bf16.msra.mxu0 0
    %2284 = vmatprep.subr.bf16.mxu0 0
    %2285 = vmatpush1.bf16.msra.mxu0 0
    %2286 = vmatprep.subr.bf16.mxu0 0
    %2287 = vmatpush1.bf16.msra.mxu0 0
    %2288 = vmatprep.subr.bf16.mxu0 0
    %2289 = vmatpush1.bf16.msra.mxu0 0
    %2290 = vmatprep.mubr.bf16.mxu0 0
    %2291 = vmatmul.mubr.bf16.gmra.mrb[0].mxu0 %v2136
    %v2292 = vpop.f32.mrb[0].mxu0
    %v2293 = vadd.f32 0.0, %v2292
    %v2294 = vpop.f32.mrb[0].mxu0
    %v2295 = vpop.f32.mrb[0].mxu0
    %v2296 = vadd.f32 0.0, %v2295
    %v2297 = vpop.f32.mrb[0].mxu0
    %2298 = vdwg.mxu0
    %v2299 = vadd.f32 %v2142, %v2293
    %v2300 = vadd.f32 %v2146, %v2296
    %v2301 = vtanh.pop %v2299
    %v2302 = vtanh.pop %v2300
    %2303 = vmatprep.subr.bf16.mxu0 0
    %2304 = vmatpush1.bf16.msra.mxu0 %v895
    %2305 = vmatprep.subr.bf16.mxu0 0
    %2306 = vmatpush1.bf16.msra.mxu0 %v896
    %2307 = vmatprep.subr.bf16.mxu0 0
    %2308 = vmatpush1.bf16.msra.mxu0 %v897
    %2309 = vmatprep.subr.bf16.mxu0 0
    %2310 = vmatpush1.bf16.msra.mxu0 %v898
    %2311 = vmatprep.subr.bf16.mxu0 0
    %2312 = vmatpush1.bf16.msra.mxu0 %v899
    %2313 = vmatprep.subr.bf16.mxu0 0
    %2314 = vmatpush1.bf16.msra.mxu0 %v900
    %2315 = vmatprep.subr.bf16.mxu0 0
    %2316 = vmatpush1.bf16.msra.mxu0 %v901
    %2317 = vmatprep.subr.bf16.mxu0 0
    %2318 = vmatpush1.bf16.msra.mxu0 %v902
    %2319 = vmatprep.subr.bf16.mxu0 0
    %2320 = vmatpush1.bf16.msra.mxu0 0
    %2321 = vmatprep.subr.bf16.mxu0 0
    %2322 = vmatpush1.bf16.msra.mxu0 0
    %2323 = vmatprep.subr.bf16.mxu0 0
    %2324 = vmatpush1.bf16.msra.mxu0 0
    %2325 = vmatprep.subr.bf16.mxu0 0
    %2326 = vmatpush1.bf16.msra.mxu0 0
    %2327 = vmatprep.subr.bf16.mxu0 0
    %2328 = vmatpush1.bf16.msra.mxu0 0
    %2329 = vmatprep.subr.bf16.mxu0 0
    %2330 = vmatpush1.bf16.msra.mxu0 0
    %2331 = vmatprep.subr.bf16.mxu0 0
    %2332 = vmatpush1.bf16.msra.mxu0 0
    %2333 = vmatprep.subr.bf16.mxu0 0
    %2334 = vmatpush1.bf16.msra.mxu0 0
    %2335 = vmatprep.mubr.bf16.mxu0 0
    %2336 = vmatmul.mubr.bf16.gmra.mrb[0].mxu0 %v2136
    %v2337 = vpop.f32.mrb[0].mxu0
    %v2338 = vadd.f32 0.0, %v2337
    %v2339 = vpop.f32.mrb[0].mxu0
    %v2340 = vpop.f32.mrb[0].mxu0
    %v2341 = vadd.f32 0.0, %v2340
    %v2342 = vpop.f32.mrb[0].mxu0
    %2343 = vdwg.mxu0
    %v2344 = vadd.f32 %v2143, %v2338
    %v2345 = vadd.f32 %v2147, %v2341
    %v2346 = vxor.u32 %v2344, 2147483648
    %v2347 = vxor.u32 %v2345, 2147483648
    %v2348 = vmul.f32 %v2346, 1.442695
    %v2349 = vpow.pop %v2348
    %v2350 = vmul.f32 %v2347, 1.442695
    %v2351 = vpow.pop %v2350
    %v2352 = vadd.f32 %v2349, 1.0
    %v2353 = vadd.f32 %v2351, 1.0
    %v2354 = vrcp.pop %v2352
    %v2355 = vmul.f32 1.0, %v2354
    %v2356 = vrcp.pop %v2353
    %v2357 = vmul.f32 1.0, %v2356
    %v2358 = vmul.f32 %v2255, %v2130
    %v2359 = vmul.f32 %v2257, %v2131
    %v2360 = vmul.f32 %v2200, %v2301
    %v2361 = vmul.f32 %v2202, %v2302
    %v2362 = vadd.f32 %v2358, %v2360
    %v2363 = vadd.f32 %v2359, %v2361
    %v2364 = vtanh.pop %v2362
    %v2365 = vtanh.pop %v2363
    %v2366 = vmul.f32 %v2355, %v2364
    %v2367 = vmul.f32 %v2357, %v2365
    %v2368 = vpack.c.bf16 %v2367, %v2366
    %s2369 = smul.u32 14, 4
    %s2370 = smul.addr %s2369, 8
    %s2371 = scalar_lea.vmem [#allocation2], %s2370
    %v2372 = vld [vmem:[%s2371] sm:$0xff]
    %v2373 = vld [vmem:[%s2371 + $0x8] sm:$0xff]
    %v2374 = vld [vmem:[%s2371 + $0x10] sm:$0xff]
    %v2375 = vld [vmem:[%s2371 + $0x18] sm:$0xff]
    %v2376 = vld [vmem:[%s2371 + $0x20] sm:$0xff]
    %v2377 = vld [vmem:[%s2371 + $0x28] sm:$0xff]
    %v2378 = vld [vmem:[%s2371 + $0x30] sm:$0xff]
    %v2379 = vld [vmem:[%s2371 + $0x38] sm:$0xff]
    %2380 = vmatprep.subr.bf16.mxu0 0
    %2381 = vmatpush1.bf16.msra.mxu0 %v628
    %2382 = vmatprep.subr.bf16.mxu0 0
    %2383 = vmatpush1.bf16.msra.mxu0 %v629
    %2384 = vmatprep.subr.bf16.mxu0 0
    %2385 = vmatpush1.bf16.msra.mxu0 %v630
    %2386 = vmatprep.subr.bf16.mxu0 0
    %2387 = vmatpush1.bf16.msra.mxu0 %v631
    %2388 = vmatprep.subr.bf16.mxu0 0
    %2389 = vmatpush1.bf16.msra.mxu0 %v632
    %2390 = vmatprep.subr.bf16.mxu0 0
    %2391 = vmatpush1.bf16.msra.mxu0 %v633
    %2392 = vmatprep.subr.bf16.mxu0 0
    %2393 = vmatpush1.bf16.msra.mxu0 %v634
    %2394 = vmatprep.subr.bf16.mxu0 0
    %2395 = vmatpush1.bf16.msra.mxu0 %v635
    %2396 = vmatprep.subr.bf16.mxu0 0
    %2397 = vmatpush1.bf16.msra.mxu0 0
    %2398 = vmatprep.subr.bf16.mxu0 0
    %2399 = vmatpush1.bf16.msra.mxu0 0
    %2400 = vmatprep.subr.bf16.mxu0 0
    %2401 = vmatpush1.bf16.msra.mxu0 0
    %2402 = vmatprep.subr.bf16.mxu0 0
    %2403 = vmatpush1.bf16.msra.mxu0 0
    %2404 = vmatprep.subr.bf16.mxu0 0
    %2405 = vmatpush1.bf16.msra.mxu0 0
    %2406 = vmatprep.subr.bf16.mxu0 0
    %2407 = vmatpush1.bf16.msra.mxu0 0
    %2408 = vmatprep.subr.bf16.mxu0 0
    %2409 = vmatpush1.bf16.msra.mxu0 0
    %2410 = vmatprep.subr.bf16.mxu0 0
    %2411 = vmatpush1.bf16.msra.mxu0 0
    %2412 = vmatprep.mubr.bf16.mxu0 0
    %2413 = vmatmul.mubr.bf16.gmra.mrb[0].mxu0 %v2368
    %v2414 = vpop.f32.mrb[0].mxu0
    %v2415 = vadd.f32 0.0, %v2414
    %v2416 = vpop.f32.mrb[0].mxu0
    %v2417 = vpop.f32.mrb[0].mxu0
    %v2418 = vadd.f32 0.0, %v2417
    %v2419 = vpop.f32.mrb[0].mxu0
    %2420 = vdwg.mxu0
    %v2421 = vadd.f32 %v2372, %v2415
    %v2422 = vadd.f32 %v2376, %v2418
    %v2423 = vxor.u32 %v2421, 2147483648
    %v2424 = vxor.u32 %v2422, 2147483648
    %v2425 = vmul.f32 %v2423, 1.442695
    %v2426 = vpow.pop %v2425
    %v2427 = vmul.f32 %v2424, 1.442695
    %v2428 = vpow.pop %v2427
    %v2429 = vadd.f32 %v2426, 1.0
    %v2430 = vadd.f32 %v2428, 1.0
    %v2431 = vrcp.pop %v2429
    %v2432 = vmul.f32 1.0, %v2431
    %v2433 = vrcp.pop %v2430
    %v2434 = vmul.f32 1.0, %v2433
    %2435 = vmatprep.subr.bf16.mxu0 0
    %2436 = vmatpush1.bf16.msra.mxu0 %v715
    %2437 = vmatprep.subr.bf16.mxu0 0
    %2438 = vmatpush1.bf16.msra.mxu0 %v716
    %2439 = vmatprep.subr.bf16.mxu0 0
    %2440 = vmatpush1.bf16.msra.mxu0 %v717
    %2441 = vmatprep.subr.bf16.mxu0 0
    %2442 = vmatpush1.bf16.msra.mxu0 %v718
    %2443 = vmatprep.subr.bf16.mxu0 0
    %2444 = vmatpush1.bf16.msra.mxu0 %v719
    %2445 = vmatprep.subr.bf16.mxu0 0
    %2446 = vmatpush1.bf16.msra.mxu0 %v720
    %2447 = vmatprep.subr.bf16.mxu0 0
    %2448 = vmatpush1.bf16.msra.mxu0 %v721
    %2449 = vmatprep.subr.bf16.mxu0 0
    %2450 = vmatpush1.bf16.msra.mxu0 %v722
    %2451 = vmatprep.subr.bf16.mxu0 0
    %2452 = vmatpush1.bf16.msra.mxu0 0
    %2453 = vmatprep.subr.bf16.mxu0 0
    %2454 = vmatpush1.bf16.msra.mxu0 0
    %2455 = vmatprep.subr.bf16.mxu0 0
    %2456 = vmatpush1.bf16.msra.mxu0 0
    %2457 = vmatprep.subr.bf16.mxu0 0
    %2458 = vmatpush1.bf16.msra.mxu0 0
    %2459 = vmatprep.subr.bf16.mxu0 0
    %2460 = vmatpush1.bf16.msra.mxu0 0
    %2461 = vmatprep.subr.bf16.mxu0 0
    %2462 = vmatpush1.bf16.msra.mxu0 0
    %2463 = vmatprep.subr.bf16.mxu0 0
    %2464 = vmatpush1.bf16.msra.mxu0 0
    %2465 = vmatprep.subr.bf16.mxu0 0
    %2466 = vmatpush1.bf16.msra.mxu0 0
    %2467 = vmatprep.mubr.bf16.mxu0 0
    %2468 = vmatmul.mubr.bf16.gmra.mrb[0].mxu0 %v2368
    %v2469 = vpop.f32.mrb[0].mxu0
    %v2470 = vadd.f32 0.0, %v2469
    %v2471 = vpop.f32.mrb[0].mxu0
    %v2472 = vpop.f32.mrb[0].mxu0
    %v2473 = vadd.f32 0.0, %v2472
    %v2474 = vpop.f32.mrb[0].mxu0
    %2475 = vdwg.mxu0
    %v2476 = vadd.f32 %v2373, %v2470
    %v2477 = vadd.f32 %v2377, %v2473
    %v2478 = vxor.u32 %v2476, 2147483648
    %v2479 = vxor.u32 %v2477, 2147483648
    %v2480 = vmul.f32 %v2478, 1.442695
    %v2481 = vpow.pop %v2480
    %v2482 = vmul.f32 %v2479, 1.442695
    %v2483 = vpow.pop %v2482
    %v2484 = vadd.f32 %v2481, 1.0
    %v2485 = vadd.f32 %v2483, 1.0
    %v2486 = vrcp.pop %v2484
    %v2487 = vmul.f32 1.0, %v2486
    %v2488 = vrcp.pop %v2485
    %v2489 = vmul.f32 1.0, %v2488
    %2490 = vmatprep.subr.bf16.mxu0 0
    %2491 = vmatpush1.bf16.msra.mxu0 %v818
    %2492 = vmatprep.subr.bf16.mxu0 0
    %2493 = vmatpush1.bf16.msra.mxu0 %v819
    %2494 = vmatprep.subr.bf16.mxu0 0
    %2495 = vmatpush1.bf16.msra.mxu0 %v820
    %2496 = vmatprep.subr.bf16.mxu0 0
    %2497 = vmatpush1.bf16.msra.mxu0 %v821
    %2498 = vmatprep.subr.bf16.mxu0 0
    %2499 = vmatpush1.bf16.msra.mxu0 %v822
    %2500 = vmatprep.subr.bf16.mxu0 0
    %2501 = vmatpush1.bf16.msra.mxu0 %v823
    %2502 = vmatprep.subr.bf16.mxu0 0
    %2503 = vmatpush1.bf16.msra.mxu0 %v824
    %2504 = vmatprep.subr.bf16.mxu0 0
    %2505 = vmatpush1.bf16.msra.mxu0 %v825
    %2506 = vmatprep.subr.bf16.mxu0 0
    %2507 = vmatpush1.bf16.msra.mxu0 0
    %2508 = vmatprep.subr.bf16.mxu0 0
    %2509 = vmatpush1.bf16.msra.mxu0 0
    %2510 = vmatprep.subr.bf16.mxu0 0
    %2511 = vmatpush1.bf16.msra.mxu0 0
    %2512 = vmatprep.subr.bf16.mxu0 0
    %2513 = vmatpush1.bf16.msra.mxu0 0
    %2514 = vmatprep.subr.bf16.mxu0 0
    %2515 = vmatpush1.bf16.msra.mxu0 0
    %2516 = vmatprep.subr.bf16.mxu0 0
    %2517 = vmatpush1.bf16.msra.mxu0 0
    %2518 = vmatprep.subr.bf16.mxu0 0
    %2519 = vmatpush1.bf16.msra.mxu0 0
    %2520 = vmatprep.subr.bf16.mxu0 0
    %2521 = vmatpush1.bf16.msra.mxu0 0
    %2522 = vmatprep.mubr.bf16.mxu0 0
    %2523 = vmatmul.mubr.bf16.gmra.mrb[0].mxu0 %v2368
    %v2524 = vpop.f32.mrb[0].mxu0
    %v2525 = vadd.f32 0.0, %v2524
    %v2526 = vpop.f32.mrb[0].mxu0
    %v2527 = vpop.f32.mrb[0].mxu0
    %v2528 = vadd.f32 0.0, %v2527
    %v2529 = vpop.f32.mrb[0].mxu0
    %2530 = vdwg.mxu0
    %v2531 = vadd.f32 %v2374, %v2525
    %v2532 = vadd.f32 %v2378, %v2528
    %v2533 = vtanh.pop %v2531
    %v2534 = vtanh.pop %v2532
    %2535 = vmatprep.subr.bf16.mxu0 0
    %2536 = vmatpush1.bf16.msra.mxu0 %v895
    %2537 = vmatprep.subr.bf16.mxu0 0
    %2538 = vmatpush1.bf16.msra.mxu0 %v896
    %2539 = vmatprep.subr.bf16.mxu0 0
    %2540 = vmatpush1.bf16.msra.mxu0 %v897
    %2541 = vmatprep.subr.bf16.mxu0 0
    %2542 = vmatpush1.bf16.msra.mxu0 %v898
    %2543 = vmatprep.subr.bf16.mxu0 0
    %2544 = vmatpush1.bf16.msra.mxu0 %v899
    %2545 = vmatprep.subr.bf16.mxu0 0
    %2546 = vmatpush1.bf16.msra.mxu0 %v900
    %2547 = vmatprep.subr.bf16.mxu0 0
    %2548 = vmatpush1.bf16.msra.mxu0 %v901
    %2549 = vmatprep.subr.bf16.mxu0 0
    %2550 = vmatpush1.bf16.msra.mxu0 %v902
    %2551 = vmatprep.subr.bf16.mxu0 0
    %2552 = vmatpush1.bf16.msra.mxu0 0
    %2553 = vmatprep.subr.bf16.mxu0 0
    %2554 = vmatpush1.bf16.msra.mxu0 0
    %2555 = vmatprep.subr.bf16.mxu0 0
    %2556 = vmatpush1.bf16.msra.mxu0 0
    %2557 = vmatprep.subr.bf16.mxu0 0
    %2558 = vmatpush1.bf16.msra.mxu0 0
    %2559 = vmatprep.subr.bf16.mxu0 0
    %2560 = vmatpush1.bf16.msra.mxu0 0
    %2561 = vmatprep.subr.bf16.mxu0 0
    %2562 = vmatpush1.bf16.msra.mxu0 0
    %2563 = vmatprep.subr.bf16.mxu0 0
    %2564 = vmatpush1.bf16.msra.mxu0 0
    %2565 = vmatprep.subr.bf16.mxu0 0
    %2566 = vmatpush1.bf16.msra.mxu0 0
    %2567 = vmatprep.mubr.bf16.mxu0 0
    %2568 = vmatmul.mubr.bf16.gmra.mrb[0].mxu0 %v2368
    %v2569 = vpop.f32.mrb[0].mxu0
    %v2570 = vadd.f32 0.0, %v2569
    %v2571 = vpop.f32.mrb[0].mxu0
    %v2572 = vpop.f32.mrb[0].mxu0
    %v2573 = vadd.f32 0.0, %v2572
    %v2574 = vpop.f32.mrb[0].mxu0
    %2575 = vdwg.mxu0
    %v2576 = vadd.f32 %v2375, %v2570
    %v2577 = vadd.f32 %v2379, %v2573
    %v2578 = vxor.u32 %v2576, 2147483648
    %v2579 = vxor.u32 %v2577, 2147483648
    %v2580 = vmul.f32 %v2578, 1.442695
    %v2581 = vpow.pop %v2580
    %v2582 = vmul.f32 %v2579, 1.442695
    %v2583 = vpow.pop %v2582
    %v2584 = vadd.f32 %v2581, 1.0
    %v2585 = vadd.f32 %v2583, 1.0
    %v2586 = vrcp.pop %v2584
    %v2587 = vmul.f32 1.0, %v2586
    %v2588 = vrcp.pop %v2585
    %v2589 = vmul.f32 1.0, %v2588
    %v2590 = vmul.f32 %v2487, %v2362
    %v2591 = vmul.f32 %v2489, %v2363
    %v2592 = vmul.f32 %v2432, %v2533
    %v2593 = vmul.f32 %v2434, %v2534
    %v2594 = vadd.f32 %v2590, %v2592
    %v2595 = vadd.f32 %v2591, %v2593
    %v2596 = vtanh.pop %v2594
    %v2597 = vtanh.pop %v2595
    %v2598 = vmul.f32 %v2587, %v2596
    %v2599 = vmul.f32 %v2589, %v2597
    %v2600 = vpack.c.bf16 %v2599, %v2598
    %v2601 = vld [vmem:[#allocation11] sm:$0xf]
    %v2602 = vld [vmem:[#allocation11 + $0x4] sm:$0xf]
    %v2603 = vld [vmem:[#allocation11 + $0x8] sm:$0xf]
    %v2604 = vld [vmem:[#allocation11 + $0xc] sm:$0xf]
    %v2605 = vld [vmem:[#allocation11 + $0x10] sm:$0xf]
    %v2606 = vld [vmem:[#allocation11 + $0x14] sm:$0xf]
    %v2607 = vld [vmem:[#allocation11 + $0x18] sm:$0xf]
    %v2608 = vld [vmem:[#allocation11 + $0x1c] sm:$0xf]
    %v2609 = vld [vmem:[#allocation11 + $0x20] sm:$0xf]
    %v2610 = vld [vmem:[#allocation11 + $0x24] sm:$0xf]
    %v2611 = vld [vmem:[#allocation11 + $0x28] sm:$0xf]
    %v2612 = vld [vmem:[#allocation11 + $0x2c] sm:$0xf]
    %v2613 = vld [vmem:[#allocation11 + $0x30] sm:$0xf]
    %v2614 = vld [vmem:[#allocation11 + $0x34] sm:$0xf]
    %v2615 = vld [vmem:[#allocation11 + $0x38] sm:$0xf]
    %v2616 = vld [vmem:[#allocation11 + $0x3c] sm:$0xf]
    %v2617 = vld [vmem:[#allocation12] sm:$0x1]
    %v2619 = vlaneseq
    %v2620 = vshrl.u32 %v2619, 7
    %v2621 = vsub.s32 0, %v2620
    %v2622 = vrot.slane %v2617, %v2621
    %v2640 = vunpack.c.l.b16 %v2601
    %v2641 = vunpack.c.l.b16 %v2602
    %v2642 = vunpack.c.l.b16 %v2603
    %v2643 = vunpack.c.l.b16 %v2604
    %v2644 = vunpack.c.l.b16 %v2605
    %v2645 = vunpack.c.l.b16 %v2606
    %v2646 = vunpack.c.l.b16 %v2607
    %v2647 = vunpack.c.l.b16 %v2608
    %v2648 = vunpack.c.l.b16 %v2609
    %v2649 = vunpack.c.l.b16 %v2610
    %v2650 = vunpack.c.l.b16 %v2611
    %v2651 = vunpack.c.l.b16 %v2612
    %v2652 = vunpack.c.l.b16 %v2613
    %v2653 = vunpack.c.l.b16 %v2614
    %v2654 = vunpack.c.l.b16 %v2615
    %v2655 = vunpack.c.l.b16 %v2616
    %v2656 = vpack.c.b16 %v2641, %v2640
    %v2657 = vpack.c.b16 %v2643, %v2642
    %v2658 = vpack.c.b16 %v2645, %v2644
    %v2659 = vpack.c.b16 %v2647, %v2646
    %v2660 = vpack.c.b16 %v2649, %v2648
    %v2661 = vpack.c.b16 %v2651, %v2650
    %v2662 = vpack.c.b16 %v2653, %v2652
    %v2663 = vpack.c.b16 %v2655, %v2654
    %2672 = vmatprep.subr.bf16.mxu0 0
    %2673 = vmatpush1.bf16.msra.mxu0 %v2656
    %2674 = vmatprep.subr.bf16.mxu0 0
    %2675 = vmatpush1.bf16.msra.mxu0 %v2657
    %2676 = vmatprep.subr.bf16.mxu0 0
    %2677 = vmatpush1.bf16.msra.mxu0 %v2658
    %2678 = vmatprep.subr.bf16.mxu0 0
    %2679 = vmatpush1.bf16.msra.mxu0 %v2659
    %2680 = vmatprep.subr.bf16.mxu0 0
    %2681 = vmatpush1.bf16.msra.mxu0 %v2660
    %2682 = vmatprep.subr.bf16.mxu0 0
    %2683 = vmatpush1.bf16.msra.mxu0 %v2661
    %2684 = vmatprep.subr.bf16.mxu0 0
    %2685 = vmatpush1.bf16.msra.mxu0 %v2662
    %2686 = vmatprep.subr.bf16.mxu0 0
    %2687 = vmatpush1.bf16.msra.mxu0 %v2663
    %2688 = vmatprep.subr.bf16.mxu0 0
    %2689 = vmatpush1.bf16.msra.mxu0 0
    %2690 = vmatprep.subr.bf16.mxu0 0
    %2691 = vmatpush1.bf16.msra.mxu0 0
    %2692 = vmatprep.subr.bf16.mxu0 0
    %2693 = vmatpush1.bf16.msra.mxu0 0
    %2694 = vmatprep.subr.bf16.mxu0 0
    %2695 = vmatpush1.bf16.msra.mxu0 0
    %2696 = vmatprep.subr.bf16.mxu0 0
    %2697 = vmatpush1.bf16.msra.mxu0 0
    %2698 = vmatprep.subr.bf16.mxu0 0
    %2699 = vmatpush1.bf16.msra.mxu0 0
    %2700 = vmatprep.subr.bf16.mxu0 0
    %2701 = vmatpush1.bf16.msra.mxu0 0
    %2702 = vmatprep.subr.bf16.mxu0 0
    %2703 = vmatpush1.bf16.msra.mxu0 0
    %2704 = vmatprep.mubr.bf16.mxu0 0
    %2705 = vmatmul.mubr.bf16.gmra.mrb[0].mxu0 %v2600
    %v2706 = vpop.f32.mrb[0].mxu0
    %v2707 = vadd.f32 %v2622, %v2706
    %v2708 = vpop.f32.mrb[0].mxu0
    %v2709 = vpop.f32.mrb[0].mxu0
    %v2710 = vadd.f32 %v2622, %v2709
    %v2711 = vpop.f32.mrb[0].mxu0
    %2712 = vdwg.mxu0
    %2713 = vst [vmem:[#allocation14] sm:$0xff] %v2707
    %2714 = vst [vmem:[#allocation14 + $0x8] sm:$0xff] %v2710
    // Predicated region
    $region50: #{forward.1} parent=1 // pred_check
      _
    $region51: #{forward.1} parent=1 // pred_check_branch
      %2716 = sbr.rel (0) target = $region53
    $region52: #{forward.1} parent=1 // pred_region
      %s2718 = ssub.s32 256, 256
      %2719 = vsyncadd [#allocation5], %s2718
      %s2720 = sshll.u32 [#allocation14], 4
      %s2721 = int_to_ptr.vmem [resolvable:$true] %s2720
      %2726 = dma.vmem_to_hbm [thread:$0]  %s2721, 256, %s6, [#allocation5], 128, 128, 8
    $region53: #{forward.1} parent=1 // pred_fallthru
      _
    // Predicated region
    $region54: #{forward.1} parent=1 // pred_check
      _
    $region55: #{forward.1} parent=1 // pred_check_branch
      %2728 = sbr.rel (0) target = $region57
    $region56: #{forward.1} parent=1 // pred_region
      %2729 = dma.done [#allocation5], 256
    $region57: #{forward.1} parent=1 // pred_fallthru
      _
    %2730 = vsyncpa [#allocation4], 1
    %2731 = vsyncpa [#allocation7], 1
    %2732 = vsyncpa [#allocation10], 1
    %2733 = vsyncpa [#allocation13], 1
    %2734 = vsyncpa [#allocation5], 1

</llo_original>
